<compile_context>
chip_gen: v7x
topology: tpu7x:2x2x1
jax: 0.10.0
libtpu: 0.0.40
codegen_flags: <defaults>
</compile_context>

<pallas_src>
import numpy as np
import jax
import jax.numpy as jnp
from jax.experimental import pallas as pl
from jax.experimental.pallas import tpu as pltpu


# ----------------------------------------------------------------------------
# Pallas kernel
# ----------------------------------------------------------------------------
def make_blank_pos_emb_kernel(blank_token_ids, max_length, block_b, block_s):
    blank_ids = tuple(int(t) for t in np.asarray(blank_token_ids).reshape(-1))

    def kernel(tri_ref, tok_ref, emb_ref, out_ref, carry_ref):
        # tri_ref:   (TS, TS) f32 upper-triangular (incl. diag), VMEM resident
        # tok_ref:   (Bb, TS) int32 tokens
        # emb_ref:   (M, D)   embedding table, VMEM resident (constant map)
        # out_ref:   (Bb, TS, D)
        # carry_ref: VMEM (Bb, 1) int32 running blank count across seq tiles
        si = pl.program_id(1)

        @pl.when(si == 0)
        def _():
            carry_ref[...] = jnp.zeros_like(carry_ref)

        tok = tok_ref[...]                                          # (Bb, TS)

        # --- is_blank: OR over the (static) blank token ids -----------------
        is_blank = tok == blank_ids[0]
        for bid in blank_ids[1:]:
            is_blank = jnp.logical_or(is_blank, tok == bid)
        is_blank_f = is_blank.astype(jnp.float32)                   # (Bb, TS)

        # --- within-tile inclusive prefix sum via triangular matmul (MXU) ---
        cum_f = jnp.dot(is_blank_f, tri_ref[...],
                        preferred_element_type=jnp.float32)         # (Bb, TS)
        cum = cum_f.astype(jnp.int32)                               # exact <= TS

        carry = carry_ref[...]                                      # (Bb, 1) i32
        shift = carry + cum                                         # (Bb, TS)

        col = jax.lax.broadcasted_iota(jnp.int32, tok.shape, 1) + si * block_s
        pos = jnp.clip(col - shift, 0, max_length - 1)              # fixed pos

        # update the running blank count for the next sequence tile
        carry_ref[...] = carry + cum[:, block_s - 1:block_s]

        # --- embedding lookup: single fused one-hot @ table matmul (MXU) ----
        table = emb_ref[...]                                        # (M, D)
        d = table.shape[1]
        m_iota = jax.lax.broadcasted_iota(
            jnp.int32, (block_b, block_s, max_length), 2)
        onehot = (pos[..., None] == m_iota).astype(table.dtype)     # (Bb,TS,M)
        onehot2 = onehot.reshape(block_b * block_s, max_length)     # (Bb*TS,M)
        res = jnp.dot(onehot2, table,
                      preferred_element_type=jnp.float32)           # (Bb*TS,D)
        out_ref[...] = res.reshape(block_b, block_s, d).astype(out_ref.dtype)

    return kernel


# ----------------------------------------------------------------------------
# Wrapper
# ----------------------------------------------------------------------------
def blank_positional_embedding(tokens, emb_table, blank_token_ids, n_blanks,
                               *, block_s=128, block_b=None):
    """Forward pass of BlankPositionalEmbedding.

    tokens:     (B, S) int token ids
    emb_table:  (max_length, D) positional embedding weight
    returns:    (B, S, D) embeddings of the blank-fixed positions
    """
    # TODO(synk): n_blanks only describes the blank-block length in the
    # original module; the cumsum-based fixed-position rule does not need it.
    del n_blanks

    tokens = tokens.astype(jnp.int32)
    B, S = tokens.shape
    M, D = emb_table.shape
    out_dtype = emb_table.dtype
    out_bytes = jnp.dtype(out_dtype).itemsize

    # --- pad S to a multiple of block_s (crop the output afterwards) --------
    Sp = ((S + block_s - 1) // block_s) * block_s
    if Sp != S:
        tokens = jnp.pad(tokens, ((0, 0), (0, Sp - S)))   # pad value irrelevant

    # --- pad D to a multiple of 128 so stores are unmasked lane-dense vst ---
    Dp = ((D + 127) // 128) * 128
    emb_p = emb_table if Dp == D else jnp.pad(emb_table, ((0, 0), (0, Dp - D)))

    # --- batch block: >= 2 blocks when possible (v7x megacore), 8-aligned ---
    if block_b is None:
        block_b = B
        half = B // 2
        if B % 2 == 0 and half % 8 == 0:
            block_b = half
        # keep the double-buffered output block modest in VMEM (v7x = 64 MiB)
        while block_b % 16 == 0 and 2 * block_b * block_s * Dp * out_bytes > (8 << 20):
            block_b //= 2
    assert B % block_b == 0
    assert block_b == B or block_b % 8 == 0, "batch block must be 8-aligned or full"

    grid = (B // block_b, Sp // block_s)

    # loop-invariant triangular matrix for the inclusive prefix sum (hoisted
    # out of the kernel body; constant index_map -> DMA'd once, stays in VMEM)
    tri = (jnp.arange(block_s, dtype=jnp.int32)[:, None]
           <= jnp.arange(block_s, dtype=jnp.int32)[None, :]).astype(jnp.float32)

    # --- VMEM budget (double-buffered blocks + live one-hot) ----------------
    out_blk = block_b * block_s * Dp * out_bytes
    tok_blk = block_b * block_s * 4
    tab_b = M * Dp * emb_p.dtype.itemsize
    tri_b = block_s * block_s * 4
    onehot_b = block_b * block_s * M * emb_p.dtype.itemsize
    est = 2 * out_blk + 2 * tok_blk + 2 * tab_b + 2 * tri_b + onehot_b + out_blk + (4 << 20)
    vmem_limit = int(min(max(est, 32 << 20), 64 << 20))

    kernel = make_blank_pos_emb_kernel(blank_token_ids, M, block_b, block_s)

    out = pl.pallas_call(
        kernel,
        out_shape=jax.ShapeDtypeStruct((B, Sp, Dp), out_dtype),
        grid_spec=pltpu.PrefetchScalarGridSpec(
            num_scalar_prefetch=0,
            grid=grid,
            in_specs=[
                pl.BlockSpec((block_s, block_s), lambda bi, si: (0, 0)),   # tri
                pl.BlockSpec((block_b, block_s), lambda bi, si: (bi, si)),  # tokens
                pl.BlockSpec((M, Dp), lambda bi, si: (0, 0)),               # table
            ],
            out_specs=pl.BlockSpec((block_b, block_s, Dp),
                                   lambda bi, si: (bi, si, 0)),
            scratch_shapes=[pltpu.VMEM((block_b, 1), jnp.int32)],
        ),
        compiler_params=pltpu.CompilerParams(
            dimension_semantics=("parallel", "arbitrary"),
            vmem_limit_bytes=vmem_limit),
    )(tri, tokens, emb_p)

    return out[:, :S, :D]


# ----------------------------------------------------------------------------
# Pure-JAX reference (correctness check)
# ----------------------------------------------------------------------------
def ref_blank_positional_embedding(tokens, emb_table, blank_token_ids, n_blanks):
    del n_blanks
    B, S = tokens.shape
    M, _ = emb_table.shape
    is_blank = (tokens[..., None] == blank_token_ids[None, None, :]).any(-1)
    shift = jnp.cumsum(is_blank.astype(jnp.int32), axis=1)        # inclusive
    positions = jnp.arange(S, dtype=jnp.int32)[None, :] - shift
    positions = jnp.clip(positions, 0, M - 1)
    return emb_table[positions]


# ----------------------------------------------------------------------------
if __name__ == "__main__":
    B, S, D = 16, 200, 128          # S not a multiple of 128 -> exercises padding
    max_length = 512
    n_blanks = 3
    vocab = 64
    blank_token_ids = jnp.array([3, 7], jnp.int32)

    key = jax.random.PRNGKey(0)
    k_emb, k_tok = jax.random.split(key)
    emb_table = 0.02 * jax.random.normal(k_emb, (max_length, D), jnp.float32)
    tokens = jax.random.randint(k_tok, (B, S), 8, vocab, dtype=jnp.int32)

    # insert blank blocks; rows get DIFFERENT blank counts (per-row carry),
    # one block crosses the 128-token sequence-tile boundary (cross-tile
    # carry), and grid = (2, 2) exercises multiple batch blocks as well.
    tokens = tokens.at[:, 10:10 + n_blanks].set(3)
    tokens = tokens.at[::2, 50:50 + n_blanks].set(7)
    tokens = tokens.at[:, 126:126 + n_blanks].set(3)
    tokens = tokens.at[1::2, 150:150 + n_blanks].set(3)

    out = blank_positional_embedding(tokens, emb_table, blank_token_ids,
                                     n_blanks, block_s=128)
    out = jax.block_until_ready(out)

    ref = ref_blank_positional_embedding(tokens, emb_table, blank_token_ids,
                                         n_blanks)
    np.testing.assert_allclose(np.asarray(out), np.asarray(ref),
                               rtol=1e-5, atol=1e-5)
    print("KERNEL_OK")
</pallas_src>

<mosaic_0001>
module attributes {stable_mosaic.version = 11 : i64} {
  func.func @kernel(%arg0: i32, %arg1: i32, %arg2: memref<128x128xf32, #tpu.memory_space<vmem>>, %arg3: memref<8x128xi32, #tpu.memory_space<vmem>>, %arg4: memref<512x128xf32, #tpu.memory_space<vmem>>, %arg5: memref<8x128x128xf32, #tpu.memory_space<vmem>>, %arg6: memref<8x1xi32, #tpu.memory_space<vmem>>) attributes {dimension_semantics = [#tpu.dimension_semantics<parallel>, #tpu.dimension_semantics<arbitrary>], iteration_bounds = array<i64: 2, 2>, scalar_prefetch = 0 : i64, scratch_operands = 1 : i64, tpu.core_type = #tpu.core_type<tc>, window_params = [{pipeline_mode = #tpu.pipeline_mode<synchronous>, transform_indices = @transform_0, window_bounds = array<i64: 128, 128>}, {transform_indices = @transform_1, window_bounds = array<i64: 8, 128>}, {pipeline_mode = #tpu.pipeline_mode<synchronous>, transform_indices = @transform_2, window_bounds = array<i64: 512, 128>}, {transform_indices = @transform_3, window_bounds = array<i64: 8, 128, 128>}]} {
    %c0_i32 = arith.constant 0 : i32
    %0 = arith.cmpi eq, %arg1, %c0_i32 : i32
    %1 = arith.extui %0 : i1 to i32
    %c0_i32_0 = arith.constant 0 : i32
    %2 = arith.cmpi ne, %1, %c0_i32_0 : i32
    scf.if %2 {
      %c0_i32_15 = arith.constant 0 : i32
      %40 = vector.broadcast %c0_i32_15 : i32 to vector<8x1xi32>
      %c0_16 = arith.constant 0 : index
      %c0_17 = arith.constant 0 : index
      %41 = vector.load %arg6[%c0_16, %c0_17] : memref<8x1xi32, #tpu.memory_space<vmem>>, vector<8x1xi32>
      tpu.vector_store %arg6[%c0_16, %c0_17], %40 {strides = array<i32>} : memref<8x1xi32, #tpu.memory_space<vmem>>, vector<8x1xi32>,
    } else {
    }
    %c0 = arith.constant 0 : index
    %c0_1 = arith.constant 0 : index
    %3 = vector.load %arg3[%c0, %c0_1] : memref<8x128xi32, #tpu.memory_space<vmem>>, vector<8x128xi32>
    %c3_i32 = arith.constant 3 : i32
    %4 = vector.broadcast %c3_i32 : i32 to vector<8x128xi32>
    %5 = arith.cmpi eq, %3, %4 : vector<8x128xi32>
    %c7_i32 = arith.constant 7 : i32
    %6 = vector.broadcast %c7_i32 : i32 to vector<8x128xi32>
    %7 = arith.cmpi eq, %3, %6 : vector<8x128xi32>
    %8 = arith.ori %5, %7 : vector<8x128xi1>
    %9 = arith.extui %8 : vector<8x128xi1> to vector<8x128xi32>
    %10 = arith.sitofp %9 : vector<8x128xi32> to vector<8x128xf32>
    %c0_2 = arith.constant 0 : index
    %c0_3 = arith.constant 0 : index
    %11 = vector.load %arg2[%c0_2, %c0_3] : memref<128x128xf32, #tpu.memory_space<vmem>>, vector<128x128xf32>
    %cst = arith.constant dense<0.000000e+00> : vector<8x128xf32>
    %12 = tpu.matmul %10, %11, %cst {dimension_numbers = #tpu.dot_dimension_numbers<[1], [0], [0], [1], [0, 0, 1, 1], [], []>} : vector<8x128xf32>, vector<128x128xf32>, vector<8x128xf32> -> vector<8x128xf32>
    %13 = arith.fptosi %12 : vector<8x128xf32> to vector<8x128xi32>
    %c0_4 = arith.constant 0 : index
    %c0_5 = arith.constant 0 : index
    %14 = vector.load %arg6[%c0_4, %c0_5] : memref<8x1xi32, #tpu.memory_space<vmem>>, vector<8x1xi32>
    %15 = vector.broadcast %14 : vector<8x1xi32> to vector<8x128xi32>
    %16 = arith.addi %15, %13 : vector<8x128xi32>
    %17 = tpu.iota {dimensions = array<i32: 1>} : vector<8x128xi32>
    %c128_i32 = arith.constant 128 : i32
    %18 = arith.muli %arg1, %c128_i32 : i32
    %19 = vector.broadcast %18 : i32 to vector<8x128xi32>
    %20 = arith.addi %17, %19 : vector<8x128xi32>
    %21 = arith.subi %20, %16 : vector<8x128xi32>
    %c0_i32_6 = arith.constant 0 : i32
    %c511_i32 = arith.constant 511 : i32
    %22 = vector.broadcast %c0_i32_6 : i32 to vector<8x128xi32>
    %23 = arith.maxsi %22, %21 : vector<8x128xi32>
    %24 = vector.broadcast %c511_i32 : i32 to vector<8x128xi32>
    %25 = arith.minsi %24, %23 : vector<8x128xi32>
    %26 = vector.extract_strided_slice %13 {offsets = [0, 127], sizes = [8, 1], strides = [1, 1]} : vector<8x128xi32> to vector<8x1xi32>
    %27 = arith.addi %14, %26 : vector<8x1xi32>
    %c0_7 = arith.constant 0 : index
    %c0_8 = arith.constant 0 : index
    %28 = vector.load %arg6[%c0_7, %c0_8] : memref<8x1xi32, #tpu.memory_space<vmem>>, vector<8x1xi32>
    tpu.vector_store %arg6[%c0_7, %c0_8], %27 {strides = array<i32>} : memref<8x1xi32, #tpu.memory_space<vmem>>, vector<8x1xi32>,
    %c0_9 = arith.constant 0 : index
    %c0_10 = arith.constant 0 : index
    %29 = vector.load %arg4[%c0_9, %c0_10] : memref<512x128xf32, #tpu.memory_space<vmem>>, vector<512x128xf32>
    %30 = tpu.iota {dimensions = array<i32: 2>} : vector<8x128x512xi32>
    %31 = vector.shape_cast %25 : vector<8x128xi32> to vector<8x128x1xi32>
    %32 = vector.broadcast %31 : vector<8x128x1xi32> to vector<8x128x512xi32>
    %33 = arith.cmpi eq, %32, %30 : vector<8x128x512xi32>
    %34 = arith.extui %33 : vector<8x128x512xi1> to vector<8x128x512xi32>
    %35 = arith.sitofp %34 : vector<8x128x512xi32> to vector<8x128x512xf32>
    %36 = vector.shape_cast %35 : vector<8x128x512xf32> to vector<1024x512xf32>
    %cst_11 = arith.constant dense<0.000000e+00> : vector<1024x128xf32>
    %37 = tpu.matmul %36, %29, %cst_11 {dimension_numbers = #tpu.dot_dimension_numbers<[1], [0], [0], [1], [0, 0, 1, 1], [], []>} : vector<1024x512xf32>, vector<512x128xf32>, vector<1024x128xf32> -> vector<1024x128xf32>
    %38 = vector.shape_cast %37 : vector<1024x128xf32> to vector<8x128x128xf32>
    %c0_12 = arith.constant 0 : index
    %c0_13 = arith.constant 0 : index
    %c0_14 = arith.constant 0 : index
    %39 = vector.load %arg5[%c0_12, %c0_13, %c0_14] : memref<8x128x128xf32, #tpu.memory_space<vmem>>, vector<8x128x128xf32>
    tpu.vector_store %arg5[%c0_12, %c0_13, %c0_14], %38 {strides = array<i32>} : memref<8x128x128xf32, #tpu.memory_space<vmem>>, vector<8x128x128xf32>,
    return
  }
  func.func @transform_0(%arg0: i32, %arg1: i32) -> (i32, i32) {
    %c0_i32 = arith.constant 0 : i32
    %c0_i32_0 = arith.constant 0 : i32
    %c0_i32_1 = arith.constant 0 : i32
    return %c0_i32, %c0_i32_0 : i32, i32
  }
  func.func @transform_1(%arg0: i32, %arg1: i32) -> (i32, i32) {
    %c0_i32 = arith.constant 0 : i32
    return %arg0, %arg1 : i32, i32
  }
  func.func @transform_2(%arg0: i32, %arg1: i32) -> (i32, i32) {
    %c0_i32 = arith.constant 0 : i32
    %c0_i32_0 = arith.constant 0 : i32
    %c0_i32_1 = arith.constant 0 : i32
    return %c0_i32, %c0_i32_0 : i32, i32
  }
  func.func @transform_3(%arg0: i32, %arg1: i32) -> (i32, i32, i32) {
    %c0_i32 = arith.constant 0 : i32
    %c0_i32_0 = arith.constant 0 : i32
    return %arg0, %arg1, %c0_i32 : i32, i32, i32
  }
}

</mosaic_0001>

<llo_original>
// kernel: tpu_custom_call.1
$region0: #{tpu_custom_call.1}
  #allocation0 [shape = 'u32[]', space=smem, size = 0x4, offset = 0x4, fixed_abs, tag = 'smem constant byte address 0x4 - core index']
  #allocation1 [shape = 'u32[144,128]{1,0:T(1,128)}', space=vmem, size = 0x12000, scoped, tag = 'internal scratch']
  #allocation2 [shape = 's32[8,1]{1,0:T(8,128)}', space=vmem, size = 0x1000, scoped, tag = 'scratch operand']
  #allocation10 [shape = 's32[]', space=sflag, size = 0x4, offset = 0, fixed_abs, tag = 'sflag constant byte address 0x0 - dummy sync flag']
  %s0 = inlined_call_operand.hbm [shape: f32[128,128], index: 0, kind: input, shape index: {}]
  %s1 = inlined_call_operand.hbm [shape: s32[16,256], index: 1, kind: input, shape index: {}]
  %s2 = inlined_call_operand.hbm [shape: f32[512,128], index: 2, kind: input, shape index: {}]
  %s3 = inlined_call_operand.hbm [shape: f32[16,256,128], index: 3, kind: output, shape index: {}]
  %s4 = sld [smem:[#allocation0]]
  $region61: #{tpu_custom_call.1} parent=0
    _
  %s6 = ssub.s32 1, %s4
  %s7 = scalar_select 0, %s6, %s4
  $region1: #{tpu_custom_call.1} parent=0
    #allocation3 [shape = 'u8[65536]{0}', space=vmem, size = 0x10000, scoped, tag = 'input window, operand 0, single buffered']
    #allocation4 [shape = 's32[2]{0}', space=sflag, size = 0x8, scoped, tag = 'scoped memory for tpu_custom_call.1']
    #allocation5 [shape = 's32[2]{0}', space=sflag, size = 0x8, scoped, tag = 'scoped memory for tpu_custom_call.1']
    #allocation6 [shape = 'u8[8192]{0}', space=vmem, size = 0x2000, scoped, tag = 'input window, operand 1']
    #allocation7 [shape = 's32[2]{0}', space=sflag, size = 0x8, scoped, tag = 'scoped memory for tpu_custom_call.1']
    #allocation8 [shape = 'u8[262144]{0}', space=vmem, size = 0x40000, scoped, tag = 'input window, operand 2, single buffered']
    #allocation9 [shape = 'u8[1048576]{0}', space=vmem, size = 0x100000, scoped, tag = 'output window, operand 0']
    %8 = vsyncpa [#allocation4], 0
    %9 = vsyncpa [#allocation7], 0
    %s10 = scalar_lea.sflag [#allocation7], 1
    %11 = vsyncpa %s10, 0
    %12 = vsyncpa [#allocation5], 0
    %s13 = scalar_lea.sflag [#allocation5], 1
    %14 = vsyncpa %s13, 0
    loop: start=0, step=1, limit=6
    $region2: #{tpu_custom_call.1} parent=1 // loop_pre_header
      _
    $region3: #{tpu_custom_call.1} parent=1 // loop_header
      %s16 = sphi 0, %s20
      %p17 = scmp.ge.s32.totalorder %s16, 6
      %s23 = sphi 0, %s35
      %s24 = sphi 0, %s31
      %s25 = sphi 0, %s23
      %s26 = sphi 0, %s24
      %s27 = sphi 0, %s25
      %s28 = sphi 0, %s26
      %s36 = sphi 0, %s36
      %s38 = sphi 0, %s36
      %s39 = sphi 0, %s38
      %s53 = sphi 0, %s39
      %s61 = sphi 0, %s63
      %s64 = sphi 0, %s61
      %s65 = sphi 0, %s64
      %s81 = sphi 0, %s65
      %s85 = sphi 0, %s85
      %s87 = sphi 0, %s85
      %s88 = sphi 0, %s87
      %s102 = sphi 0, %s88
      %s110 = sphi 0, %s112
      %s113 = sphi 0, %s110
      %s114 = sphi 0, %s113
      %s130 = sphi 0, %s114
    $region4: #{tpu_custom_call.1} parent=1 // loop_header_branch
      %19 = sbr.rel (%p17) target = $region8
    $region5: #{tpu_custom_call.1} parent=1 // loop_body
      %s21 = ssub.s32 %s16, 1
      %s22 = ssub.s32 %s16, 2
      %s29 = sadd.s32 1, %s24
      %p30 = scmp.ge.s32.totalorder %s29, 2
      %s31 = scalar_select %p30, 0, %s29
      %s32 = sadd.s32 1, %s23
      %s33 = scalar_select %p30, %s32, %s23
      %p34 = scmp.ge.s32.totalorder %s33, 2
      %s35 = scalar_select %p34, 0, %s33
      %s37 = sadd.s32 %s36, 1
      %p40 = scmp.eq.s32.totalorder %s16, 3
      %p41 = scmp.ne.s32.totalorder %s36, %s38
      %p42 = scmp.eq.s32.totalorder %s16, 0
      %p43 = por %p41, %p42
      %p44 = scmp.ne.s32.totalorder %s36, %s38
      %p45 = scmp.eq.s32.totalorder %s21, 3
      %p46 = por %p44, %p45
      %p47 = scmp.ne.s32.totalorder %s38, %s39
      %p48 = scmp.eq.s32.totalorder %s21, 0
      %p49 = por %p47, %p48
      %p50 = scmp.ne.s32.totalorder %s38, %s39
      %p51 = scmp.eq.s32.totalorder %s22, 3
      %p52 = por %p50, %p51
      %p54 = scmp.ne.s32.totalorder %s39, %s53
      %p55 = scmp.eq.s32.totalorder %s22, 0
      %p56 = por %p54, %p55
      %s57 = ssub.s32 %s23, %s35
      %s58 = ssub.s32 %s24, %s31
      %s59 = sor.u32 %s57, %s58
      %p60 = scmp.eq.s32.totalorder %s59, 0
      %s62 = sadd.s32 %s61, 1
      %s63 = scalar_select %p60, %s61, %s62
      %p66 = pneg %p60
      %p67 = scmp.eq.s32.totalorder %s16, 3
      %p68 = por %p66, %p67
      %p69 = scmp.ne.s32.totalorder %s61, %s64
      %p70 = scmp.eq.s32.totalorder %s16, 0
      %p71 = por %p69, %p70
      %p72 = scmp.ne.s32.totalorder %s61, %s64
      %p73 = scmp.eq.s32.totalorder %s21, 3
      %p74 = por %p72, %p73
      %p75 = scmp.ne.s32.totalorder %s64, %s65
      %p76 = scmp.eq.s32.totalorder %s21, 0
      %p77 = por %p75, %p76
      %p78 = scmp.ne.s32.totalorder %s64, %s65
      %p79 = scmp.eq.s32.totalorder %s22, 3
      %p80 = por %p78, %p79
      %p82 = scmp.ne.s32.totalorder %s65, %s81
      %p83 = scmp.eq.s32.totalorder %s22, 0
      %p84 = por %p82, %p83
      %s86 = sadd.s32 %s85, 1
      %p89 = scmp.eq.s32.totalorder %s16, 3
      %p90 = scmp.ne.s32.totalorder %s85, %s87
      %p91 = scmp.eq.s32.totalorder %s16, 0
      %p92 = por %p90, %p91
      %p93 = scmp.ne.s32.totalorder %s85, %s87
      %p94 = scmp.eq.s32.totalorder %s21, 3
      %p95 = por %p93, %p94
      %p96 = scmp.ne.s32.totalorder %s87, %s88
      %p97 = scmp.eq.s32.totalorder %s21, 0
      %p98 = por %p96, %p97
      %p99 = scmp.ne.s32.totalorder %s87, %s88
      %p100 = scmp.eq.s32.totalorder %s22, 3
      %p101 = por %p99, %p100
      %p103 = scmp.ne.s32.totalorder %s88, %s102
      %p104 = scmp.eq.s32.totalorder %s22, 0
      %p105 = por %p103, %p104
      %s106 = ssub.s32 %s23, %s35
      %s107 = ssub.s32 %s24, %s31
      %s108 = sor.u32 %s106, %s107
      %p109 = scmp.eq.s32.totalorder %s108, 0
      %s111 = sadd.s32 %s110, 1
      %s112 = scalar_select %p109, %s110, %s111
      %p115 = pneg %p109
      %p116 = scmp.eq.s32.totalorder %s16, 3
      %p117 = por %p115, %p116
      %p118 = scmp.ne.s32.totalorder %s110, %s113
      %p119 = scmp.eq.s32.totalorder %s16, 0
      %p120 = por %p118, %p119
      %p121 = scmp.ne.s32.totalorder %s110, %s113
      %p122 = scmp.eq.s32.totalorder %s21, 3
      %p123 = por %p121, %p122
      %p124 = scmp.ne.s32.totalorder %s113, %s114
      %p125 = scmp.eq.s32.totalorder %s21, 0
      %p126 = por %p124, %p125
      %p127 = scmp.ne.s32.totalorder %s113, %s114
      %p128 = scmp.eq.s32.totalorder %s22, 3
      %p129 = por %p127, %p128
      %p131 = scmp.ne.s32.totalorder %s114, %s130
      %p132 = scmp.eq.s32.totalorder %s22, 0
      %p133 = por %p131, %p132
      %p134 = scmp.le.s32.totalorder 1, %s16
      %p135 = scmp.lt.s32.totalorder %s16, 5
      %p136 = pnand %p134, %p135
      %p137 = pneg %p136
      // Predicated region
      $region9: #{tpu_custom_call.1} parent=5 // pred_check
        _
      $region10: #{tpu_custom_call.1} parent=5 // pred_check_branch
        %139 = sbr.rel (%p136) target = $region12
      $region11: #{tpu_custom_call.1} parent=5 // pred_region
        %s140 = ssub.s32 %s16, 1
        // Predicated region
        $region13: #{tpu_custom_call.1} parent=11 // pred_check
          %p141 = pneg %p49
        $region14: #{tpu_custom_call.1} parent=11 // pred_check_branch
          %143 = sbr.rel (%p141) target = $region16
        $region15: #{tpu_custom_call.1} parent=11 // pred_region
          %s145 = ssub.s32 2048, 2048
          %146 = vsyncadd [#allocation4], %s145
          %s147 = sshll.u32 [#allocation3], 4
          %s148 = int_to_ptr.vmem [resolvable:$true] %s147
          %153 = dma.hbm_to_vmem [thread:$0]  %s0, 2048, %s148, [#allocation4], 128, 128, 8
        $region16: #{tpu_custom_call.1} parent=11 // pred_fallthru
          _
        // Predicated region
        $region17: #{tpu_custom_call.1} parent=11 // pred_check
          %p154 = pneg %p98
        $region18: #{tpu_custom_call.1} parent=11 // pred_check_branch
          %156 = sbr.rel (%p154) target = $region20
        $region19: #{tpu_custom_call.1} parent=11 // pred_region
          %s158 = ssub.s32 8192, 8192
          %159 = vsyncadd [#allocation7], %s158
          %s160 = sshll.u32 [#allocation8], 4
          %s161 = int_to_ptr.vmem [resolvable:$true] %s160
          %166 = dma.hbm_to_vmem [thread:$0]  %s2, 8192, %s161, [#allocation7], 128, 128, 8
        $region20: #{tpu_custom_call.1} parent=11 // pred_fallthru
          _
      $region12: #{tpu_custom_call.1} parent=5 // pred_fallthru
        _
      %p167 = scmp.lt.s32.totalorder %s16, 4
      // Predicated region
      $region21: #{tpu_custom_call.1} parent=5 // pred_check
        %p168 = pneg %p167
      $region22: #{tpu_custom_call.1} parent=5 // pred_check_branch
        %170 = sbr.rel (%p168) target = $region24
      $region23: #{tpu_custom_call.1} parent=5 // pred_region
        // Predicated region
        $region25: #{tpu_custom_call.1} parent=23 // pred_check
          %p171 = pneg %p71
        $region26: #{tpu_custom_call.1} parent=23 // pred_check_branch
          %173 = sbr.rel (%p171) target = $region28
        $region27: #{tpu_custom_call.1} parent=23 // pred_region
          %s174 = sand.u32 %s16, 1
          %s175 = scalar_lea.sflag [#allocation7], %s174
          %s176 = sand.u32 %s61, 1
          %s177 = smul.addr %s176, 8
          %s178 = scalar_lea.vmem [#allocation6], %s177
          %s180 = ssub.s32 128, 128
          %181 = vsyncadd %s175, %s180
          %s182 = smul.addr %s23, 2
          %s183 = sadd.s32 %s24, %s182
          %s184 = smul.addr %s183, 128
          %s185 = scalar_lea.hbm %s1, %s184
          %s187 = sshll.u32 %s178, 4
          %s188 = int_to_ptr.vmem [resolvable:$true] %s187
          %190 = dma.hbm_to_vmem [thread:$0]  %s185, 128, %s188, %s175
        $region28: #{tpu_custom_call.1} parent=23 // pred_fallthru
          _
      $region24: #{tpu_custom_call.1} parent=5 // pred_fallthru
        _
      %p191 = scmp.le.s32.totalorder 1, %s16
      %p192 = scmp.lt.s32.totalorder %s16, 5
      %p193 = pnand %p191, %p192
      %p194 = pneg %p193
      // Predicated region
      $region29: #{tpu_custom_call.1} parent=5 // pred_check
        _
      $region30: #{tpu_custom_call.1} parent=5 // pred_check_branch
        %196 = sbr.rel (%p193) target = $region32
      $region31: #{tpu_custom_call.1} parent=5 // pred_region
        %s197 = ssub.s32 %s16, 1
        // Predicated region
        $region33: #{tpu_custom_call.1} parent=31 // pred_check
          %p198 = pneg %p49
        $region34: #{tpu_custom_call.1} parent=31 // pred_check_branch
          %200 = sbr.rel (%p198) target = $region36
        $region35: #{tpu_custom_call.1} parent=31 // pred_region
          %201 = dma.done [#allocation4], 2048
        $region36: #{tpu_custom_call.1} parent=31 // pred_fallthru
          _
        %s202 = sand.u32 %s21, 1
        %s203 = scalar_lea.sflag [#allocation7], %s202
        %s204 = sand.u32 %s64, 1
        %s205 = smul.addr %s204, 8
        %s206 = scalar_lea.vmem [#allocation6], %s205
        // Predicated region
        $region37: #{tpu_custom_call.1} parent=31 // pred_check
          %p207 = pneg %p77
        $region38: #{tpu_custom_call.1} parent=31 // pred_check_branch
          %209 = sbr.rel (%p207) target = $region40
        $region39: #{tpu_custom_call.1} parent=31 // pred_region
          %210 = dma.done %s203, 128
        $region40: #{tpu_custom_call.1} parent=31 // pred_fallthru
          _
        // Predicated region
        $region41: #{tpu_custom_call.1} parent=31 // pred_check
          %p211 = pneg %p98
        $region42: #{tpu_custom_call.1} parent=31 // pred_check_branch
          %213 = sbr.rel (%p211) target = $region44
        $region43: #{tpu_custom_call.1} parent=31 // pred_region
          %214 = dma.done [#allocation7], 8192
        $region44: #{tpu_custom_call.1} parent=31 // pred_fallthru
          _
        %p215 = pneg %p49
        %p216 = pneg %p46
        %s217 = sand.u32 %s21, 1
        %s218 = scalar_lea.sflag [#allocation7], %s217
        %s219 = sand.u32 %s64, 1
        %s220 = smul.addr %s219, 8
        %s221 = scalar_lea.vmem [#allocation6], %s220
        %p222 = pneg %p77
        %p223 = pneg %p74
        %p224 = pneg %p98
        %p225 = pneg %p95
        %p226 = pneg %p126
        %p227 = pneg %p123
        %s228 = sand.u32 %s113, 1
        %s229 = scalar_lea.sflag [#allocation5], %s228
        %s230 = sand.u32 %s113, 1
        %s231 = smul.addr %s230, 1024
        %s232 = scalar_lea.vmem [#allocation9], %s231
        %s233 = smul.u32 8, %s25
        %s234 = smul.u32 16, %s26
        %p235 = scmp.eq.s32.totalorder %s26, 0
        // Predicated region
        $region45: #{tpu_custom_call.1} parent=31 // pred_check
          %p236 = pneg %p235
        $region46: #{tpu_custom_call.1} parent=31 // pred_check_branch
          %238 = sbr.rel (%p236) target = $region48
        $region47: #{tpu_custom_call.1} parent=31 // pred_region
          %vm239 = vcmask 7168
          %240 = vst.msk [vmem:[#allocation2] sm:$0xff] %vm239, 0
        $region48: #{tpu_custom_call.1} parent=31 // pred_fallthru
          _
        %v241 = vld [vmem:[%s206] sm:$0xff]
        %vm242 = vcmp.eq.s32.totalorder %v241, 3
        %vm243 = vcmp.eq.s32.totalorder %v241, 7
        %vm244 = vmor %vm242, %vm243
        %v245 = vsel %vm244, 1, 0
        %v246 = vcvt.s32.f32 %v245
        %v247 = vld [vmem:[#allocation3] sm:$0xff]
        %v248 = vld [vmem:[#allocation3 + $0x8] sm:$0xff]
        %v249 = vld [vmem:[#allocation3 + $0x10] sm:$0xff]
        %v250 = vld [vmem:[#allocation3 + $0x18] sm:$0xff]
        %v251 = vld [vmem:[#allocation3 + $0x20] sm:$0xff]
        %v252 = vld [vmem:[#allocation3 + $0x28] sm:$0xff]
        %v253 = vld [vmem:[#allocation3 + $0x30] sm:$0xff]
        %v254 = vld [vmem:[#allocation3 + $0x38] sm:$0xff]
        %v255 = vld [vmem:[#allocation3 + $0x40] sm:$0xff]
        %v256 = vld [vmem:[#allocation3 + $0x48] sm:$0xff]
        %v257 = vld [vmem:[#allocation3 + $0x50] sm:$0xff]
        %v258 = vld [vmem:[#allocation3 + $0x58] sm:$0xff]
        %v259 = vld [vmem:[#allocation3 + $0x60] sm:$0xff]
        %v260 = vld [vmem:[#allocation3 + $0x68] sm:$0xff]
        %v261 = vld [vmem:[#allocation3 + $0x70] sm:$0xff]
        %v262 = vld [vmem:[#allocation3 + $0x78] sm:$0xff]
        %263 = vmatprep.subr.mxu0 0.0
        %264 = vmatpush1.msra.mxu0 %v247
        %265 = vmatprep.subr.mxu0 0.0
        %266 = vmatpush1.msra.mxu0 %v248
        %267 = vmatprep.subr.mxu0 0.0
        %268 = vmatpush1.msra.mxu0 %v249
        %269 = vmatprep.subr.mxu0 0.0
        %270 = vmatpush1.msra.mxu0 %v250
        %271 = vmatprep.subr.mxu0 0.0
        %272 = vmatpush1.msra.mxu0 %v251
        %273 = vmatprep.subr.mxu0 0.0
        %274 = vmatpush1.msra.mxu0 %v252
        %275 = vmatprep.subr.mxu0 0.0
        %276 = vmatpush1.msra.mxu0 %v253
        %277 = vmatprep.subr.mxu0 0.0
        %278 = vmatpush1.msra.mxu0 %v254
        %279 = vmatprep.subr.mxu0 0.0
        %280 = vmatpush1.msra.mxu0 %v255
        %281 = vmatprep.subr.mxu0 0.0
        %282 = vmatpush1.msra.mxu0 %v256
        %283 = vmatprep.subr.mxu0 0.0
        %284 = vmatpush1.msra.mxu0 %v257
        %285 = vmatprep.subr.mxu0 0.0
        %286 = vmatpush1.msra.mxu0 %v258
        %287 = vmatprep.subr.mxu0 0.0
        %288 = vmatpush1.msra.mxu0 %v259
        %289 = vmatprep.subr.mxu0 0.0
        %290 = vmatpush1.msra.mxu0 %v260
        %291 = vmatprep.subr.mxu0 0.0
        %292 = vmatpush1.msra.mxu0 %v261
        %293 = vmatprep.subr.mxu0 0.0
        %294 = vmatpush1.msra.mxu0 %v262
        %295 = vmatprep.subr.mxu0 0.0
        %296 = vmatpush1.msra.mxu0 0.0
        %297 = vmatprep.subr.mxu0 0.0
        %298 = vmatpush1.msra.mxu0 0.0
        %299 = vmatprep.subr.mxu0 0.0
        %300 = vmatpush1.msra.mxu0 0.0
        %301 = vmatprep.subr.mxu0 0.0
        %302 = vmatpush1.msra.mxu0 0.0
        %303 = vmatprep.subr.mxu0 0.0
        %304 = vmatpush1.msra.mxu0 0.0
        %305 = vmatprep.subr.mxu0 0.0
        %306 = vmatpush1.msra.mxu0 0.0
        %307 = vmatprep.subr.mxu0 0.0
        %308 = vmatpush1.msra.mxu0 0.0
        %309 = vmatprep.subr.mxu0 0.0
        %310 = vmatpush1.msra.mxu0 0.0
        %311 = vmatprep.subr.mxu0 0.0
        %312 = vmatpush1.msra.mxu0 0.0
        %313 = vmatprep.subr.mxu0 0.0
        %314 = vmatpush1.msra.mxu0 0.0
        %315 = vmatprep.subr.mxu0 0.0
        %316 = vmatpush1.msra.mxu0 0.0
        %317 = vmatprep.subr.mxu0 0.0
        %318 = vmatpush1.msra.mxu0 0.0
        %319 = vmatprep.subr.mxu0 0.0
        %320 = vmatpush1.msra.mxu0 0.0
        %321 = vmatprep.subr.mxu0 0.0
        %322 = vmatpush1.msra.mxu0 0.0
        %323 = vmatprep.subr.mxu0 0.0
        %324 = vmatpush1.msra.mxu0 0.0
        %325 = vmatprep.subr.mxu0 0.0
        %326 = vmatpush1.msra.mxu0 0.0
        %327 = vmatprep.mubr.f32.mxu0 0.0
        %328 = vmatmul.mubr.f32.gmra.mrb[0].mxu0 %v246
        %v329 = vpop.f32.mrb[0].mxu0
        %v330 = vadd.f32 0.0, %v329
        %v331 = vpop.f32.mrb[0].mxu0
        %332 = vdwg.mxu0
        %v333 = vcvt.f32.s32.to.zero.pseudo %v330
        %v334 = vld [vmem:[#allocation2] sm:$0xff]
        %335 = vset.pattern.permute.xlu0 0
        %336 = vperm.xlu0 %335, %v334
        %v337 = vpop.permute.xlu0 %336
        %v338 = vadd.s32 %v337, %v333
        %v339 = vlaneseq
        %v340 = vand.u32 %v339, 127
        %s341 = smul.u32 %s26, 128
        %v342 = vstv %s341
        %v343 = vadd.s32 %v340, %v342
        %v344 = vsub.s32 %v343, %v338
        %vm345 = vcmp.gt.s32.totalorder %v344, 0
        %v346 = vsel %vm345, %v344, 0
        %vm347 = vcmp.lt.s32.totalorder %v346, 511
        %v348 = vsel %vm347, %v346, 511
        %349 = vrot.lane.b32.xlu0 %v333, 1
        %v350 = vpop.permute.xlu0 %349
        %v351 = vadd.s32 %v334, %v350
        %vm352 = vcmask 7168
        %353 = vst.msk [vmem:[#allocation2] sm:$0xff] %vm352, %v351
        %v354 = vld [vmem:[#allocation8] sm:$0xff]
        %v355 = vld [vmem:[#allocation8 + $0x8] sm:$0xff]
        %v356 = vld [vmem:[#allocation8 + $0x10] sm:$0xff]
        %v357 = vld [vmem:[#allocation8 + $0x18] sm:$0xff]
        %v358 = vld [vmem:[#allocation8 + $0x20] sm:$0xff]
        %v359 = vld [vmem:[#allocation8 + $0x28] sm:$0xff]
        %v360 = vld [vmem:[#allocation8 + $0x30] sm:$0xff]
        %v361 = vld [vmem:[#allocation8 + $0x38] sm:$0xff]
        %v362 = vld [vmem:[#allocation8 + $0x40] sm:$0xff]
        %v363 = vld [vmem:[#allocation8 + $0x48] sm:$0xff]
        %v364 = vld [vmem:[#allocation8 + $0x50] sm:$0xff]
        %v365 = vld [vmem:[#allocation8 + $0x58] sm:$0xff]
        %v366 = vld [vmem:[#allocation8 + $0x60] sm:$0xff]
        %v367 = vld [vmem:[#allocation8 + $0x68] sm:$0xff]
        %v368 = vld [vmem:[#allocation8 + $0x70] sm:$0xff]
        %v369 = vld [vmem:[#allocation8 + $0x78] sm:$0xff]
        %v370 = vld [vmem:[#allocation8 + $0x80] sm:$0xff]
        %v371 = vld [vmem:[#allocation8 + $0x88] sm:$0xff]
        %v372 = vld [vmem:[#allocation8 + $0x90] sm:$0xff]
        %v373 = vld [vmem:[#allocation8 + $0x98] sm:$0xff]
        %v374 = vld [vmem:[#allocation8 + $0xa0] sm:$0xff]
        %v375 = vld [vmem:[#allocation8 + $0xa8] sm:$0xff]
        %v376 = vld [vmem:[#allocation8 + $0xb0] sm:$0xff]
        %v377 = vld [vmem:[#allocation8 + $0xb8] sm:$0xff]
        %v378 = vld [vmem:[#allocation8 + $0xc0] sm:$0xff]
        %v379 = vld [vmem:[#allocation8 + $0xc8] sm:$0xff]
        %v380 = vld [vmem:[#allocation8 + $0xd0] sm:$0xff]
        %v381 = vld [vmem:[#allocation8 + $0xd8] sm:$0xff]
        %v382 = vld [vmem:[#allocation8 + $0xe0] sm:$0xff]
        %v383 = vld [vmem:[#allocation8 + $0xe8] sm:$0xff]
        %v384 = vld [vmem:[#allocation8 + $0xf0] sm:$0xff]
        %v385 = vld [vmem:[#allocation8 + $0xf8] sm:$0xff]
        %v386 = vld [vmem:[#allocation8 + $0x100] sm:$0xff]
        %v387 = vld [vmem:[#allocation8 + $0x108] sm:$0xff]
        %v388 = vld [vmem:[#allocation8 + $0x110] sm:$0xff]
        %v389 = vld [vmem:[#allocation8 + $0x118] sm:$0xff]
        %v390 = vld [vmem:[#allocation8 + $0x120] sm:$0xff]
        %v391 = vld [vmem:[#allocation8 + $0x128] sm:$0xff]
        %v392 = vld [vmem:[#allocation8 + $0x130] sm:$0xff]
        %v393 = vld [vmem:[#allocation8 + $0x138] sm:$0xff]
        %v394 = vld [vmem:[#allocation8 + $0x140] sm:$0xff]
        %v395 = vld [vmem:[#allocation8 + $0x148] sm:$0xff]
        %v396 = vld [vmem:[#allocation8 + $0x150] sm:$0xff]
        %v397 = vld [vmem:[#allocation8 + $0x158] sm:$0xff]
        %v398 = vld [vmem:[#allocation8 + $0x160] sm:$0xff]
        %v399 = vld [vmem:[#allocation8 + $0x168] sm:$0xff]
        %v400 = vld [vmem:[#allocation8 + $0x170] sm:$0xff]
        %v401 = vld [vmem:[#allocation8 + $0x178] sm:$0xff]
        %v402 = vld [vmem:[#allocation8 + $0x180] sm:$0xff]
        %v403 = vld [vmem:[#allocation8 + $0x188] sm:$0xff]
        %v404 = vld [vmem:[#allocation8 + $0x190] sm:$0xff]
        %v405 = vld [vmem:[#allocation8 + $0x198] sm:$0xff]
        %v406 = vld [vmem:[#allocation8 + $0x1a0] sm:$0xff]
        %v407 = vld [vmem:[#allocation8 + $0x1a8] sm:$0xff]
        %v408 = vld [vmem:[#allocation8 + $0x1b0] sm:$0xff]
        %v409 = vld [vmem:[#allocation8 + $0x1b8] sm:$0xff]
        %v410 = vld [vmem:[#allocation8 + $0x1c0] sm:$0xff]
        %v411 = vld [vmem:[#allocation8 + $0x1c8] sm:$0xff]
        %v412 = vld [vmem:[#allocation8 + $0x1d0] sm:$0xff]
        %v413 = vld [vmem:[#allocation8 + $0x1d8] sm:$0xff]
        %v414 = vld [vmem:[#allocation8 + $0x1e0] sm:$0xff]
        %v415 = vld [vmem:[#allocation8 + $0x1e8] sm:$0xff]
        %v416 = vld [vmem:[#allocation8 + $0x1f0] sm:$0xff]
        %v417 = vld [vmem:[#allocation8 + $0x1f8] sm:$0xff]
        %v418 = vadd.s32 %v340, 128
        %v419 = vadd.s32 %v340, 256
        %v420 = vadd.s32 %v340, 384
        %v421 = vlaneseq
        %v422 = vshrl.u32 %v421, 7
        %v423 = vsub.s32 0, %v422
        %v424 = vrot.slane %v348, %v423
        %426 = vbcast.lane.b32.xlu0 %v424, 256
        %v427 = vpop.permute.xlu0 %426
        %s429 = sor.u32 256, 8
        %430 = vbcast.lane.b32.xlu0 %v424, %s429
        %v431 = vpop.permute.xlu0 %430
        %s433 = sor.u32 256, 16
        %434 = vbcast.lane.b32.xlu0 %v424, %s433
        %v435 = vpop.permute.xlu0 %434
        %s437 = sor.u32 256, 24
        %438 = vbcast.lane.b32.xlu0 %v424, %s437
        %v439 = vpop.permute.xlu0 %438
        %s441 = sor.u32 256, 32
        %442 = vbcast.lane.b32.xlu0 %v424, %s441
        %v443 = vpop.permute.xlu0 %442
        %s445 = sor.u32 256, 40
        %446 = vbcast.lane.b32.xlu0 %v424, %s445
        %v447 = vpop.permute.xlu0 %446
        %s449 = sor.u32 256, 48
        %450 = vbcast.lane.b32.xlu0 %v424, %s449
        %v451 = vpop.permute.xlu0 %450
        %s453 = sor.u32 256, 56
        %454 = vbcast.lane.b32.xlu0 %v424, %s453
        %v455 = vpop.permute.xlu0 %454
        %s457 = sor.u32 256, 64
        %458 = vbcast.lane.b32.xlu0 %v424, %s457
        %v459 = vpop.permute.xlu0 %458
        %s461 = sor.u32 256, 72
        %462 = vbcast.lane.b32.xlu0 %v424, %s461
        %v463 = vpop.permute.xlu0 %462
        %s465 = sor.u32 256, 80
        %466 = vbcast.lane.b32.xlu0 %v424, %s465
        %v467 = vpop.permute.xlu0 %466
        %s469 = sor.u32 256, 88
        %470 = vbcast.lane.b32.xlu0 %v424, %s469
        %v471 = vpop.permute.xlu0 %470
        %s473 = sor.u32 256, 96
        %474 = vbcast.lane.b32.xlu0 %v424, %s473
        %v475 = vpop.permute.xlu0 %474
        %s477 = sor.u32 256, 104
        %478 = vbcast.lane.b32.xlu0 %v424, %s477
        %v479 = vpop.permute.xlu0 %478
        %s481 = sor.u32 256, 112
        %482 = vbcast.lane.b32.xlu0 %v424, %s481
        %v483 = vpop.permute.xlu0 %482
        %s485 = sor.u32 256, 120
        %486 = vbcast.lane.b32.xlu0 %v424, %s485
        %v487 = vpop.permute.xlu0 %486
        %v488 = vlaneseq
        %v489 = vshrl.u32 %v488, 7
        %v490 = vsub.s32 1, %v489
        %v491 = vrot.slane %v348, %v490
        %493 = vbcast.lane.b32.xlu0 %v491, 256
        %v494 = vpop.permute.xlu0 %493
        %s496 = sor.u32 256, 8
        %497 = vbcast.lane.b32.xlu0 %v491, %s496
        %v498 = vpop.permute.xlu0 %497
        %s500 = sor.u32 256, 16
        %501 = vbcast.lane.b32.xlu0 %v491, %s500
        %v502 = vpop.permute.xlu0 %501
        %s504 = sor.u32 256, 24
        %505 = vbcast.lane.b32.xlu0 %v491, %s504
        %v506 = vpop.permute.xlu0 %505
        %s508 = sor.u32 256, 32
        %509 = vbcast.lane.b32.xlu0 %v491, %s508
        %v510 = vpop.permute.xlu0 %509
        %s512 = sor.u32 256, 40
        %513 = vbcast.lane.b32.xlu0 %v491, %s512
        %v514 = vpop.permute.xlu0 %513
        %s516 = sor.u32 256, 48
        %517 = vbcast.lane.b32.xlu0 %v491, %s516
        %v518 = vpop.permute.xlu0 %517
        %s520 = sor.u32 256, 56
        %521 = vbcast.lane.b32.xlu0 %v491, %s520
        %v522 = vpop.permute.xlu0 %521
        %s524 = sor.u32 256, 64
        %525 = vbcast.lane.b32.xlu0 %v491, %s524
        %v526 = vpop.permute.xlu0 %525
        %s528 = sor.u32 256, 72
        %529 = vbcast.lane.b32.xlu0 %v491, %s528
        %v530 = vpop.permute.xlu0 %529
        %s532 = sor.u32 256, 80
        %533 = vbcast.lane.b32.xlu0 %v491, %s532
        %v534 = vpop.permute.xlu0 %533
        %s536 = sor.u32 256, 88
        %537 = vbcast.lane.b32.xlu0 %v491, %s536
        %v538 = vpop.permute.xlu0 %537
        %s540 = sor.u32 256, 96
        %541 = vbcast.lane.b32.xlu0 %v491, %s540
        %v542 = vpop.permute.xlu0 %541
        %s544 = sor.u32 256, 104
        %545 = vbcast.lane.b32.xlu0 %v491, %s544
        %v546 = vpop.permute.xlu0 %545
        %s548 = sor.u32 256, 112
        %549 = vbcast.lane.b32.xlu0 %v491, %s548
        %v550 = vpop.permute.xlu0 %549
        %s552 = sor.u32 256, 120
        %553 = vbcast.lane.b32.xlu0 %v491, %s552
        %v554 = vpop.permute.xlu0 %553
        %v555 = vlaneseq
        %v556 = vshrl.u32 %v555, 7
        %v557 = vsub.s32 2, %v556
        %v558 = vrot.slane %v348, %v557
        %560 = vbcast.lane.b32.xlu0 %v558, 256
        %v561 = vpop.permute.xlu0 %560
        %s563 = sor.u32 256, 8
        %564 = vbcast.lane.b32.xlu0 %v558, %s563
        %v565 = vpop.permute.xlu0 %564
        %s567 = sor.u32 256, 16
        %568 = vbcast.lane.b32.xlu0 %v558, %s567
        %v569 = vpop.permute.xlu0 %568
        %s571 = sor.u32 256, 24
        %572 = vbcast.lane.b32.xlu0 %v558, %s571
        %v573 = vpop.permute.xlu0 %572
        %s575 = sor.u32 256, 32
        %576 = vbcast.lane.b32.xlu0 %v558, %s575
        %v577 = vpop.permute.xlu0 %576
        %s579 = sor.u32 256, 40
        %580 = vbcast.lane.b32.xlu0 %v558, %s579
        %v581 = vpop.permute.xlu0 %580
        %s583 = sor.u32 256, 48
        %584 = vbcast.lane.b32.xlu0 %v558, %s583
        %v585 = vpop.permute.xlu0 %584
        %s587 = sor.u32 256, 56
        %588 = vbcast.lane.b32.xlu0 %v558, %s587
        %v589 = vpop.permute.xlu0 %588
        %s591 = sor.u32 256, 64
        %592 = vbcast.lane.b32.xlu0 %v558, %s591
        %v593 = vpop.permute.xlu0 %592
        %s595 = sor.u32 256, 72
        %596 = vbcast.lane.b32.xlu0 %v558, %s595
        %v597 = vpop.permute.xlu0 %596
        %s599 = sor.u32 256, 80
        %600 = vbcast.lane.b32.xlu0 %v558, %s599
        %v601 = vpop.permute.xlu0 %600
        %s603 = sor.u32 256, 88
        %604 = vbcast.lane.b32.xlu0 %v558, %s603
        %v605 = vpop.permute.xlu0 %604
        %s607 = sor.u32 256, 96
        %608 = vbcast.lane.b32.xlu0 %v558, %s607
        %v609 = vpop.permute.xlu0 %608
        %s611 = sor.u32 256, 104
        %612 = vbcast.lane.b32.xlu0 %v558, %s611
        %v613 = vpop.permute.xlu0 %612
        %s615 = sor.u32 256, 112
        %616 = vbcast.lane.b32.xlu0 %v558, %s615
        %v617 = vpop.permute.xlu0 %616
        %s619 = sor.u32 256, 120
        %620 = vbcast.lane.b32.xlu0 %v558, %s619
        %v621 = vpop.permute.xlu0 %620
        %v622 = vlaneseq
        %v623 = vshrl.u32 %v622, 7
        %v624 = vsub.s32 3, %v623
        %v625 = vrot.slane %v348, %v624
        %627 = vbcast.lane.b32.xlu0 %v625, 256
        %v628 = vpop.permute.xlu0 %627
        %s630 = sor.u32 256, 8
        %631 = vbcast.lane.b32.xlu0 %v625, %s630
        %v632 = vpop.permute.xlu0 %631
        %s634 = sor.u32 256, 16
        %635 = vbcast.lane.b32.xlu0 %v625, %s634
        %v636 = vpop.permute.xlu0 %635
        %s638 = sor.u32 256, 24
        %639 = vbcast.lane.b32.xlu0 %v625, %s638
        %v640 = vpop.permute.xlu0 %639
        %s642 = sor.u32 256, 32
        %643 = vbcast.lane.b32.xlu0 %v625, %s642
        %v644 = vpop.permute.xlu0 %643
        %s646 = sor.u32 256, 40
        %647 = vbcast.lane.b32.xlu0 %v625, %s646
        %v648 = vpop.permute.xlu0 %647
        %s650 = sor.u32 256, 48
        %651 = vbcast.lane.b32.xlu0 %v625, %s650
        %v652 = vpop.permute.xlu0 %651
        %s654 = sor.u32 256, 56
        %655 = vbcast.lane.b32.xlu0 %v625, %s654
        %v656 = vpop.permute.xlu0 %655
        %s658 = sor.u32 256, 64
        %659 = vbcast.lane.b32.xlu0 %v625, %s658
        %v660 = vpop.permute.xlu0 %659
        %s662 = sor.u32 256, 72
        %663 = vbcast.lane.b32.xlu0 %v625, %s662
        %v664 = vpop.permute.xlu0 %663
        %s666 = sor.u32 256, 80
        %667 = vbcast.lane.b32.xlu0 %v625, %s666
        %v668 = vpop.permute.xlu0 %667
        %s670 = sor.u32 256, 88
        %671 = vbcast.lane.b32.xlu0 %v625, %s670
        %v672 = vpop.permute.xlu0 %671
        %s674 = sor.u32 256, 96
        %675 = vbcast.lane.b32.xlu0 %v625, %s674
        %v676 = vpop.permute.xlu0 %675
        %s678 = sor.u32 256, 104
        %679 = vbcast.lane.b32.xlu0 %v625, %s678
        %v680 = vpop.permute.xlu0 %679
        %s682 = sor.u32 256, 112
        %683 = vbcast.lane.b32.xlu0 %v625, %s682
        %v684 = vpop.permute.xlu0 %683
        %s686 = sor.u32 256, 120
        %687 = vbcast.lane.b32.xlu0 %v625, %s686
        %v688 = vpop.permute.xlu0 %687
        %v689 = vlaneseq
        %v690 = vshrl.u32 %v689, 7
        %v691 = vsub.s32 4, %v690
        %v692 = vrot.slane %v348, %v691
        %694 = vbcast.lane.b32.xlu0 %v692, 256
        %v695 = vpop.permute.xlu0 %694
        %s697 = sor.u32 256, 8
        %698 = vbcast.lane.b32.xlu0 %v692, %s697
        %v699 = vpop.permute.xlu0 %698
        %s701 = sor.u32 256, 16
        %702 = vbcast.lane.b32.xlu0 %v692, %s701
        %v703 = vpop.permute.xlu0 %702
        %s705 = sor.u32 256, 24
        %706 = vbcast.lane.b32.xlu0 %v692, %s705
        %v707 = vpop.permute.xlu0 %706
        %s709 = sor.u32 256, 32
        %710 = vbcast.lane.b32.xlu0 %v692, %s709
        %v711 = vpop.permute.xlu0 %710
        %s713 = sor.u32 256, 40
        %714 = vbcast.lane.b32.xlu0 %v692, %s713
        %v715 = vpop.permute.xlu0 %714
        %s717 = sor.u32 256, 48
        %718 = vbcast.lane.b32.xlu0 %v692, %s717
        %v719 = vpop.permute.xlu0 %718
        %s721 = sor.u32 256, 56
        %722 = vbcast.lane.b32.xlu0 %v692, %s721
        %v723 = vpop.permute.xlu0 %722
        %s725 = sor.u32 256, 64
        %726 = vbcast.lane.b32.xlu0 %v692, %s725
        %v727 = vpop.permute.xlu0 %726
        %s729 = sor.u32 256, 72
        %730 = vbcast.lane.b32.xlu0 %v692, %s729
        %v731 = vpop.permute.xlu0 %730
        %s733 = sor.u32 256, 80
        %734 = vbcast.lane.b32.xlu0 %v692, %s733
        %v735 = vpop.permute.xlu0 %734
        %s737 = sor.u32 256, 88
        %738 = vbcast.lane.b32.xlu0 %v692, %s737
        %v739 = vpop.permute.xlu0 %738
        %s741 = sor.u32 256, 96
        %742 = vbcast.lane.b32.xlu0 %v692, %s741
        %v743 = vpop.permute.xlu0 %742
        %s745 = sor.u32 256, 104
        %746 = vbcast.lane.b32.xlu0 %v692, %s745
        %v747 = vpop.permute.xlu0 %746
        %s749 = sor.u32 256, 112
        %750 = vbcast.lane.b32.xlu0 %v692, %s749
        %v751 = vpop.permute.xlu0 %750
        %s753 = sor.u32 256, 120
        %754 = vbcast.lane.b32.xlu0 %v692, %s753
        %v755 = vpop.permute.xlu0 %754
        %v756 = vlaneseq
        %v757 = vshrl.u32 %v756, 7
        %v758 = vsub.s32 5, %v757
        %v759 = vrot.slane %v348, %v758
        %761 = vbcast.lane.b32.xlu0 %v759, 256
        %v762 = vpop.permute.xlu0 %761
        %s764 = sor.u32 256, 8
        %765 = vbcast.lane.b32.xlu0 %v759, %s764
        %v766 = vpop.permute.xlu0 %765
        %s768 = sor.u32 256, 16
        %769 = vbcast.lane.b32.xlu0 %v759, %s768
        %v770 = vpop.permute.xlu0 %769
        %s772 = sor.u32 256, 24
        %773 = vbcast.lane.b32.xlu0 %v759, %s772
        %v774 = vpop.permute.xlu0 %773
        %s776 = sor.u32 256, 32
        %777 = vbcast.lane.b32.xlu0 %v759, %s776
        %v778 = vpop.permute.xlu0 %777
        %s780 = sor.u32 256, 40
        %781 = vbcast.lane.b32.xlu0 %v759, %s780
        %v782 = vpop.permute.xlu0 %781
        %s784 = sor.u32 256, 48
        %785 = vbcast.lane.b32.xlu0 %v759, %s784
        %v786 = vpop.permute.xlu0 %785
        %s788 = sor.u32 256, 56
        %789 = vbcast.lane.b32.xlu0 %v759, %s788
        %v790 = vpop.permute.xlu0 %789
        %s792 = sor.u32 256, 64
        %793 = vbcast.lane.b32.xlu0 %v759, %s792
        %v794 = vpop.permute.xlu0 %793
        %s796 = sor.u32 256, 72
        %797 = vbcast.lane.b32.xlu0 %v759, %s796
        %v798 = vpop.permute.xlu0 %797
        %s800 = sor.u32 256, 80
        %801 = vbcast.lane.b32.xlu0 %v759, %s800
        %v802 = vpop.permute.xlu0 %801
        %s804 = sor.u32 256, 88
        %805 = vbcast.lane.b32.xlu0 %v759, %s804
        %v806 = vpop.permute.xlu0 %805
        %s808 = sor.u32 256, 96
        %809 = vbcast.lane.b32.xlu0 %v759, %s808
        %v810 = vpop.permute.xlu0 %809
        %s812 = sor.u32 256, 104
        %813 = vbcast.lane.b32.xlu0 %v759, %s812
        %v814 = vpop.permute.xlu0 %813
        %s816 = sor.u32 256, 112
        %817 = vbcast.lane.b32.xlu0 %v759, %s816
        %v818 = vpop.permute.xlu0 %817
        %s820 = sor.u32 256, 120
        %821 = vbcast.lane.b32.xlu0 %v759, %s820
        %v822 = vpop.permute.xlu0 %821
        %v823 = vlaneseq
        %v824 = vshrl.u32 %v823, 7
        %v825 = vsub.s32 6, %v824
        %v826 = vrot.slane %v348, %v825
        %828 = vbcast.lane.b32.xlu0 %v826, 256
        %v829 = vpop.permute.xlu0 %828
        %s831 = sor.u32 256, 8
        %832 = vbcast.lane.b32.xlu0 %v826, %s831
        %v833 = vpop.permute.xlu0 %832
        %s835 = sor.u32 256, 16
        %836 = vbcast.lane.b32.xlu0 %v826, %s835
        %v837 = vpop.permute.xlu0 %836
        %s839 = sor.u32 256, 24
        %840 = vbcast.lane.b32.xlu0 %v826, %s839
        %v841 = vpop.permute.xlu0 %840
        %s843 = sor.u32 256, 32
        %844 = vbcast.lane.b32.xlu0 %v826, %s843
        %v845 = vpop.permute.xlu0 %844
        %s847 = sor.u32 256, 40
        %848 = vbcast.lane.b32.xlu0 %v826, %s847
        %v849 = vpop.permute.xlu0 %848
        %s851 = sor.u32 256, 48
        %852 = vbcast.lane.b32.xlu0 %v826, %s851
        %v853 = vpop.permute.xlu0 %852
        %s855 = sor.u32 256, 56
        %856 = vbcast.lane.b32.xlu0 %v826, %s855
        %v857 = vpop.permute.xlu0 %856
        %s859 = sor.u32 256, 64
        %860 = vbcast.lane.b32.xlu0 %v826, %s859
        %v861 = vpop.permute.xlu0 %860
        %s863 = sor.u32 256, 72
        %864 = vbcast.lane.b32.xlu0 %v826, %s863
        %v865 = vpop.permute.xlu0 %864
        %s867 = sor.u32 256, 80
        %868 = vbcast.lane.b32.xlu0 %v826, %s867
        %v869 = vpop.permute.xlu0 %868
        %s871 = sor.u32 256, 88
        %872 = vbcast.lane.b32.xlu0 %v826, %s871
        %v873 = vpop.permute.xlu0 %872
        %s875 = sor.u32 256, 96
        %876 = vbcast.lane.b32.xlu0 %v826, %s875
        %v877 = vpop.permute.xlu0 %876
        %s879 = sor.u32 256, 104
        %880 = vbcast.lane.b32.xlu0 %v826, %s879
        %v881 = vpop.permute.xlu0 %880
        %s883 = sor.u32 256, 112
        %884 = vbcast.lane.b32.xlu0 %v826, %s883
        %v885 = vpop.permute.xlu0 %884
        %s887 = sor.u32 256, 120
        %888 = vbcast.lane.b32.xlu0 %v826, %s887
        %v889 = vpop.permute.xlu0 %888
        %v890 = vlaneseq
        %v891 = vshrl.u32 %v890, 7
        %v892 = vsub.s32 7, %v891
        %v893 = vrot.slane %v348, %v892
        %895 = vbcast.lane.b32.xlu0 %v893, 256
        %v896 = vpop.permute.xlu0 %895
        %s898 = sor.u32 256, 8
        %899 = vbcast.lane.b32.xlu0 %v893, %s898
        %v900 = vpop.permute.xlu0 %899
        %s902 = sor.u32 256, 16
        %903 = vbcast.lane.b32.xlu0 %v893, %s902
        %v904 = vpop.permute.xlu0 %903
        %s906 = sor.u32 256, 24
        %907 = vbcast.lane.b32.xlu0 %v893, %s906
        %v908 = vpop.permute.xlu0 %907
        %s910 = sor.u32 256, 32
        %911 = vbcast.lane.b32.xlu0 %v893, %s910
        %v912 = vpop.permute.xlu0 %911
        %s914 = sor.u32 256, 40
        %915 = vbcast.lane.b32.xlu0 %v893, %s914
        %v916 = vpop.permute.xlu0 %915
        %s918 = sor.u32 256, 48
        %919 = vbcast.lane.b32.xlu0 %v893, %s918
        %v920 = vpop.permute.xlu0 %919
        %s922 = sor.u32 256, 56
        %923 = vbcast.lane.b32.xlu0 %v893, %s922
        %v924 = vpop.permute.xlu0 %923
        %s926 = sor.u32 256, 64
        %927 = vbcast.lane.b32.xlu0 %v893, %s926
        %v928 = vpop.permute.xlu0 %927
        %s930 = sor.u32 256, 72
        %931 = vbcast.lane.b32.xlu0 %v893, %s930
        %v932 = vpop.permute.xlu0 %931
        %s934 = sor.u32 256, 80
        %935 = vbcast.lane.b32.xlu0 %v893, %s934
        %v936 = vpop.permute.xlu0 %935
        %s938 = sor.u32 256, 88
        %939 = vbcast.lane.b32.xlu0 %v893, %s938
        %v940 = vpop.permute.xlu0 %939
        %s942 = sor.u32 256, 96
        %943 = vbcast.lane.b32.xlu0 %v893, %s942
        %v944 = vpop.permute.xlu0 %943
        %s946 = sor.u32 256, 104
        %947 = vbcast.lane.b32.xlu0 %v893, %s946
        %v948 = vpop.permute.xlu0 %947
        %s950 = sor.u32 256, 112
        %951 = vbcast.lane.b32.xlu0 %v893, %s950
        %v952 = vpop.permute.xlu0 %951
        %s954 = sor.u32 256, 120
        %955 = vbcast.lane.b32.xlu0 %v893, %s954
        %v956 = vpop.permute.xlu0 %955
        %vm957 = vcmp.eq.s32.totalorder %v427, %v340
        %vm958 = vcmp.eq.s32.totalorder %v427, %v418
        %vm959 = vcmp.eq.s32.totalorder %v427, %v419
        %vm960 = vcmp.eq.s32.totalorder %v427, %v420
        %vm961 = vcmp.eq.s32.totalorder %v431, %v340
        %vm962 = vcmp.eq.s32.totalorder %v431, %v418
        %vm963 = vcmp.eq.s32.totalorder %v431, %v419
        %vm964 = vcmp.eq.s32.totalorder %v431, %v420
        %vm965 = vcmp.eq.s32.totalorder %v435, %v340
        %vm966 = vcmp.eq.s32.totalorder %v435, %v418
        %vm967 = vcmp.eq.s32.totalorder %v435, %v419
        %vm968 = vcmp.eq.s32.totalorder %v435, %v420
        %vm969 = vcmp.eq.s32.totalorder %v439, %v340
        %vm970 = vcmp.eq.s32.totalorder %v439, %v418
        %vm971 = vcmp.eq.s32.totalorder %v439, %v419
        %vm972 = vcmp.eq.s32.totalorder %v439, %v420
        %vm973 = vcmp.eq.s32.totalorder %v443, %v340
        %vm974 = vcmp.eq.s32.totalorder %v443, %v418
        %vm975 = vcmp.eq.s32.totalorder %v443, %v419
        %vm976 = vcmp.eq.s32.totalorder %v443, %v420
        %vm977 = vcmp.eq.s32.totalorder %v447, %v340
        %vm978 = vcmp.eq.s32.totalorder %v447, %v418
        %vm979 = vcmp.eq.s32.totalorder %v447, %v419
        %vm980 = vcmp.eq.s32.totalorder %v447, %v420
        %vm981 = vcmp.eq.s32.totalorder %v451, %v340
        %vm982 = vcmp.eq.s32.totalorder %v451, %v418
        %vm983 = vcmp.eq.s32.totalorder %v451, %v419
        %vm984 = vcmp.eq.s32.totalorder %v451, %v420
        %vm985 = vcmp.eq.s32.totalorder %v455, %v340
        %vm986 = vcmp.eq.s32.totalorder %v455, %v418
        %vm987 = vcmp.eq.s32.totalorder %v455, %v419
        %vm988 = vcmp.eq.s32.totalorder %v455, %v420
        %vm989 = vcmp.eq.s32.totalorder %v459, %v340
        %vm990 = vcmp.eq.s32.totalorder %v459, %v418
        %vm991 = vcmp.eq.s32.totalorder %v459, %v419
        %vm992 = vcmp.eq.s32.totalorder %v459, %v420
        %vm993 = vcmp.eq.s32.totalorder %v463, %v340
        %vm994 = vcmp.eq.s32.totalorder %v463, %v418
        %vm995 = vcmp.eq.s32.totalorder %v463, %v419
        %vm996 = vcmp.eq.s32.totalorder %v463, %v420
        %vm997 = vcmp.eq.s32.totalorder %v467, %v340
        %vm998 = vcmp.eq.s32.totalorder %v467, %v418
        %vm999 = vcmp.eq.s32.totalorder %v467, %v419
        %vm1000 = vcmp.eq.s32.totalorder %v467, %v420
        %vm1001 = vcmp.eq.s32.totalorder %v471, %v340
        %vm1002 = vcmp.eq.s32.totalorder %v471, %v418
        %vm1003 = vcmp.eq.s32.totalorder %v471, %v419
        %vm1004 = vcmp.eq.s32.totalorder %v471, %v420
        %vm1005 = vcmp.eq.s32.totalorder %v475, %v340
        %vm1006 = vcmp.eq.s32.totalorder %v475, %v418
        %vm1007 = vcmp.eq.s32.totalorder %v475, %v419
        %vm1008 = vcmp.eq.s32.totalorder %v475, %v420
        %vm1009 = vcmp.eq.s32.totalorder %v479, %v340
        %vm1010 = vcmp.eq.s32.totalorder %v479, %v418
        %vm1011 = vcmp.eq.s32.totalorder %v479, %v419
        %vm1012 = vcmp.eq.s32.totalorder %v479, %v420
        %vm1013 = vcmp.eq.s32.totalorder %v483, %v340
        %vm1014 = vcmp.eq.s32.totalorder %v483, %v418
        %vm1015 = vcmp.eq.s32.totalorder %v483, %v419
        %vm1016 = vcmp.eq.s32.totalorder %v483, %v420
        %vm1017 = vcmp.eq.s32.totalorder %v487, %v340
        %vm1018 = vcmp.eq.s32.totalorder %v487, %v418
        %vm1019 = vcmp.eq.s32.totalorder %v487, %v419
        %vm1020 = vcmp.eq.s32.totalorder %v487, %v420
        %vm1021 = vcmp.eq.s32.totalorder %v494, %v340
        %vm1022 = vcmp.eq.s32.totalorder %v494, %v418
        %vm1023 = vcmp.eq.s32.totalorder %v494, %v419
        %vm1024 = vcmp.eq.s32.totalorder %v494, %v420
        %vm1025 = vcmp.eq.s32.totalorder %v498, %v340
        %vm1026 = vcmp.eq.s32.totalorder %v498, %v418
        %vm1027 = vcmp.eq.s32.totalorder %v498, %v419
        %vm1028 = vcmp.eq.s32.totalorder %v498, %v420
        %vm1029 = vcmp.eq.s32.totalorder %v502, %v340
        %vm1030 = vcmp.eq.s32.totalorder %v502, %v418
        %vm1031 = vcmp.eq.s32.totalorder %v502, %v419
        %vm1032 = vcmp.eq.s32.totalorder %v502, %v420
        %vm1033 = vcmp.eq.s32.totalorder %v506, %v340
        %vm1034 = vcmp.eq.s32.totalorder %v506, %v418
        %vm1035 = vcmp.eq.s32.totalorder %v506, %v419
        %vm1036 = vcmp.eq.s32.totalorder %v506, %v420
        %vm1037 = vcmp.eq.s32.totalorder %v510, %v340
        %vm1038 = vcmp.eq.s32.totalorder %v510, %v418
        %vm1039 = vcmp.eq.s32.totalorder %v510, %v419
        %vm1040 = vcmp.eq.s32.totalorder %v510, %v420
        %vm1041 = vcmp.eq.s32.totalorder %v514, %v340
        %vm1042 = vcmp.eq.s32.totalorder %v514, %v418
        %vm1043 = vcmp.eq.s32.totalorder %v514, %v419
        %vm1044 = vcmp.eq.s32.totalorder %v514, %v420
        %vm1045 = vcmp.eq.s32.totalorder %v518, %v340
        %vm1046 = vcmp.eq.s32.totalorder %v518, %v418
        %vm1047 = vcmp.eq.s32.totalorder %v518, %v419
        %vm1048 = vcmp.eq.s32.totalorder %v518, %v420
        %vm1049 = vcmp.eq.s32.totalorder %v522, %v340
        %vm1050 = vcmp.eq.s32.totalorder %v522, %v418
        %vm1051 = vcmp.eq.s32.totalorder %v522, %v419
        %vm1052 = vcmp.eq.s32.totalorder %v522, %v420
        %vm1053 = vcmp.eq.s32.totalorder %v526, %v340
        %vm1054 = vcmp.eq.s32.totalorder %v526, %v418
        %vm1055 = vcmp.eq.s32.totalorder %v526, %v419
        %vm1056 = vcmp.eq.s32.totalorder %v526, %v420
        %vm1057 = vcmp.eq.s32.totalorder %v530, %v340
        %vm1058 = vcmp.eq.s32.totalorder %v530, %v418
        %vm1059 = vcmp.eq.s32.totalorder %v530, %v419
        %vm1060 = vcmp.eq.s32.totalorder %v530, %v420
        %vm1061 = vcmp.eq.s32.totalorder %v534, %v340
        %vm1062 = vcmp.eq.s32.totalorder %v534, %v418
        %vm1063 = vcmp.eq.s32.totalorder %v534, %v419
        %vm1064 = vcmp.eq.s32.totalorder %v534, %v420
        %vm1065 = vcmp.eq.s32.totalorder %v538, %v340
        %vm1066 = vcmp.eq.s32.totalorder %v538, %v418
        %vm1067 = vcmp.eq.s32.totalorder %v538, %v419
        %vm1068 = vcmp.eq.s32.totalorder %v538, %v420
        %vm1069 = vcmp.eq.s32.totalorder %v542, %v340
        %vm1070 = vcmp.eq.s32.totalorder %v542, %v418
        %vm1071 = vcmp.eq.s32.totalorder %v542, %v419
        %vm1072 = vcmp.eq.s32.totalorder %v542, %v420
        %vm1073 = vcmp.eq.s32.totalorder %v546, %v340
        %vm1074 = vcmp.eq.s32.totalorder %v546, %v418
        %vm1075 = vcmp.eq.s32.totalorder %v546, %v419
        %vm1076 = vcmp.eq.s32.totalorder %v546, %v420
        %vm1077 = vcmp.eq.s32.totalorder %v550, %v340
        %vm1078 = vcmp.eq.s32.totalorder %v550, %v418
        %vm1079 = vcmp.eq.s32.totalorder %v550, %v419
        %vm1080 = vcmp.eq.s32.totalorder %v550, %v420
        %vm1081 = vcmp.eq.s32.totalorder %v554, %v340
        %vm1082 = vcmp.eq.s32.totalorder %v554, %v418
        %vm1083 = vcmp.eq.s32.totalorder %v554, %v419
        %vm1084 = vcmp.eq.s32.totalorder %v554, %v420
        %vm1085 = vcmp.eq.s32.totalorder %v561, %v340
        %vm1086 = vcmp.eq.s32.totalorder %v561, %v418
        %vm1087 = vcmp.eq.s32.totalorder %v561, %v419
        %vm1088 = vcmp.eq.s32.totalorder %v561, %v420
        %vm1089 = vcmp.eq.s32.totalorder %v565, %v340
        %vm1090 = vcmp.eq.s32.totalorder %v565, %v418
        %vm1091 = vcmp.eq.s32.totalorder %v565, %v419
        %vm1092 = vcmp.eq.s32.totalorder %v565, %v420
        %vm1093 = vcmp.eq.s32.totalorder %v569, %v340
        %vm1094 = vcmp.eq.s32.totalorder %v569, %v418
        %vm1095 = vcmp.eq.s32.totalorder %v569, %v419
        %vm1096 = vcmp.eq.s32.totalorder %v569, %v420
        %vm1097 = vcmp.eq.s32.totalorder %v573, %v340
        %vm1098 = vcmp.eq.s32.totalorder %v573, %v418
        %vm1099 = vcmp.eq.s32.totalorder %v573, %v419
        %vm1100 = vcmp.eq.s32.totalorder %v573, %v420
        %vm1101 = vcmp.eq.s32.totalorder %v577, %v340
        %vm1102 = vcmp.eq.s32.totalorder %v577, %v418
        %vm1103 = vcmp.eq.s32.totalorder %v577, %v419
        %vm1104 = vcmp.eq.s32.totalorder %v577, %v420
        %vm1105 = vcmp.eq.s32.totalorder %v581, %v340
        %vm1106 = vcmp.eq.s32.totalorder %v581, %v418
        %vm1107 = vcmp.eq.s32.totalorder %v581, %v419
        %vm1108 = vcmp.eq.s32.totalorder %v581, %v420
        %vm1109 = vcmp.eq.s32.totalorder %v585, %v340
        %vm1110 = vcmp.eq.s32.totalorder %v585, %v418
        %vm1111 = vcmp.eq.s32.totalorder %v585, %v419
        %vm1112 = vcmp.eq.s32.totalorder %v585, %v420
        %vm1113 = vcmp.eq.s32.totalorder %v589, %v340
        %vm1114 = vcmp.eq.s32.totalorder %v589, %v418
        %vm1115 = vcmp.eq.s32.totalorder %v589, %v419
        %vm1116 = vcmp.eq.s32.totalorder %v589, %v420
        %vm1117 = vcmp.eq.s32.totalorder %v593, %v340
        %vm1118 = vcmp.eq.s32.totalorder %v593, %v418
        %vm1119 = vcmp.eq.s32.totalorder %v593, %v419
        %vm1120 = vcmp.eq.s32.totalorder %v593, %v420
        %vm1121 = vcmp.eq.s32.totalorder %v597, %v340
        %vm1122 = vcmp.eq.s32.totalorder %v597, %v418
        %vm1123 = vcmp.eq.s32.totalorder %v597, %v419
        %vm1124 = vcmp.eq.s32.totalorder %v597, %v420
        %vm1125 = vcmp.eq.s32.totalorder %v601, %v340
        %vm1126 = vcmp.eq.s32.totalorder %v601, %v418
        %vm1127 = vcmp.eq.s32.totalorder %v601, %v419
        %vm1128 = vcmp.eq.s32.totalorder %v601, %v420
        %vm1129 = vcmp.eq.s32.totalorder %v605, %v340
        %vm1130 = vcmp.eq.s32.totalorder %v605, %v418
        %vm1131 = vcmp.eq.s32.totalorder %v605, %v419
        %vm1132 = vcmp.eq.s32.totalorder %v605, %v420
        %vm1133 = vcmp.eq.s32.totalorder %v609, %v340
        %vm1134 = vcmp.eq.s32.totalorder %v609, %v418
        %vm1135 = vcmp.eq.s32.totalorder %v609, %v419
        %vm1136 = vcmp.eq.s32.totalorder %v609, %v420
        %vm1137 = vcmp.eq.s32.totalorder %v613, %v340
        %vm1138 = vcmp.eq.s32.totalorder %v613, %v418
        %vm1139 = vcmp.eq.s32.totalorder %v613, %v419
        %vm1140 = vcmp.eq.s32.totalorder %v613, %v420
        %vm1141 = vcmp.eq.s32.totalorder %v617, %v340
        %vm1142 = vcmp.eq.s32.totalorder %v617, %v418
        %vm1143 = vcmp.eq.s32.totalorder %v617, %v419
        %vm1144 = vcmp.eq.s32.totalorder %v617, %v420
        %vm1145 = vcmp.eq.s32.totalorder %v621, %v340
        %vm1146 = vcmp.eq.s32.totalorder %v621, %v418
        %vm1147 = vcmp.eq.s32.totalorder %v621, %v419
        %vm1148 = vcmp.eq.s32.totalorder %v621, %v420
        %vm1149 = vcmp.eq.s32.totalorder %v628, %v340
        %vm1150 = vcmp.eq.s32.totalorder %v628, %v418
        %vm1151 = vcmp.eq.s32.totalorder %v628, %v419
        %vm1152 = vcmp.eq.s32.totalorder %v628, %v420
        %vm1153 = vcmp.eq.s32.totalorder %v632, %v340
        %vm1154 = vcmp.eq.s32.totalorder %v632, %v418
        %vm1155 = vcmp.eq.s32.totalorder %v632, %v419
        %vm1156 = vcmp.eq.s32.totalorder %v632, %v420
        %vm1157 = vcmp.eq.s32.totalorder %v636, %v340
        %vm1158 = vcmp.eq.s32.totalorder %v636, %v418
        %vm1159 = vcmp.eq.s32.totalorder %v636, %v419
        %vm1160 = vcmp.eq.s32.totalorder %v636, %v420
        %vm1161 = vcmp.eq.s32.totalorder %v640, %v340
        %vm1162 = vcmp.eq.s32.totalorder %v640, %v418
        %vm1163 = vcmp.eq.s32.totalorder %v640, %v419
        %vm1164 = vcmp.eq.s32.totalorder %v640, %v420
        %vm1165 = vcmp.eq.s32.totalorder %v644, %v340
        %vm1166 = vcmp.eq.s32.totalorder %v644, %v418
        %vm1167 = vcmp.eq.s32.totalorder %v644, %v419
        %vm1168 = vcmp.eq.s32.totalorder %v644, %v420
        %vm1169 = vcmp.eq.s32.totalorder %v648, %v340
        %vm1170 = vcmp.eq.s32.totalorder %v648, %v418
        %vm1171 = vcmp.eq.s32.totalorder %v648, %v419
        %vm1172 = vcmp.eq.s32.totalorder %v648, %v420
        %vm1173 = vcmp.eq.s32.totalorder %v652, %v340
        %vm1174 = vcmp.eq.s32.totalorder %v652, %v418
        %vm1175 = vcmp.eq.s32.totalorder %v652, %v419
        %vm1176 = vcmp.eq.s32.totalorder %v652, %v420
        %vm1177 = vcmp.eq.s32.totalorder %v656, %v340
        %vm1178 = vcmp.eq.s32.totalorder %v656, %v418
        %vm1179 = vcmp.eq.s32.totalorder %v656, %v419
        %vm1180 = vcmp.eq.s32.totalorder %v656, %v420
        %vm1181 = vcmp.eq.s32.totalorder %v660, %v340
        %vm1182 = vcmp.eq.s32.totalorder %v660, %v418
        %vm1183 = vcmp.eq.s32.totalorder %v660, %v419
        %vm1184 = vcmp.eq.s32.totalorder %v660, %v420
        %vm1185 = vcmp.eq.s32.totalorder %v664, %v340
        %vm1186 = vcmp.eq.s32.totalorder %v664, %v418
        %vm1187 = vcmp.eq.s32.totalorder %v664, %v419
        %vm1188 = vcmp.eq.s32.totalorder %v664, %v420
        %vm1189 = vcmp.eq.s32.totalorder %v668, %v340
        %vm1190 = vcmp.eq.s32.totalorder %v668, %v418
        %vm1191 = vcmp.eq.s32.totalorder %v668, %v419
        %vm1192 = vcmp.eq.s32.totalorder %v668, %v420
        %vm1193 = vcmp.eq.s32.totalorder %v672, %v340
        %vm1194 = vcmp.eq.s32.totalorder %v672, %v418
        %vm1195 = vcmp.eq.s32.totalorder %v672, %v419
        %vm1196 = vcmp.eq.s32.totalorder %v672, %v420
        %vm1197 = vcmp.eq.s32.totalorder %v676, %v340
        %vm1198 = vcmp.eq.s32.totalorder %v676, %v418
        %vm1199 = vcmp.eq.s32.totalorder %v676, %v419
        %vm1200 = vcmp.eq.s32.totalorder %v676, %v420
        %vm1201 = vcmp.eq.s32.totalorder %v680, %v340
        %vm1202 = vcmp.eq.s32.totalorder %v680, %v418
        %vm1203 = vcmp.eq.s32.totalorder %v680, %v419
        %vm1204 = vcmp.eq.s32.totalorder %v680, %v420
        %vm1205 = vcmp.eq.s32.totalorder %v684, %v340
        %vm1206 = vcmp.eq.s32.totalorder %v684, %v418
        %vm1207 = vcmp.eq.s32.totalorder %v684, %v419
        %vm1208 = vcmp.eq.s32.totalorder %v684, %v420
        %vm1209 = vcmp.eq.s32.totalorder %v688, %v340
        %vm1210 = vcmp.eq.s32.totalorder %v688, %v418
        %vm1211 = vcmp.eq.s32.totalorder %v688, %v419
        %vm1212 = vcmp.eq.s32.totalorder %v688, %v420
        %vm1213 = vcmp.eq.s32.totalorder %v695, %v340
        %vm1214 = vcmp.eq.s32.totalorder %v695, %v418
        %vm1215 = vcmp.eq.s32.totalorder %v695, %v419
        %vm1216 = vcmp.eq.s32.totalorder %v695, %v420
        %vm1217 = vcmp.eq.s32.totalorder %v699, %v340
        %vm1218 = vcmp.eq.s32.totalorder %v699, %v418
        %vm1219 = vcmp.eq.s32.totalorder %v699, %v419
        %vm1220 = vcmp.eq.s32.totalorder %v699, %v420
        %vm1221 = vcmp.eq.s32.totalorder %v703, %v340
        %vm1222 = vcmp.eq.s32.totalorder %v703, %v418
        %vm1223 = vcmp.eq.s32.totalorder %v703, %v419
        %vm1224 = vcmp.eq.s32.totalorder %v703, %v420
        %vm1225 = vcmp.eq.s32.totalorder %v707, %v340
        %vm1226 = vcmp.eq.s32.totalorder %v707, %v418
        %vm1227 = vcmp.eq.s32.totalorder %v707, %v419
        %vm1228 = vcmp.eq.s32.totalorder %v707, %v420
        %vm1229 = vcmp.eq.s32.totalorder %v711, %v340
        %vm1230 = vcmp.eq.s32.totalorder %v711, %v418
        %vm1231 = vcmp.eq.s32.totalorder %v711, %v419
        %vm1232 = vcmp.eq.s32.totalorder %v711, %v420
        %vm1233 = vcmp.eq.s32.totalorder %v715, %v340
        %vm1234 = vcmp.eq.s32.totalorder %v715, %v418
        %vm1235 = vcmp.eq.s32.totalorder %v715, %v419
        %vm1236 = vcmp.eq.s32.totalorder %v715, %v420
        %vm1237 = vcmp.eq.s32.totalorder %v719, %v340
        %vm1238 = vcmp.eq.s32.totalorder %v719, %v418
        %vm1239 = vcmp.eq.s32.totalorder %v719, %v419
        %vm1240 = vcmp.eq.s32.totalorder %v719, %v420
        %vm1241 = vcmp.eq.s32.totalorder %v723, %v340
        %vm1242 = vcmp.eq.s32.totalorder %v723, %v418
        %vm1243 = vcmp.eq.s32.totalorder %v723, %v419
        %vm1244 = vcmp.eq.s32.totalorder %v723, %v420
        %vm1245 = vcmp.eq.s32.totalorder %v727, %v340
        %vm1246 = vcmp.eq.s32.totalorder %v727, %v418
        %vm1247 = vcmp.eq.s32.totalorder %v727, %v419
        %vm1248 = vcmp.eq.s32.totalorder %v727, %v420
        %vm1249 = vcmp.eq.s32.totalorder %v731, %v340
        %vm1250 = vcmp.eq.s32.totalorder %v731, %v418
        %vm1251 = vcmp.eq.s32.totalorder %v731, %v419
        %vm1252 = vcmp.eq.s32.totalorder %v731, %v420
        %vm1253 = vcmp.eq.s32.totalorder %v735, %v340
        %vm1254 = vcmp.eq.s32.totalorder %v735, %v418
        %vm1255 = vcmp.eq.s32.totalorder %v735, %v419
        %vm1256 = vcmp.eq.s32.totalorder %v735, %v420
        %vm1257 = vcmp.eq.s32.totalorder %v739, %v340
        %vm1258 = vcmp.eq.s32.totalorder %v739, %v418
        %vm1259 = vcmp.eq.s32.totalorder %v739, %v419
        %vm1260 = vcmp.eq.s32.totalorder %v739, %v420
        %vm1261 = vcmp.eq.s32.totalorder %v743, %v340
        %vm1262 = vcmp.eq.s32.totalorder %v743, %v418
        %vm1263 = vcmp.eq.s32.totalorder %v743, %v419
        %vm1264 = vcmp.eq.s32.totalorder %v743, %v420
        %vm1265 = vcmp.eq.s32.totalorder %v747, %v340
        %vm1266 = vcmp.eq.s32.totalorder %v747, %v418
        %vm1267 = vcmp.eq.s32.totalorder %v747, %v419
        %vm1268 = vcmp.eq.s32.totalorder %v747, %v420
        %vm1269 = vcmp.eq.s32.totalorder %v751, %v340
        %vm1270 = vcmp.eq.s32.totalorder %v751, %v418
        %vm1271 = vcmp.eq.s32.totalorder %v751, %v419
        %vm1272 = vcmp.eq.s32.totalorder %v751, %v420
        %vm1273 = vcmp.eq.s32.totalorder %v755, %v340
        %vm1274 = vcmp.eq.s32.totalorder %v755, %v418
        %vm1275 = vcmp.eq.s32.totalorder %v755, %v419
        %vm1276 = vcmp.eq.s32.totalorder %v755, %v420
        %vm1277 = vcmp.eq.s32.totalorder %v762, %v340
        %vm1278 = vcmp.eq.s32.totalorder %v762, %v418
        %vm1279 = vcmp.eq.s32.totalorder %v762, %v419
        %vm1280 = vcmp.eq.s32.totalorder %v762, %v420
        %vm1281 = vcmp.eq.s32.totalorder %v766, %v340
        %vm1282 = vcmp.eq.s32.totalorder %v766, %v418
        %vm1283 = vcmp.eq.s32.totalorder %v766, %v419
        %vm1284 = vcmp.eq.s32.totalorder %v766, %v420
        %vm1285 = vcmp.eq.s32.totalorder %v770, %v340
        %vm1286 = vcmp.eq.s32.totalorder %v770, %v418
        %vm1287 = vcmp.eq.s32.totalorder %v770, %v419
        %vm1288 = vcmp.eq.s32.totalorder %v770, %v420
        %vm1289 = vcmp.eq.s32.totalorder %v774, %v340
        %vm1290 = vcmp.eq.s32.totalorder %v774, %v418
        %vm1291 = vcmp.eq.s32.totalorder %v774, %v419
        %vm1292 = vcmp.eq.s32.totalorder %v774, %v420
        %vm1293 = vcmp.eq.s32.totalorder %v778, %v340
        %vm1294 = vcmp.eq.s32.totalorder %v778, %v418
        %vm1295 = vcmp.eq.s32.totalorder %v778, %v419
        %vm1296 = vcmp.eq.s32.totalorder %v778, %v420
        %vm1297 = vcmp.eq.s32.totalorder %v782, %v340
        %vm1298 = vcmp.eq.s32.totalorder %v782, %v418
        %vm1299 = vcmp.eq.s32.totalorder %v782, %v419
        %vm1300 = vcmp.eq.s32.totalorder %v782, %v420
        %vm1301 = vcmp.eq.s32.totalorder %v786, %v340
        %vm1302 = vcmp.eq.s32.totalorder %v786, %v418
        %vm1303 = vcmp.eq.s32.totalorder %v786, %v419
        %vm1304 = vcmp.eq.s32.totalorder %v786, %v420
        %vm1305 = vcmp.eq.s32.totalorder %v790, %v340
        %vm1306 = vcmp.eq.s32.totalorder %v790, %v418
        %vm1307 = vcmp.eq.s32.totalorder %v790, %v419
        %vm1308 = vcmp.eq.s32.totalorder %v790, %v420
        %vm1309 = vcmp.eq.s32.totalorder %v794, %v340
        %vm1310 = vcmp.eq.s32.totalorder %v794, %v418
        %vm1311 = vcmp.eq.s32.totalorder %v794, %v419
        %vm1312 = vcmp.eq.s32.totalorder %v794, %v420
        %vm1313 = vcmp.eq.s32.totalorder %v798, %v340
        %vm1314 = vcmp.eq.s32.totalorder %v798, %v418
        %vm1315 = vcmp.eq.s32.totalorder %v798, %v419
        %vm1316 = vcmp.eq.s32.totalorder %v798, %v420
        %vm1317 = vcmp.eq.s32.totalorder %v802, %v340
        %vm1318 = vcmp.eq.s32.totalorder %v802, %v418
        %vm1319 = vcmp.eq.s32.totalorder %v802, %v419
        %vm1320 = vcmp.eq.s32.totalorder %v802, %v420
        %vm1321 = vcmp.eq.s32.totalorder %v806, %v340
        %vm1322 = vcmp.eq.s32.totalorder %v806, %v418
        %vm1323 = vcmp.eq.s32.totalorder %v806, %v419
        %vm1324 = vcmp.eq.s32.totalorder %v806, %v420
        %vm1325 = vcmp.eq.s32.totalorder %v810, %v340
        %vm1326 = vcmp.eq.s32.totalorder %v810, %v418
        %vm1327 = vcmp.eq.s32.totalorder %v810, %v419
        %vm1328 = vcmp.eq.s32.totalorder %v810, %v420
        %vm1329 = vcmp.eq.s32.totalorder %v814, %v340
        %vm1330 = vcmp.eq.s32.totalorder %v814, %v418
        %vm1331 = vcmp.eq.s32.totalorder %v814, %v419
        %vm1332 = vcmp.eq.s32.totalorder %v814, %v420
        %vm1333 = vcmp.eq.s32.totalorder %v818, %v340
        %vm1334 = vcmp.eq.s32.totalorder %v818, %v418
        %vm1335 = vcmp.eq.s32.totalorder %v818, %v419
        %vm1336 = vcmp.eq.s32.totalorder %v818, %v420
        %vm1337 = vcmp.eq.s32.totalorder %v822, %v340
        %vm1338 = vcmp.eq.s32.totalorder %v822, %v418
        %vm1339 = vcmp.eq.s32.totalorder %v822, %v419
        %vm1340 = vcmp.eq.s32.totalorder %v822, %v420
        %vm1341 = vcmp.eq.s32.totalorder %v829, %v340
        %vm1342 = vcmp.eq.s32.totalorder %v829, %v418
        %vm1343 = vcmp.eq.s32.totalorder %v829, %v419
        %vm1344 = vcmp.eq.s32.totalorder %v829, %v420
        %vm1345 = vcmp.eq.s32.totalorder %v833, %v340
        %vm1346 = vcmp.eq.s32.totalorder %v833, %v418
        %vm1347 = vcmp.eq.s32.totalorder %v833, %v419
        %vm1348 = vcmp.eq.s32.totalorder %v833, %v420
        %vm1349 = vcmp.eq.s32.totalorder %v837, %v340
        %vm1350 = vcmp.eq.s32.totalorder %v837, %v418
        %vm1351 = vcmp.eq.s32.totalorder %v837, %v419
        %vm1352 = vcmp.eq.s32.totalorder %v837, %v420
        %vm1353 = vcmp.eq.s32.totalorder %v841, %v340
        %vm1354 = vcmp.eq.s32.totalorder %v841, %v418
        %vm1355 = vcmp.eq.s32.totalorder %v841, %v419
        %vm1356 = vcmp.eq.s32.totalorder %v841, %v420
        %vm1357 = vcmp.eq.s32.totalorder %v845, %v340
        %vm1358 = vcmp.eq.s32.totalorder %v845, %v418
        %vm1359 = vcmp.eq.s32.totalorder %v845, %v419
        %vm1360 = vcmp.eq.s32.totalorder %v845, %v420
        %vm1361 = vcmp.eq.s32.totalorder %v849, %v340
        %vm1362 = vcmp.eq.s32.totalorder %v849, %v418
        %vm1363 = vcmp.eq.s32.totalorder %v849, %v419
        %vm1364 = vcmp.eq.s32.totalorder %v849, %v420
        %vm1365 = vcmp.eq.s32.totalorder %v853, %v340
        %vm1366 = vcmp.eq.s32.totalorder %v853, %v418
        %vm1367 = vcmp.eq.s32.totalorder %v853, %v419
        %vm1368 = vcmp.eq.s32.totalorder %v853, %v420
        %vm1369 = vcmp.eq.s32.totalorder %v857, %v340
        %vm1370 = vcmp.eq.s32.totalorder %v857, %v418
        %vm1371 = vcmp.eq.s32.totalorder %v857, %v419
        %vm1372 = vcmp.eq.s32.totalorder %v857, %v420
        %vm1373 = vcmp.eq.s32.totalorder %v861, %v340
        %vm1374 = vcmp.eq.s32.totalorder %v861, %v418
        %vm1375 = vcmp.eq.s32.totalorder %v861, %v419
        %vm1376 = vcmp.eq.s32.totalorder %v861, %v420
        %vm1377 = vcmp.eq.s32.totalorder %v865, %v340
        %vm1378 = vcmp.eq.s32.totalorder %v865, %v418
        %vm1379 = vcmp.eq.s32.totalorder %v865, %v419
        %vm1380 = vcmp.eq.s32.totalorder %v865, %v420
        %vm1381 = vcmp.eq.s32.totalorder %v869, %v340
        %vm1382 = vcmp.eq.s32.totalorder %v869, %v418
        %vm1383 = vcmp.eq.s32.totalorder %v869, %v419
        %vm1384 = vcmp.eq.s32.totalorder %v869, %v420
        %vm1385 = vcmp.eq.s32.totalorder %v873, %v340
        %vm1386 = vcmp.eq.s32.totalorder %v873, %v418
        %vm1387 = vcmp.eq.s32.totalorder %v873, %v419
        %vm1388 = vcmp.eq.s32.totalorder %v873, %v420
        %vm1389 = vcmp.eq.s32.totalorder %v877, %v340
        %vm1390 = vcmp.eq.s32.totalorder %v877, %v418
        %vm1391 = vcmp.eq.s32.totalorder %v877, %v419
        %vm1392 = vcmp.eq.s32.totalorder %v877, %v420
        %vm1393 = vcmp.eq.s32.totalorder %v881, %v340
        %vm1394 = vcmp.eq.s32.totalorder %v881, %v418
        %vm1395 = vcmp.eq.s32.totalorder %v881, %v419
        %vm1396 = vcmp.eq.s32.totalorder %v881, %v420
        %vm1397 = vcmp.eq.s32.totalorder %v885, %v340
        %vm1398 = vcmp.eq.s32.totalorder %v885, %v418
        %vm1399 = vcmp.eq.s32.totalorder %v885, %v419
        %vm1400 = vcmp.eq.s32.totalorder %v885, %v420
        %vm1401 = vcmp.eq.s32.totalorder %v889, %v340
        %vm1402 = vcmp.eq.s32.totalorder %v889, %v418
        %vm1403 = vcmp.eq.s32.totalorder %v889, %v419
        %vm1404 = vcmp.eq.s32.totalorder %v889, %v420
        %vm1405 = vcmp.eq.s32.totalorder %v896, %v340
        %vm1406 = vcmp.eq.s32.totalorder %v896, %v418
        %vm1407 = vcmp.eq.s32.totalorder %v896, %v419
        %vm1408 = vcmp.eq.s32.totalorder %v896, %v420
        %vm1409 = vcmp.eq.s32.totalorder %v900, %v340
        %vm1410 = vcmp.eq.s32.totalorder %v900, %v418
        %vm1411 = vcmp.eq.s32.totalorder %v900, %v419
        %vm1412 = vcmp.eq.s32.totalorder %v900, %v420
        %vm1413 = vcmp.eq.s32.totalorder %v904, %v340
        %vm1414 = vcmp.eq.s32.totalorder %v904, %v418
        %vm1415 = vcmp.eq.s32.totalorder %v904, %v419
        %vm1416 = vcmp.eq.s32.totalorder %v904, %v420
        %vm1417 = vcmp.eq.s32.totalorder %v908, %v340
        %vm1418 = vcmp.eq.s32.totalorder %v908, %v418
        %vm1419 = vcmp.eq.s32.totalorder %v908, %v419
        %vm1420 = vcmp.eq.s32.totalorder %v908, %v420
        %vm1421 = vcmp.eq.s32.totalorder %v912, %v340
        %vm1422 = vcmp.eq.s32.totalorder %v912, %v418
        %vm1423 = vcmp.eq.s32.totalorder %v912, %v419
        %vm1424 = vcmp.eq.s32.totalorder %v912, %v420
        %vm1425 = vcmp.eq.s32.totalorder %v916, %v340
        %vm1426 = vcmp.eq.s32.totalorder %v916, %v418
        %vm1427 = vcmp.eq.s32.totalorder %v916, %v419
        %vm1428 = vcmp.eq.s32.totalorder %v916, %v420
        %vm1429 = vcmp.eq.s32.totalorder %v920, %v340
        %vm1430 = vcmp.eq.s32.totalorder %v920, %v418
        %vm1431 = vcmp.eq.s32.totalorder %v920, %v419
        %vm1432 = vcmp.eq.s32.totalorder %v920, %v420
        %vm1433 = vcmp.eq.s32.totalorder %v924, %v340
        %vm1434 = vcmp.eq.s32.totalorder %v924, %v418
        %vm1435 = vcmp.eq.s32.totalorder %v924, %v419
        %vm1436 = vcmp.eq.s32.totalorder %v924, %v420
        %vm1437 = vcmp.eq.s32.totalorder %v928, %v340
        %vm1438 = vcmp.eq.s32.totalorder %v928, %v418
        %vm1439 = vcmp.eq.s32.totalorder %v928, %v419
        %vm1440 = vcmp.eq.s32.totalorder %v928, %v420
        %vm1441 = vcmp.eq.s32.totalorder %v932, %v340
        %vm1442 = vcmp.eq.s32.totalorder %v932, %v418
        %vm1443 = vcmp.eq.s32.totalorder %v932, %v419
        %vm1444 = vcmp.eq.s32.totalorder %v932, %v420
        %vm1445 = vcmp.eq.s32.totalorder %v936, %v340
        %vm1446 = vcmp.eq.s32.totalorder %v936, %v418
        %vm1447 = vcmp.eq.s32.totalorder %v936, %v419
        %vm1448 = vcmp.eq.s32.totalorder %v936, %v420
        %vm1449 = vcmp.eq.s32.totalorder %v940, %v340
        %vm1450 = vcmp.eq.s32.totalorder %v940, %v418
        %vm1451 = vcmp.eq.s32.totalorder %v940, %v419
        %vm1452 = vcmp.eq.s32.totalorder %v940, %v420
        %vm1453 = vcmp.eq.s32.totalorder %v944, %v340
        %vm1454 = vcmp.eq.s32.totalorder %v944, %v418
        %vm1455 = vcmp.eq.s32.totalorder %v944, %v419
        %vm1456 = vcmp.eq.s32.totalorder %v944, %v420
        %vm1457 = vcmp.eq.s32.totalorder %v948, %v340
        %vm1458 = vcmp.eq.s32.totalorder %v948, %v418
        %vm1459 = vcmp.eq.s32.totalorder %v948, %v419
        %vm1460 = vcmp.eq.s32.totalorder %v948, %v420
        %vm1461 = vcmp.eq.s32.totalorder %v952, %v340
        %vm1462 = vcmp.eq.s32.totalorder %v952, %v418
        %vm1463 = vcmp.eq.s32.totalorder %v952, %v419
        %vm1464 = vcmp.eq.s32.totalorder %v952, %v420
        %vm1465 = vcmp.eq.s32.totalorder %v956, %v340
        %vm1466 = vcmp.eq.s32.totalorder %v956, %v418
        %vm1467 = vcmp.eq.s32.totalorder %v956, %v419
        %vm1468 = vcmp.eq.s32.totalorder %v956, %v420
        %v1469 = vsel %vm957, 1, 0
        %v1470 = vsel %vm958, 1, 0
        %v1471 = vsel %vm959, 1, 0
        %v1472 = vsel %vm960, 1, 0
        %v1473 = vsel %vm961, 1, 0
        %v1474 = vsel %vm962, 1, 0
        %v1475 = vsel %vm963, 1, 0
        %v1476 = vsel %vm964, 1, 0
        %v1477 = vsel %vm965, 1, 0
        %v1478 = vsel %vm966, 1, 0
        %v1479 = vsel %vm967, 1, 0
        %v1480 = vsel %vm968, 1, 0
        %v1481 = vsel %vm969, 1, 0
        %v1482 = vsel %vm970, 1, 0
        %v1483 = vsel %vm971, 1, 0
        %v1484 = vsel %vm972, 1, 0
        %v1485 = vsel %vm973, 1, 0
        %v1486 = vsel %vm974, 1, 0
        %v1487 = vsel %vm975, 1, 0
        %v1488 = vsel %vm976, 1, 0
        %v1489 = vsel %vm977, 1, 0
        %v1490 = vsel %vm978, 1, 0
        %v1491 = vsel %vm979, 1, 0
        %v1492 = vsel %vm980, 1, 0
        %v1493 = vsel %vm981, 1, 0
        %v1494 = vsel %vm982, 1, 0
        %v1495 = vsel %vm983, 1, 0
        %v1496 = vsel %vm984, 1, 0
        %v1497 = vsel %vm985, 1, 0
        %v1498 = vsel %vm986, 1, 0
        %v1499 = vsel %vm987, 1, 0
        %v1500 = vsel %vm988, 1, 0
        %v1501 = vsel %vm989, 1, 0
        %v1502 = vsel %vm990, 1, 0
        %v1503 = vsel %vm991, 1, 0
        %v1504 = vsel %vm992, 1, 0
        %v1505 = vsel %vm993, 1, 0
        %v1506 = vsel %vm994, 1, 0
        %v1507 = vsel %vm995, 1, 0
        %v1508 = vsel %vm996, 1, 0
        %v1509 = vsel %vm997, 1, 0
        %v1510 = vsel %vm998, 1, 0
        %v1511 = vsel %vm999, 1, 0
        %v1512 = vsel %vm1000, 1, 0
        %v1513 = vsel %vm1001, 1, 0
        %v1514 = vsel %vm1002, 1, 0
        %v1515 = vsel %vm1003, 1, 0
        %v1516 = vsel %vm1004, 1, 0
        %v1517 = vsel %vm1005, 1, 0
        %v1518 = vsel %vm1006, 1, 0
        %v1519 = vsel %vm1007, 1, 0
        %v1520 = vsel %vm1008, 1, 0
        %v1521 = vsel %vm1009, 1, 0
        %v1522 = vsel %vm1010, 1, 0
        %v1523 = vsel %vm1011, 1, 0
        %v1524 = vsel %vm1012, 1, 0
        %v1525 = vsel %vm1013, 1, 0
        %v1526 = vsel %vm1014, 1, 0
        %v1527 = vsel %vm1015, 1, 0
        %v1528 = vsel %vm1016, 1, 0
        %v1529 = vsel %vm1017, 1, 0
        %v1530 = vsel %vm1018, 1, 0
        %v1531 = vsel %vm1019, 1, 0
        %v1532 = vsel %vm1020, 1, 0
        %v1533 = vsel %vm1021, 1, 0
        %v1534 = vsel %vm1022, 1, 0
        %v1535 = vsel %vm1023, 1, 0
        %v1536 = vsel %vm1024, 1, 0
        %v1537 = vsel %vm1025, 1, 0
        %v1538 = vsel %vm1026, 1, 0
        %v1539 = vsel %vm1027, 1, 0
        %v1540 = vsel %vm1028, 1, 0
        %v1541 = vsel %vm1029, 1, 0
        %v1542 = vsel %vm1030, 1, 0
        %v1543 = vsel %vm1031, 1, 0
        %v1544 = vsel %vm1032, 1, 0
        %v1545 = vsel %vm1033, 1, 0
        %v1546 = vsel %vm1034, 1, 0
        %v1547 = vsel %vm1035, 1, 0
        %v1548 = vsel %vm1036, 1, 0
        %v1549 = vsel %vm1037, 1, 0
        %v1550 = vsel %vm1038, 1, 0
        %v1551 = vsel %vm1039, 1, 0
        %v1552 = vsel %vm1040, 1, 0
        %v1553 = vsel %vm1041, 1, 0
        %v1554 = vsel %vm1042, 1, 0
        %v1555 = vsel %vm1043, 1, 0
        %v1556 = vsel %vm1044, 1, 0
        %v1557 = vsel %vm1045, 1, 0
        %v1558 = vsel %vm1046, 1, 0
        %v1559 = vsel %vm1047, 1, 0
        %v1560 = vsel %vm1048, 1, 0
        %v1561 = vsel %vm1049, 1, 0
        %v1562 = vsel %vm1050, 1, 0
        %v1563 = vsel %vm1051, 1, 0
        %v1564 = vsel %vm1052, 1, 0
        %v1565 = vsel %vm1053, 1, 0
        %v1566 = vsel %vm1054, 1, 0
        %v1567 = vsel %vm1055, 1, 0
        %v1568 = vsel %vm1056, 1, 0
        %v1569 = vsel %vm1057, 1, 0
        %v1570 = vsel %vm1058, 1, 0
        %v1571 = vsel %vm1059, 1, 0
        %v1572 = vsel %vm1060, 1, 0
        %v1573 = vsel %vm1061, 1, 0
        %v1574 = vsel %vm1062, 1, 0
        %v1575 = vsel %vm1063, 1, 0
        %v1576 = vsel %vm1064, 1, 0
        %v1577 = vsel %vm1065, 1, 0
        %v1578 = vsel %vm1066, 1, 0
        %v1579 = vsel %vm1067, 1, 0
        %v1580 = vsel %vm1068, 1, 0
        %v1581 = vsel %vm1069, 1, 0
        %v1582 = vsel %vm1070, 1, 0
        %v1583 = vsel %vm1071, 1, 0
        %v1584 = vsel %vm1072, 1, 0
        %v1585 = vsel %vm1073, 1, 0
        %v1586 = vsel %vm1074, 1, 0
        %v1587 = vsel %vm1075, 1, 0
        %v1588 = vsel %vm1076, 1, 0
        %v1589 = vsel %vm1077, 1, 0
        %v1590 = vsel %vm1078, 1, 0
        %v1591 = vsel %vm1079, 1, 0
        %v1592 = vsel %vm1080, 1, 0
        %v1593 = vsel %vm1081, 1, 0
        %v1594 = vsel %vm1082, 1, 0
        %v1595 = vsel %vm1083, 1, 0
        %v1596 = vsel %vm1084, 1, 0
        %v1597 = vsel %vm1085, 1, 0
        %v1598 = vsel %vm1086, 1, 0
        %v1599 = vsel %vm1087, 1, 0
        %v1600 = vsel %vm1088, 1, 0
        %v1601 = vsel %vm1089, 1, 0
        %v1602 = vsel %vm1090, 1, 0
        %v1603 = vsel %vm1091, 1, 0
        %v1604 = vsel %vm1092, 1, 0
        %v1605 = vsel %vm1093, 1, 0
        %v1606 = vsel %vm1094, 1, 0
        %v1607 = vsel %vm1095, 1, 0
        %v1608 = vsel %vm1096, 1, 0
        %v1609 = vsel %vm1097, 1, 0
        %v1610 = vsel %vm1098, 1, 0
        %v1611 = vsel %vm1099, 1, 0
        %v1612 = vsel %vm1100, 1, 0
        %v1613 = vsel %vm1101, 1, 0
        %v1614 = vsel %vm1102, 1, 0
        %v1615 = vsel %vm1103, 1, 0
        %v1616 = vsel %vm1104, 1, 0
        %v1617 = vsel %vm1105, 1, 0
        %v1618 = vsel %vm1106, 1, 0
        %v1619 = vsel %vm1107, 1, 0
        %v1620 = vsel %vm1108, 1, 0
        %v1621 = vsel %vm1109, 1, 0
        %v1622 = vsel %vm1110, 1, 0
        %v1623 = vsel %vm1111, 1, 0
        %v1624 = vsel %vm1112, 1, 0
        %v1625 = vsel %vm1113, 1, 0
        %v1626 = vsel %vm1114, 1, 0
        %v1627 = vsel %vm1115, 1, 0
        %v1628 = vsel %vm1116, 1, 0
        %v1629 = vsel %vm1117, 1, 0
        %v1630 = vsel %vm1118, 1, 0
        %v1631 = vsel %vm1119, 1, 0
        %v1632 = vsel %vm1120, 1, 0
        %v1633 = vsel %vm1121, 1, 0
        %v1634 = vsel %vm1122, 1, 0
        %v1635 = vsel %vm1123, 1, 0
        %v1636 = vsel %vm1124, 1, 0
        %v1637 = vsel %vm1125, 1, 0
        %v1638 = vsel %vm1126, 1, 0
        %v1639 = vsel %vm1127, 1, 0
        %v1640 = vsel %vm1128, 1, 0
        %v1641 = vsel %vm1129, 1, 0
        %v1642 = vsel %vm1130, 1, 0
        %v1643 = vsel %vm1131, 1, 0
        %v1644 = vsel %vm1132, 1, 0
        %v1645 = vsel %vm1133, 1, 0
        %v1646 = vsel %vm1134, 1, 0
        %v1647 = vsel %vm1135, 1, 0
        %v1648 = vsel %vm1136, 1, 0
        %v1649 = vsel %vm1137, 1, 0
        %v1650 = vsel %vm1138, 1, 0
        %v1651 = vsel %vm1139, 1, 0
        %v1652 = vsel %vm1140, 1, 0
        %v1653 = vsel %vm1141, 1, 0
        %v1654 = vsel %vm1142, 1, 0
        %v1655 = vsel %vm1143, 1, 0
        %v1656 = vsel %vm1144, 1, 0
        %v1657 = vsel %vm1145, 1, 0
        %v1658 = vsel %vm1146, 1, 0
        %v1659 = vsel %vm1147, 1, 0
        %v1660 = vsel %vm1148, 1, 0
        %v1661 = vsel %vm1149, 1, 0
        %v1662 = vsel %vm1150, 1, 0
        %v1663 = vsel %vm1151, 1, 0
        %v1664 = vsel %vm1152, 1, 0
        %v1665 = vsel %vm1153, 1, 0
        %v1666 = vsel %vm1154, 1, 0
        %v1667 = vsel %vm1155, 1, 0
        %v1668 = vsel %vm1156, 1, 0
        %v1669 = vsel %vm1157, 1, 0
        %v1670 = vsel %vm1158, 1, 0
        %v1671 = vsel %vm1159, 1, 0
        %v1672 = vsel %vm1160, 1, 0
        %v1673 = vsel %vm1161, 1, 0
        %v1674 = vsel %vm1162, 1, 0
        %v1675 = vsel %vm1163, 1, 0
        %v1676 = vsel %vm1164, 1, 0
        %v1677 = vsel %vm1165, 1, 0
        %v1678 = vsel %vm1166, 1, 0
        %v1679 = vsel %vm1167, 1, 0
        %v1680 = vsel %vm1168, 1, 0
        %v1681 = vsel %vm1169, 1, 0
        %v1682 = vsel %vm1170, 1, 0
        %v1683 = vsel %vm1171, 1, 0
        %v1684 = vsel %vm1172, 1, 0
        %v1685 = vsel %vm1173, 1, 0
        %v1686 = vsel %vm1174, 1, 0
        %v1687 = vsel %vm1175, 1, 0
        %v1688 = vsel %vm1176, 1, 0
        %v1689 = vsel %vm1177, 1, 0
        %v1690 = vsel %vm1178, 1, 0
        %v1691 = vsel %vm1179, 1, 0
        %v1692 = vsel %vm1180, 1, 0
        %v1693 = vsel %vm1181, 1, 0
        %v1694 = vsel %vm1182, 1, 0
        %v1695 = vsel %vm1183, 1, 0
        %v1696 = vsel %vm1184, 1, 0
        %v1697 = vsel %vm1185, 1, 0
        %v1698 = vsel %vm1186, 1, 0
        %v1699 = vsel %vm1187, 1, 0
        %v1700 = vsel %vm1188, 1, 0
        %v1701 = vsel %vm1189, 1, 0
        %v1702 = vsel %vm1190, 1, 0
        %v1703 = vsel %vm1191, 1, 0
        %v1704 = vsel %vm1192, 1, 0
        %v1705 = vsel %vm1193, 1, 0
        %v1706 = vsel %vm1194, 1, 0
        %v1707 = vsel %vm1195, 1, 0
        %v1708 = vsel %vm1196, 1, 0
        %v1709 = vsel %vm1197, 1, 0
        %v1710 = vsel %vm1198, 1, 0
        %v1711 = vsel %vm1199, 1, 0
        %v1712 = vsel %vm1200, 1, 0
        %v1713 = vsel %vm1201, 1, 0
        %v1714 = vsel %vm1202, 1, 0
        %v1715 = vsel %vm1203, 1, 0
        %v1716 = vsel %vm1204, 1, 0
        %v1717 = vsel %vm1205, 1, 0
        %v1718 = vsel %vm1206, 1, 0
        %v1719 = vsel %vm1207, 1, 0
        %v1720 = vsel %vm1208, 1, 0
        %v1721 = vsel %vm1209, 1, 0
        %v1722 = vsel %vm1210, 1, 0
        %v1723 = vsel %vm1211, 1, 0
        %v1724 = vsel %vm1212, 1, 0
        %v1725 = vsel %vm1213, 1, 0
        %v1726 = vsel %vm1214, 1, 0
        %v1727 = vsel %vm1215, 1, 0
        %v1728 = vsel %vm1216, 1, 0
        %v1729 = vsel %vm1217, 1, 0
        %v1730 = vsel %vm1218, 1, 0
        %v1731 = vsel %vm1219, 1, 0
        %v1732 = vsel %vm1220, 1, 0
        %v1733 = vsel %vm1221, 1, 0
        %v1734 = vsel %vm1222, 1, 0
        %v1735 = vsel %vm1223, 1, 0
        %v1736 = vsel %vm1224, 1, 0
        %v1737 = vsel %vm1225, 1, 0
        %v1738 = vsel %vm1226, 1, 0
        %v1739 = vsel %vm1227, 1, 0
        %v1740 = vsel %vm1228, 1, 0
        %v1741 = vsel %vm1229, 1, 0
        %v1742 = vsel %vm1230, 1, 0
        %v1743 = vsel %vm1231, 1, 0
        %v1744 = vsel %vm1232, 1, 0
        %v1745 = vsel %vm1233, 1, 0
        %v1746 = vsel %vm1234, 1, 0
        %v1747 = vsel %vm1235, 1, 0
        %v1748 = vsel %vm1236, 1, 0
        %v1749 = vsel %vm1237, 1, 0
        %v1750 = vsel %vm1238, 1, 0
        %v1751 = vsel %vm1239, 1, 0
        %v1752 = vsel %vm1240, 1, 0
        %v1753 = vsel %vm1241, 1, 0
        %v1754 = vsel %vm1242, 1, 0
        %v1755 = vsel %vm1243, 1, 0
        %v1756 = vsel %vm1244, 1, 0
        %v1757 = vsel %vm1245, 1, 0
        %v1758 = vsel %vm1246, 1, 0
        %v1759 = vsel %vm1247, 1, 0
        %v1760 = vsel %vm1248, 1, 0
        %v1761 = vsel %vm1249, 1, 0
        %v1762 = vsel %vm1250, 1, 0
        %v1763 = vsel %vm1251, 1, 0
        %v1764 = vsel %vm1252, 1, 0
        %v1765 = vsel %vm1253, 1, 0
        %v1766 = vsel %vm1254, 1, 0
        %v1767 = vsel %vm1255, 1, 0
        %v1768 = vsel %vm1256, 1, 0
        %v1769 = vsel %vm1257, 1, 0
        %v1770 = vsel %vm1258, 1, 0
        %v1771 = vsel %vm1259, 1, 0
        %v1772 = vsel %vm1260, 1, 0
        %v1773 = vsel %vm1261, 1, 0
        %v1774 = vsel %vm1262, 1, 0
        %v1775 = vsel %vm1263, 1, 0
        %v1776 = vsel %vm1264, 1, 0
        %v1777 = vsel %vm1265, 1, 0
        %v1778 = vsel %vm1266, 1, 0
        %v1779 = vsel %vm1267, 1, 0
        %v1780 = vsel %vm1268, 1, 0
        %v1781 = vsel %vm1269, 1, 0
        %v1782 = vsel %vm1270, 1, 0
        %v1783 = vsel %vm1271, 1, 0
        %v1784 = vsel %vm1272, 1, 0
        %v1785 = vsel %vm1273, 1, 0
        %v1786 = vsel %vm1274, 1, 0
        %v1787 = vsel %vm1275, 1, 0
        %v1788 = vsel %vm1276, 1, 0
        %v1789 = vsel %vm1277, 1, 0
        %v1790 = vsel %vm1278, 1, 0
        %v1791 = vsel %vm1279, 1, 0
        %v1792 = vsel %vm1280, 1, 0
        %v1793 = vsel %vm1281, 1, 0
        %v1794 = vsel %vm1282, 1, 0
        %v1795 = vsel %vm1283, 1, 0
        %v1796 = vsel %vm1284, 1, 0
        %v1797 = vsel %vm1285, 1, 0
        %v1798 = vsel %vm1286, 1, 0
        %v1799 = vsel %vm1287, 1, 0
        %v1800 = vsel %vm1288, 1, 0
        %v1801 = vsel %vm1289, 1, 0
        %v1802 = vsel %vm1290, 1, 0
        %v1803 = vsel %vm1291, 1, 0
        %v1804 = vsel %vm1292, 1, 0
        %v1805 = vsel %vm1293, 1, 0
        %v1806 = vsel %vm1294, 1, 0
        %v1807 = vsel %vm1295, 1, 0
        %v1808 = vsel %vm1296, 1, 0
        %v1809 = vsel %vm1297, 1, 0
        %v1810 = vsel %vm1298, 1, 0
        %v1811 = vsel %vm1299, 1, 0
        %v1812 = vsel %vm1300, 1, 0
        %v1813 = vsel %vm1301, 1, 0
        %v1814 = vsel %vm1302, 1, 0
        %v1815 = vsel %vm1303, 1, 0
        %v1816 = vsel %vm1304, 1, 0
        %v1817 = vsel %vm1305, 1, 0
        %v1818 = vsel %vm1306, 1, 0
        %v1819 = vsel %vm1307, 1, 0
        %v1820 = vsel %vm1308, 1, 0
        %v1821 = vsel %vm1309, 1, 0
        %v1822 = vsel %vm1310, 1, 0
        %v1823 = vsel %vm1311, 1, 0
        %v1824 = vsel %vm1312, 1, 0
        %v1825 = vsel %vm1313, 1, 0
        %v1826 = vsel %vm1314, 1, 0
        %v1827 = vsel %vm1315, 1, 0
        %v1828 = vsel %vm1316, 1, 0
        %v1829 = vsel %vm1317, 1, 0
        %v1830 = vsel %vm1318, 1, 0
        %v1831 = vsel %vm1319, 1, 0
        %v1832 = vsel %vm1320, 1, 0
        %v1833 = vsel %vm1321, 1, 0
        %v1834 = vsel %vm1322, 1, 0
        %v1835 = vsel %vm1323, 1, 0
        %v1836 = vsel %vm1324, 1, 0
        %v1837 = vsel %vm1325, 1, 0
        %v1838 = vsel %vm1326, 1, 0
        %v1839 = vsel %vm1327, 1, 0
        %v1840 = vsel %vm1328, 1, 0
        %v1841 = vsel %vm1329, 1, 0
        %v1842 = vsel %vm1330, 1, 0
        %v1843 = vsel %vm1331, 1, 0
        %v1844 = vsel %vm1332, 1, 0
        %v1845 = vsel %vm1333, 1, 0
        %v1846 = vsel %vm1334, 1, 0
        %v1847 = vsel %vm1335, 1, 0
        %v1848 = vsel %vm1336, 1, 0
        %v1849 = vsel %vm1337, 1, 0
        %v1850 = vsel %vm1338, 1, 0
        %v1851 = vsel %vm1339, 1, 0
        %v1852 = vsel %vm1340, 1, 0
        %v1853 = vsel %vm1341, 1, 0
        %v1854 = vsel %vm1342, 1, 0
        %v1855 = vsel %vm1343, 1, 0
        %v1856 = vsel %vm1344, 1, 0
        %v1857 = vsel %vm1345, 1, 0
        %v1858 = vsel %vm1346, 1, 0
        %v1859 = vsel %vm1347, 1, 0
        %v1860 = vsel %vm1348, 1, 0
        %v1861 = vsel %vm1349, 1, 0
        %v1862 = vsel %vm1350, 1, 0
        %v1863 = vsel %vm1351, 1, 0
        %v1864 = vsel %vm1352, 1, 0
        %v1865 = vsel %vm1353, 1, 0
        %v1866 = vsel %vm1354, 1, 0
        %v1867 = vsel %vm1355, 1, 0
        %v1868 = vsel %vm1356, 1, 0
        %v1869 = vsel %vm1357, 1, 0
        %v1870 = vsel %vm1358, 1, 0
        %v1871 = vsel %vm1359, 1, 0
        %v1872 = vsel %vm1360, 1, 0
        %v1873 = vsel %vm1361, 1, 0
        %v1874 = vsel %vm1362, 1, 0
        %v1875 = vsel %vm1363, 1, 0
        %v1876 = vsel %vm1364, 1, 0
        %v1877 = vsel %vm1365, 1, 0
        %v1878 = vsel %vm1366, 1, 0
        %v1879 = vsel %vm1367, 1, 0
        %v1880 = vsel %vm1368, 1, 0
        %v1881 = vsel %vm1369, 1, 0
        %v1882 = vsel %vm1370, 1, 0
        %v1883 = vsel %vm1371, 1, 0
        %v1884 = vsel %vm1372, 1, 0
        %v1885 = vsel %vm1373, 1, 0
        %v1886 = vsel %vm1374, 1, 0
        %v1887 = vsel %vm1375, 1, 0
        %v1888 = vsel %vm1376, 1, 0
        %v1889 = vsel %vm1377, 1, 0
        %v1890 = vsel %vm1378, 1, 0
        %v1891 = vsel %vm1379, 1, 0
        %v1892 = vsel %vm1380, 1, 0
        %v1893 = vsel %vm1381, 1, 0
        %v1894 = vsel %vm1382, 1, 0
        %v1895 = vsel %vm1383, 1, 0
        %v1896 = vsel %vm1384, 1, 0
        %v1897 = vsel %vm1385, 1, 0
        %v1898 = vsel %vm1386, 1, 0
        %v1899 = vsel %vm1387, 1, 0
        %v1900 = vsel %vm1388, 1, 0
        %v1901 = vsel %vm1389, 1, 0
        %v1902 = vsel %vm1390, 1, 0
        %v1903 = vsel %vm1391, 1, 0
        %v1904 = vsel %vm1392, 1, 0
        %v1905 = vsel %vm1393, 1, 0
        %v1906 = vsel %vm1394, 1, 0
        %v1907 = vsel %vm1395, 1, 0
        %v1908 = vsel %vm1396, 1, 0
        %v1909 = vsel %vm1397, 1, 0
        %v1910 = vsel %vm1398, 1, 0
        %v1911 = vsel %vm1399, 1, 0
        %v1912 = vsel %vm1400, 1, 0
        %v1913 = vsel %vm1401, 1, 0
        %v1914 = vsel %vm1402, 1, 0
        %v1915 = vsel %vm1403, 1, 0
        %v1916 = vsel %vm1404, 1, 0
        %v1917 = vsel %vm1405, 1, 0
        %v1918 = vsel %vm1406, 1, 0
        %v1919 = vsel %vm1407, 1, 0
        %v1920 = vsel %vm1408, 1, 0
        %v1921 = vsel %vm1409, 1, 0
        %v1922 = vsel %vm1410, 1, 0
        %v1923 = vsel %vm1411, 1, 0
        %v1924 = vsel %vm1412, 1, 0
        %v1925 = vsel %vm1413, 1, 0
        %v1926 = vsel %vm1414, 1, 0
        %v1927 = vsel %vm1415, 1, 0
        %v1928 = vsel %vm1416, 1, 0
        %v1929 = vsel %vm1417, 1, 0
        %v1930 = vsel %vm1418, 1, 0
        %v1931 = vsel %vm1419, 1, 0
        %v1932 = vsel %vm1420, 1, 0
        %v1933 = vsel %vm1421, 1, 0
        %v1934 = vsel %vm1422, 1, 0
        %v1935 = vsel %vm1423, 1, 0
        %v1936 = vsel %vm1424, 1, 0
        %v1937 = vsel %vm1425, 1, 0
        %v1938 = vsel %vm1426, 1, 0
        %v1939 = vsel %vm1427, 1, 0
        %v1940 = vsel %vm1428, 1, 0
        %v1941 = vsel %vm1429, 1, 0
        %v1942 = vsel %vm1430, 1, 0
        %v1943 = vsel %vm1431, 1, 0
        %v1944 = vsel %vm1432, 1, 0
        %v1945 = vsel %vm1433, 1, 0
        %v1946 = vsel %vm1434, 1, 0
        %v1947 = vsel %vm1435, 1, 0
        %v1948 = vsel %vm1436, 1, 0
        %v1949 = vsel %vm1437, 1, 0
        %v1950 = vsel %vm1438, 1, 0
        %v1951 = vsel %vm1439, 1, 0
        %v1952 = vsel %vm1440, 1, 0
        %v1953 = vsel %vm1441, 1, 0
        %v1954 = vsel %vm1442, 1, 0
        %v1955 = vsel %vm1443, 1, 0
        %v1956 = vsel %vm1444, 1, 0
        %v1957 = vsel %vm1445, 1, 0
        %v1958 = vsel %vm1446, 1, 0
        %v1959 = vsel %vm1447, 1, 0
        %v1960 = vsel %vm1448, 1, 0
        %v1961 = vsel %vm1449, 1, 0
        %v1962 = vsel %vm1450, 1, 0
        %v1963 = vsel %vm1451, 1, 0
        %v1964 = vsel %vm1452, 1, 0
        %v1965 = vsel %vm1453, 1, 0
        %v1966 = vsel %vm1454, 1, 0
        %v1967 = vsel %vm1455, 1, 0
        %v1968 = vsel %vm1456, 1, 0
        %v1969 = vsel %vm1457, 1, 0
        %v1970 = vsel %vm1458, 1, 0
        %v1971 = vsel %vm1459, 1, 0
        %v1972 = vsel %vm1460, 1, 0
        %v1973 = vsel %vm1461, 1, 0
        %v1974 = vsel %vm1462, 1, 0
        %v1975 = vsel %vm1463, 1, 0
        %v1976 = vsel %vm1464, 1, 0
        %v1977 = vsel %vm1465, 1, 0
        %v1978 = vsel %vm1466, 1, 0
        %v1979 = vsel %vm1467, 1, 0
        %v1980 = vsel %vm1468, 1, 0
        %v1981 = vcvt.s32.f32 %v1469
        %v1982 = vcvt.s32.f32 %v1470
        %v1983 = vcvt.s32.f32 %v1471
        %v1984 = vcvt.s32.f32 %v1472
        %v1985 = vcvt.s32.f32 %v1473
        %v1986 = vcvt.s32.f32 %v1474
        %v1987 = vcvt.s32.f32 %v1475
        %v1988 = vcvt.s32.f32 %v1476
        %v1989 = vcvt.s32.f32 %v1477
        %v1990 = vcvt.s32.f32 %v1478
        %v1991 = vcvt.s32.f32 %v1479
        %v1992 = vcvt.s32.f32 %v1480
        %v1993 = vcvt.s32.f32 %v1481
        %v1994 = vcvt.s32.f32 %v1482
        %v1995 = vcvt.s32.f32 %v1483
        %v1996 = vcvt.s32.f32 %v1484
        %v1997 = vcvt.s32.f32 %v1485
        %v1998 = vcvt.s32.f32 %v1486
        %v1999 = vcvt.s32.f32 %v1487
        %v2000 = vcvt.s32.f32 %v1488
        %v2001 = vcvt.s32.f32 %v1489
        %v2002 = vcvt.s32.f32 %v1490
        %v2003 = vcvt.s32.f32 %v1491
        %v2004 = vcvt.s32.f32 %v1492
        %v2005 = vcvt.s32.f32 %v1493
        %v2006 = vcvt.s32.f32 %v1494
        %v2007 = vcvt.s32.f32 %v1495
        %v2008 = vcvt.s32.f32 %v1496
        %v2009 = vcvt.s32.f32 %v1497
        %v2010 = vcvt.s32.f32 %v1498
        %v2011 = vcvt.s32.f32 %v1499
        %v2012 = vcvt.s32.f32 %v1500
        %v2013 = vcvt.s32.f32 %v1501
        %v2014 = vcvt.s32.f32 %v1502
        %v2015 = vcvt.s32.f32 %v1503
        %v2016 = vcvt.s32.f32 %v1504
        %v2017 = vcvt.s32.f32 %v1505
        %v2018 = vcvt.s32.f32 %v1506
        %v2019 = vcvt.s32.f32 %v1507
        %v2020 = vcvt.s32.f32 %v1508
        %v2021 = vcvt.s32.f32 %v1509
        %v2022 = vcvt.s32.f32 %v1510
        %v2023 = vcvt.s32.f32 %v1511
        %v2024 = vcvt.s32.f32 %v1512
        %v2025 = vcvt.s32.f32 %v1513
        %v2026 = vcvt.s32.f32 %v1514
        %v2027 = vcvt.s32.f32 %v1515
        %v2028 = vcvt.s32.f32 %v1516
        %v2029 = vcvt.s32.f32 %v1517
        %v2030 = vcvt.s32.f32 %v1518
        %v2031 = vcvt.s32.f32 %v1519
        %v2032 = vcvt.s32.f32 %v1520
        %v2033 = vcvt.s32.f32 %v1521
        %v2034 = vcvt.s32.f32 %v1522
        %v2035 = vcvt.s32.f32 %v1523
        %v2036 = vcvt.s32.f32 %v1524
        %v2037 = vcvt.s32.f32 %v1525
        %v2038 = vcvt.s32.f32 %v1526
        %v2039 = vcvt.s32.f32 %v1527
        %v2040 = vcvt.s32.f32 %v1528
        %v2041 = vcvt.s32.f32 %v1529
        %v2042 = vcvt.s32.f32 %v1530
        %v2043 = vcvt.s32.f32 %v1531
        %v2044 = vcvt.s32.f32 %v1532
        %v2045 = vcvt.s32.f32 %v1533
        %v2046 = vcvt.s32.f32 %v1534
        %v2047 = vcvt.s32.f32 %v1535
        %v2048 = vcvt.s32.f32 %v1536
        %v2049 = vcvt.s32.f32 %v1537
        %v2050 = vcvt.s32.f32 %v1538
        %v2051 = vcvt.s32.f32 %v1539
        %v2052 = vcvt.s32.f32 %v1540
        %v2053 = vcvt.s32.f32 %v1541
        %v2054 = vcvt.s32.f32 %v1542
        %v2055 = vcvt.s32.f32 %v1543
        %v2056 = vcvt.s32.f32 %v1544
        %v2057 = vcvt.s32.f32 %v1545
        %v2058 = vcvt.s32.f32 %v1546
        %v2059 = vcvt.s32.f32 %v1547
        %v2060 = vcvt.s32.f32 %v1548
        %v2061 = vcvt.s32.f32 %v1549
        %v2062 = vcvt.s32.f32 %v1550
        %v2063 = vcvt.s32.f32 %v1551
        %v2064 = vcvt.s32.f32 %v1552
        %v2065 = vcvt.s32.f32 %v1553
        %v2066 = vcvt.s32.f32 %v1554
        %v2067 = vcvt.s32.f32 %v1555
        %v2068 = vcvt.s32.f32 %v1556
        %v2069 = vcvt.s32.f32 %v1557
        %v2070 = vcvt.s32.f32 %v1558
        %v2071 = vcvt.s32.f32 %v1559
        %v2072 = vcvt.s32.f32 %v1560
        %v2073 = vcvt.s32.f32 %v1561
        %v2074 = vcvt.s32.f32 %v1562
        %v2075 = vcvt.s32.f32 %v1563
        %v2076 = vcvt.s32.f32 %v1564
        %v2077 = vcvt.s32.f32 %v1565
        %v2078 = vcvt.s32.f32 %v1566
        %v2079 = vcvt.s32.f32 %v1567
        %v2080 = vcvt.s32.f32 %v1568
        %v2081 = vcvt.s32.f32 %v1569
        %v2082 = vcvt.s32.f32 %v1570
        %v2083 = vcvt.s32.f32 %v1571
        %v2084 = vcvt.s32.f32 %v1572
        %v2085 = vcvt.s32.f32 %v1573
        %v2086 = vcvt.s32.f32 %v1574
        %v2087 = vcvt.s32.f32 %v1575
        %v2088 = vcvt.s32.f32 %v1576
        %v2089 = vcvt.s32.f32 %v1577
        %v2090 = vcvt.s32.f32 %v1578
        %v2091 = vcvt.s32.f32 %v1579
        %v2092 = vcvt.s32.f32 %v1580
        %v2093 = vcvt.s32.f32 %v1581
        %v2094 = vcvt.s32.f32 %v1582
        %v2095 = vcvt.s32.f32 %v1583
        %v2096 = vcvt.s32.f32 %v1584
        %v2097 = vcvt.s32.f32 %v1585
        %v2098 = vcvt.s32.f32 %v1586
        %v2099 = vcvt.s32.f32 %v1587
        %v2100 = vcvt.s32.f32 %v1588
        %v2101 = vcvt.s32.f32 %v1589
        %v2102 = vcvt.s32.f32 %v1590
        %v2103 = vcvt.s32.f32 %v1591
        %v2104 = vcvt.s32.f32 %v1592
        %v2105 = vcvt.s32.f32 %v1593
        %v2106 = vcvt.s32.f32 %v1594
        %v2107 = vcvt.s32.f32 %v1595
        %v2108 = vcvt.s32.f32 %v1596
        %v2109 = vcvt.s32.f32 %v1597
        %v2110 = vcvt.s32.f32 %v1598
        %v2111 = vcvt.s32.f32 %v1599
        %v2112 = vcvt.s32.f32 %v1600
        %v2113 = vcvt.s32.f32 %v1601
        %v2114 = vcvt.s32.f32 %v1602
        %v2115 = vcvt.s32.f32 %v1603
        %v2116 = vcvt.s32.f32 %v1604
        %v2117 = vcvt.s32.f32 %v1605
        %v2118 = vcvt.s32.f32 %v1606
        %v2119 = vcvt.s32.f32 %v1607
        %v2120 = vcvt.s32.f32 %v1608
        %v2121 = vcvt.s32.f32 %v1609
        %v2122 = vcvt.s32.f32 %v1610
        %v2123 = vcvt.s32.f32 %v1611
        %v2124 = vcvt.s32.f32 %v1612
        %v2125 = vcvt.s32.f32 %v1613
        %v2126 = vcvt.s32.f32 %v1614
        %v2127 = vcvt.s32.f32 %v1615
        %v2128 = vcvt.s32.f32 %v1616
        %v2129 = vcvt.s32.f32 %v1617
        %v2130 = vcvt.s32.f32 %v1618
        %v2131 = vcvt.s32.f32 %v1619
        %v2132 = vcvt.s32.f32 %v1620
        %v2133 = vcvt.s32.f32 %v1621
        %v2134 = vcvt.s32.f32 %v1622
        %v2135 = vcvt.s32.f32 %v1623
        %v2136 = vcvt.s32.f32 %v1624
        %v2137 = vcvt.s32.f32 %v1625
        %v2138 = vcvt.s32.f32 %v1626
        %v2139 = vcvt.s32.f32 %v1627
        %v2140 = vcvt.s32.f32 %v1628
        %v2141 = vcvt.s32.f32 %v1629
        %v2142 = vcvt.s32.f32 %v1630
        %v2143 = vcvt.s32.f32 %v1631
        %v2144 = vcvt.s32.f32 %v1632
        %v2145 = vcvt.s32.f32 %v1633
        %v2146 = vcvt.s32.f32 %v1634
        %v2147 = vcvt.s32.f32 %v1635
        %v2148 = vcvt.s32.f32 %v1636
        %v2149 = vcvt.s32.f32 %v1637
        %v2150 = vcvt.s32.f32 %v1638
        %v2151 = vcvt.s32.f32 %v1639
        %v2152 = vcvt.s32.f32 %v1640
        %v2153 = vcvt.s32.f32 %v1641
        %v2154 = vcvt.s32.f32 %v1642
        %v2155 = vcvt.s32.f32 %v1643
        %v2156 = vcvt.s32.f32 %v1644
        %v2157 = vcvt.s32.f32 %v1645
        %v2158 = vcvt.s32.f32 %v1646
        %v2159 = vcvt.s32.f32 %v1647
        %v2160 = vcvt.s32.f32 %v1648
        %v2161 = vcvt.s32.f32 %v1649
        %v2162 = vcvt.s32.f32 %v1650
        %v2163 = vcvt.s32.f32 %v1651
        %v2164 = vcvt.s32.f32 %v1652
        %v2165 = vcvt.s32.f32 %v1653
        %v2166 = vcvt.s32.f32 %v1654
        %v2167 = vcvt.s32.f32 %v1655
        %v2168 = vcvt.s32.f32 %v1656
        %v2169 = vcvt.s32.f32 %v1657
        %v2170 = vcvt.s32.f32 %v1658
        %v2171 = vcvt.s32.f32 %v1659
        %v2172 = vcvt.s32.f32 %v1660
        %v2173 = vcvt.s32.f32 %v1661
        %v2174 = vcvt.s32.f32 %v1662
        %v2175 = vcvt.s32.f32 %v1663
        %v2176 = vcvt.s32.f32 %v1664
        %v2177 = vcvt.s32.f32 %v1665
        %v2178 = vcvt.s32.f32 %v1666
        %v2179 = vcvt.s32.f32 %v1667
        %v2180 = vcvt.s32.f32 %v1668
        %v2181 = vcvt.s32.f32 %v1669
        %v2182 = vcvt.s32.f32 %v1670
        %v2183 = vcvt.s32.f32 %v1671
        %v2184 = vcvt.s32.f32 %v1672
        %v2185 = vcvt.s32.f32 %v1673
        %v2186 = vcvt.s32.f32 %v1674
        %v2187 = vcvt.s32.f32 %v1675
        %v2188 = vcvt.s32.f32 %v1676
        %v2189 = vcvt.s32.f32 %v1677
        %v2190 = vcvt.s32.f32 %v1678
        %v2191 = vcvt.s32.f32 %v1679
        %v2192 = vcvt.s32.f32 %v1680
        %v2193 = vcvt.s32.f32 %v1681
        %v2194 = vcvt.s32.f32 %v1682
        %v2195 = vcvt.s32.f32 %v1683
        %v2196 = vcvt.s32.f32 %v1684
        %v2197 = vcvt.s32.f32 %v1685
        %v2198 = vcvt.s32.f32 %v1686
        %v2199 = vcvt.s32.f32 %v1687
        %v2200 = vcvt.s32.f32 %v1688
        %v2201 = vcvt.s32.f32 %v1689
        %v2202 = vcvt.s32.f32 %v1690
        %v2203 = vcvt.s32.f32 %v1691
        %v2204 = vcvt.s32.f32 %v1692
        %v2205 = vcvt.s32.f32 %v1693
        %v2206 = vcvt.s32.f32 %v1694
        %v2207 = vcvt.s32.f32 %v1695
        %v2208 = vcvt.s32.f32 %v1696
        %v2209 = vcvt.s32.f32 %v1697
        %v2210 = vcvt.s32.f32 %v1698
        %v2211 = vcvt.s32.f32 %v1699
        %v2212 = vcvt.s32.f32 %v1700
        %v2213 = vcvt.s32.f32 %v1701
        %v2214 = vcvt.s32.f32 %v1702
        %v2215 = vcvt.s32.f32 %v1703
        %v2216 = vcvt.s32.f32 %v1704
        %v2217 = vcvt.s32.f32 %v1705
        %v2218 = vcvt.s32.f32 %v1706
        %v2219 = vcvt.s32.f32 %v1707
        %v2220 = vcvt.s32.f32 %v1708
        %v2221 = vcvt.s32.f32 %v1709
        %v2222 = vcvt.s32.f32 %v1710
        %v2223 = vcvt.s32.f32 %v1711
        %v2224 = vcvt.s32.f32 %v1712
        %v2225 = vcvt.s32.f32 %v1713
        %v2226 = vcvt.s32.f32 %v1714
        %v2227 = vcvt.s32.f32 %v1715
        %v2228 = vcvt.s32.f32 %v1716
        %v2229 = vcvt.s32.f32 %v1717
        %v2230 = vcvt.s32.f32 %v1718
        %v2231 = vcvt.s32.f32 %v1719
        %v2232 = vcvt.s32.f32 %v1720
        %v2233 = vcvt.s32.f32 %v1721
        %v2234 = vcvt.s32.f32 %v1722
        %v2235 = vcvt.s32.f32 %v1723
        %v2236 = vcvt.s32.f32 %v1724
        %v2237 = vcvt.s32.f32 %v1725
        %v2238 = vcvt.s32.f32 %v1726
        %v2239 = vcvt.s32.f32 %v1727
        %v2240 = vcvt.s32.f32 %v1728
        %v2241 = vcvt.s32.f32 %v1729
        %v2242 = vcvt.s32.f32 %v1730
        %v2243 = vcvt.s32.f32 %v1731
        %v2244 = vcvt.s32.f32 %v1732
        %v2245 = vcvt.s32.f32 %v1733
        %v2246 = vcvt.s32.f32 %v1734
        %v2247 = vcvt.s32.f32 %v1735
        %v2248 = vcvt.s32.f32 %v1736
        %v2249 = vcvt.s32.f32 %v1737
        %v2250 = vcvt.s32.f32 %v1738
        %v2251 = vcvt.s32.f32 %v1739
        %v2252 = vcvt.s32.f32 %v1740
        %v2253 = vcvt.s32.f32 %v1741
        %v2254 = vcvt.s32.f32 %v1742
        %v2255 = vcvt.s32.f32 %v1743
        %v2256 = vcvt.s32.f32 %v1744
        %v2257 = vcvt.s32.f32 %v1745
        %v2258 = vcvt.s32.f32 %v1746
        %v2259 = vcvt.s32.f32 %v1747
        %v2260 = vcvt.s32.f32 %v1748
        %v2261 = vcvt.s32.f32 %v1749
        %v2262 = vcvt.s32.f32 %v1750
        %v2263 = vcvt.s32.f32 %v1751
        %v2264 = vcvt.s32.f32 %v1752
        %v2265 = vcvt.s32.f32 %v1753
        %v2266 = vcvt.s32.f32 %v1754
        %v2267 = vcvt.s32.f32 %v1755
        %v2268 = vcvt.s32.f32 %v1756
        %v2269 = vcvt.s32.f32 %v1757
        %v2270 = vcvt.s32.f32 %v1758
        %v2271 = vcvt.s32.f32 %v1759
        %v2272 = vcvt.s32.f32 %v1760
        %v2273 = vcvt.s32.f32 %v1761
        %v2274 = vcvt.s32.f32 %v1762
        %v2275 = vcvt.s32.f32 %v1763
        %v2276 = vcvt.s32.f32 %v1764
        %v2277 = vcvt.s32.f32 %v1765
        %v2278 = vcvt.s32.f32 %v1766
        %v2279 = vcvt.s32.f32 %v1767
        %v2280 = vcvt.s32.f32 %v1768
        %v2281 = vcvt.s32.f32 %v1769
        %v2282 = vcvt.s32.f32 %v1770
        %v2283 = vcvt.s32.f32 %v1771
        %v2284 = vcvt.s32.f32 %v1772
        %v2285 = vcvt.s32.f32 %v1773
        %v2286 = vcvt.s32.f32 %v1774
        %v2287 = vcvt.s32.f32 %v1775
        %v2288 = vcvt.s32.f32 %v1776
        %v2289 = vcvt.s32.f32 %v1777
        %v2290 = vcvt.s32.f32 %v1778
        %v2291 = vcvt.s32.f32 %v1779
        %v2292 = vcvt.s32.f32 %v1780
        %v2293 = vcvt.s32.f32 %v1781
        %v2294 = vcvt.s32.f32 %v1782
        %v2295 = vcvt.s32.f32 %v1783
        %v2296 = vcvt.s32.f32 %v1784
        %v2297 = vcvt.s32.f32 %v1785
        %v2298 = vcvt.s32.f32 %v1786
        %v2299 = vcvt.s32.f32 %v1787
        %v2300 = vcvt.s32.f32 %v1788
        %v2301 = vcvt.s32.f32 %v1789
        %v2302 = vcvt.s32.f32 %v1790
        %v2303 = vcvt.s32.f32 %v1791
        %v2304 = vcvt.s32.f32 %v1792
        %v2305 = vcvt.s32.f32 %v1793
        %v2306 = vcvt.s32.f32 %v1794
        %v2307 = vcvt.s32.f32 %v1795
        %v2308 = vcvt.s32.f32 %v1796
        %v2309 = vcvt.s32.f32 %v1797
        %v2310 = vcvt.s32.f32 %v1798
        %v2311 = vcvt.s32.f32 %v1799
        %v2312 = vcvt.s32.f32 %v1800
        %v2313 = vcvt.s32.f32 %v1801
        %v2314 = vcvt.s32.f32 %v1802
        %v2315 = vcvt.s32.f32 %v1803
        %v2316 = vcvt.s32.f32 %v1804
        %v2317 = vcvt.s32.f32 %v1805
        %v2318 = vcvt.s32.f32 %v1806
        %v2319 = vcvt.s32.f32 %v1807
        %v2320 = vcvt.s32.f32 %v1808
        %v2321 = vcvt.s32.f32 %v1809
        %v2322 = vcvt.s32.f32 %v1810
        %v2323 = vcvt.s32.f32 %v1811
        %v2324 = vcvt.s32.f32 %v1812
        %v2325 = vcvt.s32.f32 %v1813
        %v2326 = vcvt.s32.f32 %v1814
        %v2327 = vcvt.s32.f32 %v1815
        %v2328 = vcvt.s32.f32 %v1816
        %v2329 = vcvt.s32.f32 %v1817
        %v2330 = vcvt.s32.f32 %v1818
        %v2331 = vcvt.s32.f32 %v1819
        %v2332 = vcvt.s32.f32 %v1820
        %v2333 = vcvt.s32.f32 %v1821
        %v2334 = vcvt.s32.f32 %v1822
        %v2335 = vcvt.s32.f32 %v1823
        %v2336 = vcvt.s32.f32 %v1824
        %v2337 = vcvt.s32.f32 %v1825
        %v2338 = vcvt.s32.f32 %v1826
        %v2339 = vcvt.s32.f32 %v1827
        %v2340 = vcvt.s32.f32 %v1828
        %v2341 = vcvt.s32.f32 %v1829
        %v2342 = vcvt.s32.f32 %v1830
        %v2343 = vcvt.s32.f32 %v1831
        %v2344 = vcvt.s32.f32 %v1832
        %v2345 = vcvt.s32.f32 %v1833
        %v2346 = vcvt.s32.f32 %v1834
        %v2347 = vcvt.s32.f32 %v1835
        %v2348 = vcvt.s32.f32 %v1836
        %v2349 = vcvt.s32.f32 %v1837
        %v2350 = vcvt.s32.f32 %v1838
        %v2351 = vcvt.s32.f32 %v1839
        %v2352 = vcvt.s32.f32 %v1840
        %v2353 = vcvt.s32.f32 %v1841
        %v2354 = vcvt.s32.f32 %v1842
        %v2355 = vcvt.s32.f32 %v1843
        %v2356 = vcvt.s32.f32 %v1844
        %v2357 = vcvt.s32.f32 %v1845
        %v2358 = vcvt.s32.f32 %v1846
        %v2359 = vcvt.s32.f32 %v1847
        %v2360 = vcvt.s32.f32 %v1848
        %v2361 = vcvt.s32.f32 %v1849
        %v2362 = vcvt.s32.f32 %v1850
        %v2363 = vcvt.s32.f32 %v1851
        %v2364 = vcvt.s32.f32 %v1852
        %v2365 = vcvt.s32.f32 %v1853
        %v2366 = vcvt.s32.f32 %v1854
        %v2367 = vcvt.s32.f32 %v1855
        %v2368 = vcvt.s32.f32 %v1856
        %v2369 = vcvt.s32.f32 %v1857
        %v2370 = vcvt.s32.f32 %v1858
        %v2371 = vcvt.s32.f32 %v1859
        %v2372 = vcvt.s32.f32 %v1860
        %v2373 = vcvt.s32.f32 %v1861
        %v2374 = vcvt.s32.f32 %v1862
        %v2375 = vcvt.s32.f32 %v1863
        %v2376 = vcvt.s32.f32 %v1864
        %v2377 = vcvt.s32.f32 %v1865
        %v2378 = vcvt.s32.f32 %v1866
        %v2379 = vcvt.s32.f32 %v1867
        %v2380 = vcvt.s32.f32 %v1868
        %v2381 = vcvt.s32.f32 %v1869
        %v2382 = vcvt.s32.f32 %v1870
        %v2383 = vcvt.s32.f32 %v1871
        %v2384 = vcvt.s32.f32 %v1872
        %v2385 = vcvt.s32.f32 %v1873
        %v2386 = vcvt.s32.f32 %v1874
        %v2387 = vcvt.s32.f32 %v1875
        %v2388 = vcvt.s32.f32 %v1876
        %v2389 = vcvt.s32.f32 %v1877
        %v2390 = vcvt.s32.f32 %v1878
        %v2391 = vcvt.s32.f32 %v1879
        %v2392 = vcvt.s32.f32 %v1880
        %v2393 = vcvt.s32.f32 %v1881
        %v2394 = vcvt.s32.f32 %v1882
        %v2395 = vcvt.s32.f32 %v1883
        %v2396 = vcvt.s32.f32 %v1884
        %v2397 = vcvt.s32.f32 %v1885
        %v2398 = vcvt.s32.f32 %v1886
        %v2399 = vcvt.s32.f32 %v1887
        %v2400 = vcvt.s32.f32 %v1888
        %v2401 = vcvt.s32.f32 %v1889
        %v2402 = vcvt.s32.f32 %v1890
        %v2403 = vcvt.s32.f32 %v1891
        %v2404 = vcvt.s32.f32 %v1892
        %v2405 = vcvt.s32.f32 %v1893
        %v2406 = vcvt.s32.f32 %v1894
        %v2407 = vcvt.s32.f32 %v1895
        %v2408 = vcvt.s32.f32 %v1896
        %v2409 = vcvt.s32.f32 %v1897
        %v2410 = vcvt.s32.f32 %v1898
        %v2411 = vcvt.s32.f32 %v1899
        %v2412 = vcvt.s32.f32 %v1900
        %v2413 = vcvt.s32.f32 %v1901
        %v2414 = vcvt.s32.f32 %v1902
        %v2415 = vcvt.s32.f32 %v1903
        %v2416 = vcvt.s32.f32 %v1904
        %v2417 = vcvt.s32.f32 %v1905
        %v2418 = vcvt.s32.f32 %v1906
        %v2419 = vcvt.s32.f32 %v1907
        %v2420 = vcvt.s32.f32 %v1908
        %v2421 = vcvt.s32.f32 %v1909
        %v2422 = vcvt.s32.f32 %v1910
        %v2423 = vcvt.s32.f32 %v1911
        %v2424 = vcvt.s32.f32 %v1912
        %v2425 = vcvt.s32.f32 %v1913
        %v2426 = vcvt.s32.f32 %v1914
        %v2427 = vcvt.s32.f32 %v1915
        %v2428 = vcvt.s32.f32 %v1916
        %v2429 = vcvt.s32.f32 %v1917
        %v2430 = vcvt.s32.f32 %v1918
        %v2431 = vcvt.s32.f32 %v1919
        %v2432 = vcvt.s32.f32 %v1920
        %v2433 = vcvt.s32.f32 %v1921
        %v2434 = vcvt.s32.f32 %v1922
        %v2435 = vcvt.s32.f32 %v1923
        %v2436 = vcvt.s32.f32 %v1924
        %v2437 = vcvt.s32.f32 %v1925
        %v2438 = vcvt.s32.f32 %v1926
        %v2439 = vcvt.s32.f32 %v1927
        %v2440 = vcvt.s32.f32 %v1928
        %v2441 = vcvt.s32.f32 %v1929
        %v2442 = vcvt.s32.f32 %v1930
        %v2443 = vcvt.s32.f32 %v1931
        %v2444 = vcvt.s32.f32 %v1932
        %v2445 = vcvt.s32.f32 %v1933
        %v2446 = vcvt.s32.f32 %v1934
        %v2447 = vcvt.s32.f32 %v1935
        %v2448 = vcvt.s32.f32 %v1936
        %v2449 = vcvt.s32.f32 %v1937
        %v2450 = vcvt.s32.f32 %v1938
        %v2451 = vcvt.s32.f32 %v1939
        %v2452 = vcvt.s32.f32 %v1940
        %v2453 = vcvt.s32.f32 %v1941
        %v2454 = vcvt.s32.f32 %v1942
        %v2455 = vcvt.s32.f32 %v1943
        %v2456 = vcvt.s32.f32 %v1944
        %v2457 = vcvt.s32.f32 %v1945
        %v2458 = vcvt.s32.f32 %v1946
        %v2459 = vcvt.s32.f32 %v1947
        %v2460 = vcvt.s32.f32 %v1948
        %v2461 = vcvt.s32.f32 %v1949
        %v2462 = vcvt.s32.f32 %v1950
        %v2463 = vcvt.s32.f32 %v1951
        %v2464 = vcvt.s32.f32 %v1952
        %v2465 = vcvt.s32.f32 %v1953
        %v2466 = vcvt.s32.f32 %v1954
        %v2467 = vcvt.s32.f32 %v1955
        %v2468 = vcvt.s32.f32 %v1956
        %v2469 = vcvt.s32.f32 %v1957
        %v2470 = vcvt.s32.f32 %v1958
        %v2471 = vcvt.s32.f32 %v1959
        %v2472 = vcvt.s32.f32 %v1960
        %v2473 = vcvt.s32.f32 %v1961
        %v2474 = vcvt.s32.f32 %v1962
        %v2475 = vcvt.s32.f32 %v1963
        %v2476 = vcvt.s32.f32 %v1964
        %v2477 = vcvt.s32.f32 %v1965
        %v2478 = vcvt.s32.f32 %v1966
        %v2479 = vcvt.s32.f32 %v1967
        %v2480 = vcvt.s32.f32 %v1968
        %v2481 = vcvt.s32.f32 %v1969
        %v2482 = vcvt.s32.f32 %v1970
        %v2483 = vcvt.s32.f32 %v1971
        %v2484 = vcvt.s32.f32 %v1972
        %v2485 = vcvt.s32.f32 %v1973
        %v2486 = vcvt.s32.f32 %v1974
        %v2487 = vcvt.s32.f32 %v1975
        %v2488 = vcvt.s32.f32 %v1976
        %v2489 = vcvt.s32.f32 %v1977
        %v2490 = vcvt.s32.f32 %v1978
        %v2491 = vcvt.s32.f32 %v1979
        %v2492 = vcvt.s32.f32 %v1980
        %2493 = vmatprep.subr.mxu0 0.0
        %2494 = vmatpush1.msra.mxu0 %v354
        %2495 = vmatprep.subr.mxu0 0.0
        %2496 = vmatpush1.msra.mxu0 %v355
        %2497 = vmatprep.subr.mxu0 0.0
        %2498 = vmatpush1.msra.mxu0 %v356
        %2499 = vmatprep.subr.mxu0 0.0
        %2500 = vmatpush1.msra.mxu0 %v357
        %2501 = vmatprep.subr.mxu0 0.0
        %2502 = vmatpush1.msra.mxu0 %v358
        %2503 = vmatprep.subr.mxu0 0.0
        %2504 = vmatpush1.msra.mxu0 %v359
        %2505 = vmatprep.subr.mxu0 0.0
        %2506 = vmatpush1.msra.mxu0 %v360
        %2507 = vmatprep.subr.mxu0 0.0
        %2508 = vmatpush1.msra.mxu0 %v361
        %2509 = vmatprep.subr.mxu0 0.0
        %2510 = vmatpush1.msra.mxu0 %v362
        %2511 = vmatprep.subr.mxu0 0.0
        %2512 = vmatpush1.msra.mxu0 %v363
        %2513 = vmatprep.subr.mxu0 0.0
        %2514 = vmatpush1.msra.mxu0 %v364
        %2515 = vmatprep.subr.mxu0 0.0
        %2516 = vmatpush1.msra.mxu0 %v365
        %2517 = vmatprep.subr.mxu0 0.0
        %2518 = vmatpush1.msra.mxu0 %v366
        %2519 = vmatprep.subr.mxu0 0.0
        %2520 = vmatpush1.msra.mxu0 %v367
        %2521 = vmatprep.subr.mxu0 0.0
        %2522 = vmatpush1.msra.mxu0 %v368
        %2523 = vmatprep.subr.mxu0 0.0
        %2524 = vmatpush1.msra.mxu0 %v369
        %2525 = vmatprep.subr.mxu0 0.0
        %2526 = vmatpush1.msra.mxu0 %v370
        %2527 = vmatprep.subr.mxu0 0.0
        %2528 = vmatpush1.msra.mxu0 %v371
        %2529 = vmatprep.subr.mxu0 0.0
        %2530 = vmatpush1.msra.mxu0 %v372
        %2531 = vmatprep.subr.mxu0 0.0
        %2532 = vmatpush1.msra.mxu0 %v373
        %2533 = vmatprep.subr.mxu0 0.0
        %2534 = vmatpush1.msra.mxu0 %v374
        %2535 = vmatprep.subr.mxu0 0.0
        %2536 = vmatpush1.msra.mxu0 %v375
        %2537 = vmatprep.subr.mxu0 0.0
        %2538 = vmatpush1.msra.mxu0 %v376
        %2539 = vmatprep.subr.mxu0 0.0
        %2540 = vmatpush1.msra.mxu0 %v377
        %2541 = vmatprep.subr.mxu0 0.0
        %2542 = vmatpush1.msra.mxu0 %v378
        %2543 = vmatprep.subr.mxu0 0.0
        %2544 = vmatpush1.msra.mxu0 %v379
        %2545 = vmatprep.subr.mxu0 0.0
        %2546 = vmatpush1.msra.mxu0 %v380
        %2547 = vmatprep.subr.mxu0 0.0
        %2548 = vmatpush1.msra.mxu0 %v381
        %2549 = vmatprep.subr.mxu0 0.0
        %2550 = vmatpush1.msra.mxu0 %v382
        %2551 = vmatprep.subr.mxu0 0.0
        %2552 = vmatpush1.msra.mxu0 %v383
        %2553 = vmatprep.subr.mxu0 0.0
        %2554 = vmatpush1.msra.mxu0 %v384
        %2555 = vmatprep.subr.mxu0 0.0
        %2556 = vmatpush1.msra.mxu0 %v385
        %2557 = vmatprep.mubr.f32.mxu0 %v1982
        %2558 = vmatmul.mubr.f32.gmra.mrb[0].mxu0 %v1981
        %v2559 = vpop.f32.mrb[0].mxu0
        %v2560 = vadd.f32 0.0, %v2559
        %v2561 = vpop.f32.mrb[0].mxu0
        %2562 = vmatprep.mubr.f32.mxu0 %v1986
        %2563 = vmatmul.mubr.f32.gmra.mrb[0].mxu0 %v1985
        %v2564 = vpop.f32.mrb[0].mxu0
        %v2565 = vadd.f32 0.0, %v2564
        %v2566 = vpop.f32.mrb[0].mxu0
        %2567 = vmatprep.mubr.f32.mxu0 %v1990
        %2568 = vmatmul.mubr.f32.gmra.mrb[0].mxu0 %v1989
        %v2569 = vpop.f32.mrb[0].mxu0
        %v2570 = vadd.f32 0.0, %v2569
        %v2571 = vpop.f32.mrb[0].mxu0
        %2572 = vmatprep.mubr.f32.mxu0 %v1994
        %2573 = vmatmul.mubr.f32.gmra.mrb[0].mxu0 %v1993
        %v2574 = vpop.f32.mrb[0].mxu0
        %v2575 = vadd.f32 0.0, %v2574
        %v2576 = vpop.f32.mrb[0].mxu0
        %2577 = vmatprep.mubr.f32.mxu0 %v1998
        %2578 = vmatmul.mubr.f32.gmra.mrb[0].mxu0 %v1997
        %v2579 = vpop.f32.mrb[0].mxu0
        %v2580 = vadd.f32 0.0, %v2579
        %v2581 = vpop.f32.mrb[0].mxu0
        %2582 = vmatprep.mubr.f32.mxu0 %v2002
        %2583 = vmatmul.mubr.f32.gmra.mrb[0].mxu0 %v2001
        %v2584 = vpop.f32.mrb[0].mxu0
        %v2585 = vadd.f32 0.0, %v2584
        %v2586 = vpop.f32.mrb[0].mxu0
        %2587 = vmatprep.mubr.f32.mxu0 %v2006
        %2588 = vmatmul.mubr.f32.gmra.mrb[0].mxu0 %v2005
        %v2589 = vpop.f32.mrb[0].mxu0
        %v2590 = vadd.f32 0.0, %v2589
        %v2591 = vpop.f32.mrb[0].mxu0
        %2592 = vmatprep.mubr.f32.mxu0 %v2010
        %2593 = vmatmul.mubr.f32.gmra.mrb[0].mxu0 %v2009
        %v2594 = vpop.f32.mrb[0].mxu0
        %v2595 = vadd.f32 0.0, %v2594
        %v2596 = vpop.f32.mrb[0].mxu0
        %2597 = vmatprep.mubr.f32.mxu0 %v2014
        %2598 = vmatmul.mubr.f32.gmra.mrb[0].mxu0 %v2013
        %v2599 = vpop.f32.mrb[0].mxu0
        %v2600 = vadd.f32 0.0, %v2599
        %v2601 = vpop.f32.mrb[0].mxu0
        %2602 = vmatprep.mubr.f32.mxu0 %v2018
        %2603 = vmatmul.mubr.f32.gmra.mrb[0].mxu0 %v2017
        %v2604 = vpop.f32.mrb[0].mxu0
        %v2605 = vadd.f32 0.0, %v2604
        %v2606 = vpop.f32.mrb[0].mxu0
        %2607 = vmatprep.mubr.f32.mxu0 %v2022
        %2608 = vmatmul.mubr.f32.gmra.mrb[0].mxu0 %v2021
        %v2609 = vpop.f32.mrb[0].mxu0
        %v2610 = vadd.f32 0.0, %v2609
        %v2611 = vpop.f32.mrb[0].mxu0
        %2612 = vmatprep.mubr.f32.mxu0 %v2026
        %2613 = vmatmul.mubr.f32.gmra.mrb[0].mxu0 %v2025
        %v2614 = vpop.f32.mrb[0].mxu0
        %v2615 = vadd.f32 0.0, %v2614
        %v2616 = vpop.f32.mrb[0].mxu0
        %2617 = vmatprep.mubr.f32.mxu0 %v2030
        %2618 = vmatmul.mubr.f32.gmra.mrb[0].mxu0 %v2029
        %v2619 = vpop.f32.mrb[0].mxu0
        %v2620 = vadd.f32 0.0, %v2619
        %v2621 = vpop.f32.mrb[0].mxu0
        %2622 = vmatprep.mubr.f32.mxu0 %v2034
        %2623 = vmatmul.mubr.f32.gmra.mrb[0].mxu0 %v2033
        %v2624 = vpop.f32.mrb[0].mxu0
        %v2625 = vadd.f32 0.0, %v2624
        %v2626 = vpop.f32.mrb[0].mxu0
        %2627 = vmatprep.mubr.f32.mxu0 %v2038
        %2628 = vmatmul.mubr.f32.gmra.mrb[0].mxu0 %v2037
        %v2629 = vpop.f32.mrb[0].mxu0
        %v2630 = vadd.f32 0.0, %v2629
        %v2631 = vpop.f32.mrb[0].mxu0
        %2632 = vmatprep.mubr.f32.mxu0 %v2042
        %2633 = vmatmul.mubr.f32.gmra.mrb[0].mxu0 %v2041
        %v2634 = vpop.f32.mrb[0].mxu0
        %v2635 = vadd.f32 0.0, %v2634
        %v2636 = vpop.f32.mrb[0].mxu0
        %2637 = vmatprep.mubr.f32.mxu0 %v2046
        %2638 = vmatmul.mubr.f32.gmra.mrb[0].mxu0 %v2045
        %v2639 = vpop.f32.mrb[0].mxu0
        %v2640 = vadd.f32 0.0, %v2639
        %v2641 = vpop.f32.mrb[0].mxu0
        %2642 = vmatprep.mubr.f32.mxu0 %v2050
        %2643 = vmatmul.mubr.f32.gmra.mrb[0].mxu0 %v2049
        %v2644 = vpop.f32.mrb[0].mxu0
        %v2645 = vadd.f32 0.0, %v2644
        %v2646 = vpop.f32.mrb[0].mxu0
        %2647 = vmatprep.mubr.f32.mxu0 %v2054
        %2648 = vmatmul.mubr.f32.gmra.mrb[0].mxu0 %v2053
        %v2649 = vpop.f32.mrb[0].mxu0
        %v2650 = vadd.f32 0.0, %v2649
        %v2651 = vpop.f32.mrb[0].mxu0
        %2652 = vmatprep.mubr.f32.mxu0 %v2058
        %2653 = vmatmul.mubr.f32.gmra.mrb[0].mxu0 %v2057
        %v2654 = vpop.f32.mrb[0].mxu0
        %v2655 = vadd.f32 0.0, %v2654
        %v2656 = vpop.f32.mrb[0].mxu0
        %2657 = vmatprep.mubr.f32.mxu0 %v2062
        %2658 = vmatmul.mubr.f32.gmra.mrb[0].mxu0 %v2061
        %v2659 = vpop.f32.mrb[0].mxu0
        %v2660 = vadd.f32 0.0, %v2659
        %v2661 = vpop.f32.mrb[0].mxu0
        %2662 = vmatprep.mubr.f32.mxu0 %v2066
        %2663 = vmatmul.mubr.f32.gmra.mrb[0].mxu0 %v2065
        %v2664 = vpop.f32.mrb[0].mxu0
        %v2665 = vadd.f32 0.0, %v2664
        %v2666 = vpop.f32.mrb[0].mxu0
        %2667 = vmatprep.mubr.f32.mxu0 %v2070
        %2668 = vmatmul.mubr.f32.gmra.mrb[0].mxu0 %v2069
        %v2669 = vpop.f32.mrb[0].mxu0
        %v2670 = vadd.f32 0.0, %v2669
        %v2671 = vpop.f32.mrb[0].mxu0
        %2672 = vmatprep.mubr.f32.mxu0 %v2074
        %2673 = vmatmul.mubr.f32.gmra.mrb[0].mxu0 %v2073
        %v2674 = vpop.f32.mrb[0].mxu0
        %v2675 = vadd.f32 0.0, %v2674
        %v2676 = vpop.f32.mrb[0].mxu0
        %2677 = vmatprep.mubr.f32.mxu0 %v2078
        %2678 = vmatmul.mubr.f32.gmra.mrb[0].mxu0 %v2077
        %v2679 = vpop.f32.mrb[0].mxu0
        %v2680 = vadd.f32 0.0, %v2679
        %v2681 = vpop.f32.mrb[0].mxu0
        %2682 = vmatprep.mubr.f32.mxu0 %v2082
        %2683 = vmatmul.mubr.f32.gmra.mrb[0].mxu0 %v2081
        %v2684 = vpop.f32.mrb[0].mxu0
        %v2685 = vadd.f32 0.0, %v2684
        %v2686 = vpop.f32.mrb[0].mxu0
        %2687 = vmatprep.mubr.f32.mxu0 %v2086
        %2688 = vmatmul.mubr.f32.gmra.mrb[0].mxu0 %v2085
        %v2689 = vpop.f32.mrb[0].mxu0
        %v2690 = vadd.f32 0.0, %v2689
        %v2691 = vpop.f32.mrb[0].mxu0
        %2692 = vmatprep.mubr.f32.mxu0 %v2090
        %2693 = vmatmul.mubr.f32.gmra.mrb[0].mxu0 %v2089
        %v2694 = vpop.f32.mrb[0].mxu0
        %v2695 = vadd.f32 0.0, %v2694
        %v2696 = vpop.f32.mrb[0].mxu0
        %2697 = vmatprep.mubr.f32.mxu0 %v2094
        %2698 = vmatmul.mubr.f32.gmra.mrb[0].mxu0 %v2093
        %v2699 = vpop.f32.mrb[0].mxu0
        %v2700 = vadd.f32 0.0, %v2699
        %v2701 = vpop.f32.mrb[0].mxu0
        %2702 = vmatprep.mubr.f32.mxu0 %v2098
        %2703 = vmatmul.mubr.f32.gmra.mrb[0].mxu0 %v2097
        %v2704 = vpop.f32.mrb[0].mxu0
        %v2705 = vadd.f32 0.0, %v2704
        %v2706 = vpop.f32.mrb[0].mxu0
        %2707 = vmatprep.mubr.f32.mxu0 %v2102
        %2708 = vmatmul.mubr.f32.gmra.mrb[0].mxu0 %v2101
        %v2709 = vpop.f32.mrb[0].mxu0
        %v2710 = vadd.f32 0.0, %v2709
        %v2711 = vpop.f32.mrb[0].mxu0
        %2712 = vmatprep.mubr.f32.mxu0 %v2106
        %2713 = vmatmul.mubr.f32.gmra.mrb[0].mxu0 %v2105
        %v2714 = vpop.f32.mrb[0].mxu0
        %v2715 = vadd.f32 0.0, %v2714
        %v2716 = vpop.f32.mrb[0].mxu0
        %2717 = vmatprep.mubr.f32.mxu0 %v2110
        %2718 = vmatmul.mubr.f32.gmra.mrb[0].mxu0 %v2109
        %v2719 = vpop.f32.mrb[0].mxu0
        %v2720 = vadd.f32 0.0, %v2719
        %v2721 = vpop.f32.mrb[0].mxu0
        %2722 = vmatprep.mubr.f32.mxu0 %v2114
        %2723 = vmatmul.mubr.f32.gmra.mrb[0].mxu0 %v2113
        %v2724 = vpop.f32.mrb[0].mxu0
        %v2725 = vadd.f32 0.0, %v2724
        %v2726 = vpop.f32.mrb[0].mxu0
        %2727 = vmatprep.mubr.f32.mxu0 %v2118
        %2728 = vmatmul.mubr.f32.gmra.mrb[0].mxu0 %v2117
        %v2729 = vpop.f32.mrb[0].mxu0
        %v2730 = vadd.f32 0.0, %v2729
        %v2731 = vpop.f32.mrb[0].mxu0
        %2732 = vmatprep.mubr.f32.mxu0 %v2122
        %2733 = vmatmul.mubr.f32.gmra.mrb[0].mxu0 %v2121
        %v2734 = vpop.f32.mrb[0].mxu0
        %v2735 = vadd.f32 0.0, %v2734
        %v2736 = vpop.f32.mrb[0].mxu0
        %2737 = vmatprep.mubr.f32.mxu0 %v2126
        %2738 = vmatmul.mubr.f32.gmra.mrb[0].mxu0 %v2125
        %v2739 = vpop.f32.mrb[0].mxu0
        %v2740 = vadd.f32 0.0, %v2739
        %v2741 = vpop.f32.mrb[0].mxu0
        %2742 = vmatprep.mubr.f32.mxu0 %v2130
        %2743 = vmatmul.mubr.f32.gmra.mrb[0].mxu0 %v2129
        %v2744 = vpop.f32.mrb[0].mxu0
        %v2745 = vadd.f32 0.0, %v2744
        %v2746 = vpop.f32.mrb[0].mxu0
        %2747 = vmatprep.mubr.f32.mxu0 %v2134
        %2748 = vmatmul.mubr.f32.gmra.mrb[0].mxu0 %v2133
        %v2749 = vpop.f32.mrb[0].mxu0
        %v2750 = vadd.f32 0.0, %v2749
        %v2751 = vpop.f32.mrb[0].mxu0
        %2752 = vmatprep.mubr.f32.mxu0 %v2138
        %2753 = vmatmul.mubr.f32.gmra.mrb[0].mxu0 %v2137
        %v2754 = vpop.f32.mrb[0].mxu0
        %v2755 = vadd.f32 0.0, %v2754
        %v2756 = vpop.f32.mrb[0].mxu0
        %2757 = vmatprep.mubr.f32.mxu0 %v2142
        %2758 = vmatmul.mubr.f32.gmra.mrb[0].mxu0 %v2141
        %v2759 = vpop.f32.mrb[0].mxu0
        %v2760 = vadd.f32 0.0, %v2759
        %v2761 = vpop.f32.mrb[0].mxu0
        %2762 = vmatprep.mubr.f32.mxu0 %v2146
        %2763 = vmatmul.mubr.f32.gmra.mrb[0].mxu0 %v2145
        %v2764 = vpop.f32.mrb[0].mxu0
        %v2765 = vadd.f32 0.0, %v2764
        %v2766 = vpop.f32.mrb[0].mxu0
        %2767 = vmatprep.mubr.f32.mxu0 %v2150
        %2768 = vmatmul.mubr.f32.gmra.mrb[0].mxu0 %v2149
        %v2769 = vpop.f32.mrb[0].mxu0
        %v2770 = vadd.f32 0.0, %v2769
        %v2771 = vpop.f32.mrb[0].mxu0
        %2772 = vmatprep.mubr.f32.mxu0 %v2154
        %2773 = vmatmul.mubr.f32.gmra.mrb[0].mxu0 %v2153
        %v2774 = vpop.f32.mrb[0].mxu0
        %v2775 = vadd.f32 0.0, %v2774
        %v2776 = vpop.f32.mrb[0].mxu0
        %2777 = vmatprep.mubr.f32.mxu0 %v2158
        %2778 = vmatmul.mubr.f32.gmra.mrb[0].mxu0 %v2157
        %v2779 = vpop.f32.mrb[0].mxu0
        %v2780 = vadd.f32 0.0, %v2779
        %v2781 = vpop.f32.mrb[0].mxu0
        %2782 = vmatprep.mubr.f32.mxu0 %v2162
        %2783 = vmatmul.mubr.f32.gmra.mrb[0].mxu0 %v2161
        %v2784 = vpop.f32.mrb[0].mxu0
        %v2785 = vadd.f32 0.0, %v2784
        %v2786 = vpop.f32.mrb[0].mxu0
        %2787 = vmatprep.mubr.f32.mxu0 %v2166
        %2788 = vmatmul.mubr.f32.gmra.mrb[0].mxu0 %v2165
        %v2789 = vpop.f32.mrb[0].mxu0
        %v2790 = vadd.f32 0.0, %v2789
        %v2791 = vpop.f32.mrb[0].mxu0
        %2792 = vmatprep.mubr.f32.mxu0 %v2170
        %2793 = vmatmul.mubr.f32.gmra.mrb[0].mxu0 %v2169
        %v2794 = vpop.f32.mrb[0].mxu0
        %v2795 = vadd.f32 0.0, %v2794
        %v2796 = vpop.f32.mrb[0].mxu0
        %2797 = vmatprep.mubr.f32.mxu0 %v2174
        %2798 = vmatmul.mubr.f32.gmra.mrb[0].mxu0 %v2173
        %v2799 = vpop.f32.mrb[0].mxu0
        %v2800 = vadd.f32 0.0, %v2799
        %v2801 = vpop.f32.mrb[0].mxu0
        %2802 = vmatprep.mubr.f32.mxu0 %v2178
        %2803 = vmatmul.mubr.f32.gmra.mrb[0].mxu0 %v2177
        %v2804 = vpop.f32.mrb[0].mxu0
        %v2805 = vadd.f32 0.0, %v2804
        %v2806 = vpop.f32.mrb[0].mxu0
        %2807 = vmatprep.mubr.f32.mxu0 %v2182
        %2808 = vmatmul.mubr.f32.gmra.mrb[0].mxu0 %v2181
        %v2809 = vpop.f32.mrb[0].mxu0
        %v2810 = vadd.f32 0.0, %v2809
        %v2811 = vpop.f32.mrb[0].mxu0
        %2812 = vmatprep.mubr.f32.mxu0 %v2186
        %2813 = vmatmul.mubr.f32.gmra.mrb[0].mxu0 %v2185
        %v2814 = vpop.f32.mrb[0].mxu0
        %v2815 = vadd.f32 0.0, %v2814
        %v2816 = vpop.f32.mrb[0].mxu0
        %2817 = vmatprep.mubr.f32.mxu0 %v2190
        %2818 = vmatmul.mubr.f32.gmra.mrb[0].mxu0 %v2189
        %v2819 = vpop.f32.mrb[0].mxu0
        %v2820 = vadd.f32 0.0, %v2819
        %v2821 = vpop.f32.mrb[0].mxu0
        %2822 = vmatprep.mubr.f32.mxu0 %v2194
        %2823 = vmatmul.mubr.f32.gmra.mrb[0].mxu0 %v2193
        %v2824 = vpop.f32.mrb[0].mxu0
        %v2825 = vadd.f32 0.0, %v2824
        %v2826 = vpop.f32.mrb[0].mxu0
        %2827 = vmatprep.mubr.f32.mxu0 %v2198
        %2828 = vmatmul.mubr.f32.gmra.mrb[0].mxu0 %v2197
        %v2829 = vpop.f32.mrb[0].mxu0
        %v2830 = vadd.f32 0.0, %v2829
        %v2831 = vpop.f32.mrb[0].mxu0
        %2832 = vmatprep.mubr.f32.mxu0 %v2202
        %2833 = vmatmul.mubr.f32.gmra.mrb[0].mxu0 %v2201
        %v2834 = vpop.f32.mrb[0].mxu0
        %v2835 = vadd.f32 0.0, %v2834
        %v2836 = vpop.f32.mrb[0].mxu0
        %2837 = vmatprep.mubr.f32.mxu0 %v2206
        %2838 = vmatmul.mubr.f32.gmra.mrb[0].mxu0 %v2205
        %v2839 = vpop.f32.mrb[0].mxu0
        %v2840 = vadd.f32 0.0, %v2839
        %v2841 = vpop.f32.mrb[0].mxu0
        %2842 = vmatprep.mubr.f32.mxu0 %v2210
        %2843 = vmatmul.mubr.f32.gmra.mrb[0].mxu0 %v2209
        %v2844 = vpop.f32.mrb[0].mxu0
        %v2845 = vadd.f32 0.0, %v2844
        %v2846 = vpop.f32.mrb[0].mxu0
        %2847 = vmatprep.mubr.f32.mxu0 %v2214
        %2848 = vmatmul.mubr.f32.gmra.mrb[0].mxu0 %v2213
        %v2849 = vpop.f32.mrb[0].mxu0
        %v2850 = vadd.f32 0.0, %v2849
        %v2851 = vpop.f32.mrb[0].mxu0
        %2852 = vmatprep.mubr.f32.mxu0 %v2218
        %2853 = vmatmul.mubr.f32.gmra.mrb[0].mxu0 %v2217
        %v2854 = vpop.f32.mrb[0].mxu0
        %v2855 = vadd.f32 0.0, %v2854
        %v2856 = vpop.f32.mrb[0].mxu0
        %2857 = vmatprep.mubr.f32.mxu0 %v2222
        %2858 = vmatmul.mubr.f32.gmra.mrb[0].mxu0 %v2221
        %v2859 = vpop.f32.mrb[0].mxu0
        %v2860 = vadd.f32 0.0, %v2859
        %v2861 = vpop.f32.mrb[0].mxu0
        %2862 = vmatprep.mubr.f32.mxu0 %v2226
        %2863 = vmatmul.mubr.f32.gmra.mrb[0].mxu0 %v2225
        %v2864 = vpop.f32.mrb[0].mxu0
        %v2865 = vadd.f32 0.0, %v2864
        %v2866 = vpop.f32.mrb[0].mxu0
        %2867 = vmatprep.mubr.f32.mxu0 %v2230
        %2868 = vmatmul.mubr.f32.gmra.mrb[0].mxu0 %v2229
        %v2869 = vpop.f32.mrb[0].mxu0
        %v2870 = vadd.f32 0.0, %v2869
        %v2871 = vpop.f32.mrb[0].mxu0
        %2872 = vmatprep.mubr.f32.mxu0 %v2234
        %2873 = vmatmul.mubr.f32.gmra.mrb[0].mxu0 %v2233
        %v2874 = vpop.f32.mrb[0].mxu0
        %v2875 = vadd.f32 0.0, %v2874
        %v2876 = vpop.f32.mrb[0].mxu0
        %2877 = vmatprep.mubr.f32.mxu0 %v2238
        %2878 = vmatmul.mubr.f32.gmra.mrb[0].mxu0 %v2237
        %v2879 = vpop.f32.mrb[0].mxu0
        %v2880 = vadd.f32 0.0, %v2879
        %v2881 = vpop.f32.mrb[0].mxu0
        %2882 = vmatprep.mubr.f32.mxu0 %v2242
        %2883 = vmatmul.mubr.f32.gmra.mrb[0].mxu0 %v2241
        %v2884 = vpop.f32.mrb[0].mxu0
        %v2885 = vadd.f32 0.0, %v2884
        %v2886 = vpop.f32.mrb[0].mxu0
        %2887 = vmatprep.mubr.f32.mxu0 %v2246
        %2888 = vmatmul.mubr.f32.gmra.mrb[0].mxu0 %v2245
        %v2889 = vpop.f32.mrb[0].mxu0
        %v2890 = vadd.f32 0.0, %v2889
        %v2891 = vpop.f32.mrb[0].mxu0
        %2892 = vmatprep.mubr.f32.mxu0 %v2250
        %2893 = vmatmul.mubr.f32.gmra.mrb[0].mxu0 %v2249
        %v2894 = vpop.f32.mrb[0].mxu0
        %v2895 = vadd.f32 0.0, %v2894
        %v2896 = vpop.f32.mrb[0].mxu0
        %2897 = vmatprep.mubr.f32.mxu0 %v2254
        %2898 = vmatmul.mubr.f32.gmra.mrb[0].mxu0 %v2253
        %v2899 = vpop.f32.mrb[0].mxu0
        %v2900 = vadd.f32 0.0, %v2899
        %v2901 = vpop.f32.mrb[0].mxu0
        %2902 = vmatprep.mubr.f32.mxu0 %v2258
        %2903 = vmatmul.mubr.f32.gmra.mrb[0].mxu0 %v2257
        %v2904 = vpop.f32.mrb[0].mxu0
        %v2905 = vadd.f32 0.0, %v2904
        %v2906 = vpop.f32.mrb[0].mxu0
        %2907 = vmatprep.mubr.f32.mxu0 %v2262
        %2908 = vmatmul.mubr.f32.gmra.mrb[0].mxu0 %v2261
        %v2909 = vpop.f32.mrb[0].mxu0
        %v2910 = vadd.f32 0.0, %v2909
        %v2911 = vpop.f32.mrb[0].mxu0
        %2912 = vmatprep.mubr.f32.mxu0 %v2266
        %2913 = vmatmul.mubr.f32.gmra.mrb[0].mxu0 %v2265
        %v2914 = vpop.f32.mrb[0].mxu0
        %v2915 = vadd.f32 0.0, %v2914
        %v2916 = vpop.f32.mrb[0].mxu0
        %2917 = vmatprep.mubr.f32.mxu0 %v2270
        %2918 = vmatmul.mubr.f32.gmra.mrb[0].mxu0 %v2269
        %v2919 = vpop.f32.mrb[0].mxu0
        %v2920 = vadd.f32 0.0, %v2919
        %v2921 = vpop.f32.mrb[0].mxu0
        %2922 = vmatprep.mubr.f32.mxu0 %v2274
        %2923 = vmatmul.mubr.f32.gmra.mrb[0].mxu0 %v2273
        %v2924 = vpop.f32.mrb[0].mxu0
        %v2925 = vadd.f32 0.0, %v2924
        %v2926 = vpop.f32.mrb[0].mxu0
        %2927 = vmatprep.mubr.f32.mxu0 %v2278
        %2928 = vmatmul.mubr.f32.gmra.mrb[0].mxu0 %v2277
        %v2929 = vpop.f32.mrb[0].mxu0
        %v2930 = vadd.f32 0.0, %v2929
        %v2931 = vpop.f32.mrb[0].mxu0
        %2932 = vmatprep.mubr.f32.mxu0 %v2282
        %2933 = vmatmul.mubr.f32.gmra.mrb[0].mxu0 %v2281
        %v2934 = vpop.f32.mrb[0].mxu0
        %v2935 = vadd.f32 0.0, %v2934
        %v2936 = vpop.f32.mrb[0].mxu0
        %2937 = vmatprep.mubr.f32.mxu0 %v2286
        %2938 = vmatmul.mubr.f32.gmra.mrb[0].mxu0 %v2285
        %v2939 = vpop.f32.mrb[0].mxu0
        %v2940 = vadd.f32 0.0, %v2939
        %v2941 = vpop.f32.mrb[0].mxu0
        %2942 = vmatprep.mubr.f32.mxu0 %v2290
        %2943 = vmatmul.mubr.f32.gmra.mrb[0].mxu0 %v2289
        %v2944 = vpop.f32.mrb[0].mxu0
        %v2945 = vadd.f32 0.0, %v2944
        %v2946 = vpop.f32.mrb[0].mxu0
        %2947 = vmatprep.mubr.f32.mxu0 %v2294
        %2948 = vmatmul.mubr.f32.gmra.mrb[0].mxu0 %v2293
        %v2949 = vpop.f32.mrb[0].mxu0
        %v2950 = vadd.f32 0.0, %v2949
        %v2951 = vpop.f32.mrb[0].mxu0
        %2952 = vmatprep.mubr.f32.mxu0 %v2298
        %2953 = vmatmul.mubr.f32.gmra.mrb[0].mxu0 %v2297
        %v2954 = vpop.f32.mrb[0].mxu0
        %v2955 = vadd.f32 0.0, %v2954
        %v2956 = vpop.f32.mrb[0].mxu0
        %2957 = vmatprep.mubr.f32.mxu0 %v2302
        %2958 = vmatmul.mubr.f32.gmra.mrb[0].mxu0 %v2301
        %v2959 = vpop.f32.mrb[0].mxu0
        %v2960 = vadd.f32 0.0, %v2959
        %v2961 = vpop.f32.mrb[0].mxu0
        %2962 = vmatprep.mubr.f32.mxu0 %v2306
        %2963 = vmatmul.mubr.f32.gmra.mrb[0].mxu0 %v2305
        %v2964 = vpop.f32.mrb[0].mxu0
        %v2965 = vadd.f32 0.0, %v2964
        %v2966 = vpop.f32.mrb[0].mxu0
        %2967 = vmatprep.mubr.f32.mxu0 %v2310
        %2968 = vmatmul.mubr.f32.gmra.mrb[0].mxu0 %v2309
        %v2969 = vpop.f32.mrb[0].mxu0
        %v2970 = vadd.f32 0.0, %v2969
        %v2971 = vpop.f32.mrb[0].mxu0
        %2972 = vmatprep.mubr.f32.mxu0 %v2314
        %2973 = vmatmul.mubr.f32.gmra.mrb[0].mxu0 %v2313
        %v2974 = vpop.f32.mrb[0].mxu0
        %v2975 = vadd.f32 0.0, %v2974
        %v2976 = vpop.f32.mrb[0].mxu0
        %2977 = vmatprep.mubr.f32.mxu0 %v2318
        %2978 = vmatmul.mubr.f32.gmra.mrb[0].mxu0 %v2317
        %v2979 = vpop.f32.mrb[0].mxu0
        %v2980 = vadd.f32 0.0, %v2979
        %v2981 = vpop.f32.mrb[0].mxu0
        %2982 = vmatprep.mubr.f32.mxu0 %v2322
        %2983 = vmatmul.mubr.f32.gmra.mrb[0].mxu0 %v2321
        %v2984 = vpop.f32.mrb[0].mxu0
        %v2985 = vadd.f32 0.0, %v2984
        %v2986 = vpop.f32.mrb[0].mxu0
        %2987 = vmatprep.mubr.f32.mxu0 %v2326
        %2988 = vmatmul.mubr.f32.gmra.mrb[0].mxu0 %v2325
        %v2989 = vpop.f32.mrb[0].mxu0
        %v2990 = vadd.f32 0.0, %v2989
        %v2991 = vpop.f32.mrb[0].mxu0
        %2992 = vmatprep.mubr.f32.mxu0 %v2330
        %2993 = vmatmul.mubr.f32.gmra.mrb[0].mxu0 %v2329
        %v2994 = vpop.f32.mrb[0].mxu0
        %v2995 = vadd.f32 0.0, %v2994
        %v2996 = vpop.f32.mrb[0].mxu0
        %2997 = vmatprep.mubr.f32.mxu0 %v2334
        %2998 = vmatmul.mubr.f32.gmra.mrb[0].mxu0 %v2333
        %v2999 = vpop.f32.mrb[0].mxu0
        %v3000 = vadd.f32 0.0, %v2999
        %v3001 = vpop.f32.mrb[0].mxu0
        %3002 = vmatprep.mubr.f32.mxu0 %v2338
        %3003 = vmatmul.mubr.f32.gmra.mrb[0].mxu0 %v2337
        %v3004 = vpop.f32.mrb[0].mxu0
        %v3005 = vadd.f32 0.0, %v3004
        %v3006 = vpop.f32.mrb[0].mxu0
        %3007 = vmatprep.mubr.f32.mxu0 %v2342
        %3008 = vmatmul.mubr.f32.gmra.mrb[0].mxu0 %v2341
        %v3009 = vpop.f32.mrb[0].mxu0
        %v3010 = vadd.f32 0.0, %v3009
        %v3011 = vpop.f32.mrb[0].mxu0
        %3012 = vmatprep.mubr.f32.mxu0 %v2346
        %3013 = vmatmul.mubr.f32.gmra.mrb[0].mxu0 %v2345
        %v3014 = vpop.f32.mrb[0].mxu0
        %v3015 = vadd.f32 0.0, %v3014
        %v3016 = vpop.f32.mrb[0].mxu0
        %3017 = vmatprep.mubr.f32.mxu0 %v2350
        %3018 = vmatmul.mubr.f32.gmra.mrb[0].mxu0 %v2349
        %v3019 = vpop.f32.mrb[0].mxu0
        %v3020 = vadd.f32 0.0, %v3019
        %v3021 = vpop.f32.mrb[0].mxu0
        %3022 = vmatprep.mubr.f32.mxu0 %v2354
        %3023 = vmatmul.mubr.f32.gmra.mrb[0].mxu0 %v2353
        %v3024 = vpop.f32.mrb[0].mxu0
        %v3025 = vadd.f32 0.0, %v3024
        %v3026 = vpop.f32.mrb[0].mxu0
        %3027 = vmatprep.mubr.f32.mxu0 %v2358
        %3028 = vmatmul.mubr.f32.gmra.mrb[0].mxu0 %v2357
        %v3029 = vpop.f32.mrb[0].mxu0
        %v3030 = vadd.f32 0.0, %v3029
        %v3031 = vpop.f32.mrb[0].mxu0
        %3032 = vmatprep.mubr.f32.mxu0 %v2362
        %3033 = vmatmul.mubr.f32.gmra.mrb[0].mxu0 %v2361
        %v3034 = vpop.f32.mrb[0].mxu0
        %v3035 = vadd.f32 0.0, %v3034
        %v3036 = vpop.f32.mrb[0].mxu0
        %3037 = vmatprep.mubr.f32.mxu0 %v2366
        %3038 = vmatmul.mubr.f32.gmra.mrb[0].mxu0 %v2365
        %v3039 = vpop.f32.mrb[0].mxu0
        %v3040 = vadd.f32 0.0, %v3039
        %v3041 = vpop.f32.mrb[0].mxu0
        %3042 = vmatprep.mubr.f32.mxu0 %v2370
        %3043 = vmatmul.mubr.f32.gmra.mrb[0].mxu0 %v2369
        %v3044 = vpop.f32.mrb[0].mxu0
        %v3045 = vadd.f32 0.0, %v3044
        %v3046 = vpop.f32.mrb[0].mxu0
        %3047 = vmatprep.mubr.f32.mxu0 %v2374
        %3048 = vmatmul.mubr.f32.gmra.mrb[0].mxu0 %v2373
        %v3049 = vpop.f32.mrb[0].mxu0
        %v3050 = vadd.f32 0.0, %v3049
        %v3051 = vpop.f32.mrb[0].mxu0
        %3052 = vmatprep.mubr.f32.mxu0 %v2378
        %3053 = vmatmul.mubr.f32.gmra.mrb[0].mxu0 %v2377
        %v3054 = vpop.f32.mrb[0].mxu0
        %v3055 = vadd.f32 0.0, %v3054
        %v3056 = vpop.f32.mrb[0].mxu0
        %3057 = vmatprep.mubr.f32.mxu0 %v2382
        %3058 = vmatmul.mubr.f32.gmra.mrb[0].mxu0 %v2381
        %v3059 = vpop.f32.mrb[0].mxu0
        %v3060 = vadd.f32 0.0, %v3059
        %v3061 = vpop.f32.mrb[0].mxu0
        %3062 = vmatprep.mubr.f32.mxu0 %v2386
        %3063 = vmatmul.mubr.f32.gmra.mrb[0].mxu0 %v2385
        %v3064 = vpop.f32.mrb[0].mxu0
        %v3065 = vadd.f32 0.0, %v3064
        %v3066 = vpop.f32.mrb[0].mxu0
        %3067 = vmatprep.mubr.f32.mxu0 %v2390
        %3068 = vmatmul.mubr.f32.gmra.mrb[0].mxu0 %v2389
        %v3069 = vpop.f32.mrb[0].mxu0
        %v3070 = vadd.f32 0.0, %v3069
        %v3071 = vpop.f32.mrb[0].mxu0
        %3072 = vmatprep.mubr.f32.mxu0 %v2394
        %3073 = vmatmul.mubr.f32.gmra.mrb[0].mxu0 %v2393
        %v3074 = vpop.f32.mrb[0].mxu0
        %v3075 = vadd.f32 0.0, %v3074
        %v3076 = vpop.f32.mrb[0].mxu0
        %3077 = vmatprep.mubr.f32.mxu0 %v2398
        %3078 = vmatmul.mubr.f32.gmra.mrb[0].mxu0 %v2397
        %v3079 = vpop.f32.mrb[0].mxu0
        %v3080 = vadd.f32 0.0, %v3079
        %v3081 = vpop.f32.mrb[0].mxu0
        %3082 = vmatprep.mubr.f32.mxu0 %v2402
        %3083 = vmatmul.mubr.f32.gmra.mrb[0].mxu0 %v2401
        %v3084 = vpop.f32.mrb[0].mxu0
        %v3085 = vadd.f32 0.0, %v3084
        %v3086 = vpop.f32.mrb[0].mxu0
        %3087 = vmatprep.mubr.f32.mxu0 %v2406
        %3088 = vmatmul.mubr.f32.gmra.mrb[0].mxu0 %v2405
        %v3089 = vpop.f32.mrb[0].mxu0
        %v3090 = vadd.f32 0.0, %v3089
        %v3091 = vpop.f32.mrb[0].mxu0
        %3092 = vmatprep.mubr.f32.mxu0 %v2410
        %3093 = vmatmul.mubr.f32.gmra.mrb[0].mxu0 %v2409
        %v3094 = vpop.f32.mrb[0].mxu0
        %v3095 = vadd.f32 0.0, %v3094
        %v3096 = vpop.f32.mrb[0].mxu0
        %3097 = vmatprep.mubr.f32.mxu0 %v2414
        %3098 = vmatmul.mubr.f32.gmra.mrb[0].mxu0 %v2413
        %v3099 = vpop.f32.mrb[0].mxu0
        %v3100 = vadd.f32 0.0, %v3099
        %v3101 = vpop.f32.mrb[0].mxu0
        %3102 = vmatprep.mubr.f32.mxu0 %v2418
        %3103 = vmatmul.mubr.f32.gmra.mrb[0].mxu0 %v2417
        %v3104 = vpop.f32.mrb[0].mxu0
        %v3105 = vadd.f32 0.0, %v3104
        %v3106 = vpop.f32.mrb[0].mxu0
        %3107 = vmatprep.mubr.f32.mxu0 %v2422
        %3108 = vmatmul.mubr.f32.gmra.mrb[0].mxu0 %v2421
        %v3109 = vpop.f32.mrb[0].mxu0
        %v3110 = vadd.f32 0.0, %v3109
        %v3111 = vpop.f32.mrb[0].mxu0
        %3112 = vmatprep.mubr.f32.mxu0 %v2426
        %3113 = vmatmul.mubr.f32.gmra.mrb[0].mxu0 %v2425
        %v3114 = vpop.f32.mrb[0].mxu0
        %v3115 = vadd.f32 0.0, %v3114
        %v3116 = vpop.f32.mrb[0].mxu0
        %3117 = vmatprep.mubr.f32.mxu0 %v2430
        %3118 = vmatmul.mubr.f32.gmra.mrb[0].mxu0 %v2429
        %v3119 = vpop.f32.mrb[0].mxu0
        %v3120 = vadd.f32 0.0, %v3119
        %v3121 = vpop.f32.mrb[0].mxu0
        %3122 = vmatprep.mubr.f32.mxu0 %v2434
        %3123 = vmatmul.mubr.f32.gmra.mrb[0].mxu0 %v2433
        %v3124 = vpop.f32.mrb[0].mxu0
        %v3125 = vadd.f32 0.0, %v3124
        %v3126 = vpop.f32.mrb[0].mxu0
        %3127 = vmatprep.mubr.f32.mxu0 %v2438
        %3128 = vmatmul.mubr.f32.gmra.mrb[0].mxu0 %v2437
        %v3129 = vpop.f32.mrb[0].mxu0
        %v3130 = vadd.f32 0.0, %v3129
        %v3131 = vpop.f32.mrb[0].mxu0
        %3132 = vmatprep.mubr.f32.mxu0 %v2442
        %3133 = vmatmul.mubr.f32.gmra.mrb[0].mxu0 %v2441
        %v3134 = vpop.f32.mrb[0].mxu0
        %v3135 = vadd.f32 0.0, %v3134
        %v3136 = vpop.f32.mrb[0].mxu0
        %3137 = vmatprep.mubr.f32.mxu0 %v2446
        %3138 = vmatmul.mubr.f32.gmra.mrb[0].mxu0 %v2445
        %v3139 = vpop.f32.mrb[0].mxu0
        %v3140 = vadd.f32 0.0, %v3139
        %v3141 = vpop.f32.mrb[0].mxu0
        %3142 = vmatprep.mubr.f32.mxu0 %v2450
        %3143 = vmatmul.mubr.f32.gmra.mrb[0].mxu0 %v2449
        %v3144 = vpop.f32.mrb[0].mxu0
        %v3145 = vadd.f32 0.0, %v3144
        %v3146 = vpop.f32.mrb[0].mxu0
        %3147 = vmatprep.mubr.f32.mxu0 %v2454
        %3148 = vmatmul.mubr.f32.gmra.mrb[0].mxu0 %v2453
        %v3149 = vpop.f32.mrb[0].mxu0
        %v3150 = vadd.f32 0.0, %v3149
        %v3151 = vpop.f32.mrb[0].mxu0
        %3152 = vmatprep.mubr.f32.mxu0 %v2458
        %3153 = vmatmul.mubr.f32.gmra.mrb[0].mxu0 %v2457
        %v3154 = vpop.f32.mrb[0].mxu0
        %v3155 = vadd.f32 0.0, %v3154
        %v3156 = vpop.f32.mrb[0].mxu0
        %3157 = vmatprep.mubr.f32.mxu0 %v2462
        %3158 = vmatmul.mubr.f32.gmra.mrb[0].mxu0 %v2461
        %v3159 = vpop.f32.mrb[0].mxu0
        %v3160 = vadd.f32 0.0, %v3159
        %v3161 = vpop.f32.mrb[0].mxu0
        %3162 = vmatprep.mubr.f32.mxu0 %v2466
        %3163 = vmatmul.mubr.f32.gmra.mrb[0].mxu0 %v2465
        %v3164 = vpop.f32.mrb[0].mxu0
        %v3165 = vadd.f32 0.0, %v3164
        %v3166 = vpop.f32.mrb[0].mxu0
        %3167 = vmatprep.mubr.f32.mxu0 %v2470
        %3168 = vmatmul.mubr.f32.gmra.mrb[0].mxu0 %v2469
        %v3169 = vpop.f32.mrb[0].mxu0
        %v3170 = vadd.f32 0.0, %v3169
        %v3171 = vpop.f32.mrb[0].mxu0
        %3172 = vmatprep.mubr.f32.mxu0 %v2474
        %3173 = vmatmul.mubr.f32.gmra.mrb[0].mxu0 %v2473
        %v3174 = vpop.f32.mrb[0].mxu0
        %v3175 = vadd.f32 0.0, %v3174
        %v3176 = vpop.f32.mrb[0].mxu0
        %3177 = vmatprep.mubr.f32.mxu0 %v2478
        %3178 = vmatmul.mubr.f32.gmra.mrb[0].mxu0 %v2477
        %v3179 = vpop.f32.mrb[0].mxu0
        %v3180 = vadd.f32 0.0, %v3179
        %v3181 = vpop.f32.mrb[0].mxu0
        %3182 = vmatprep.mubr.f32.mxu0 %v2482
        %3183 = vmatmul.mubr.f32.gmra.mrb[0].mxu0 %v2481
        %v3184 = vpop.f32.mrb[0].mxu0
        %v3185 = vadd.f32 0.0, %v3184
        %v3186 = vpop.f32.mrb[0].mxu0
        %3187 = vmatprep.mubr.f32.mxu0 %v2486
        %3188 = vmatmul.mubr.f32.gmra.mrb[0].mxu0 %v2485
        %v3189 = vpop.f32.mrb[0].mxu0
        %v3190 = vadd.f32 0.0, %v3189
        %v3191 = vpop.f32.mrb[0].mxu0
        %3192 = vmatprep.mubr.f32.mxu0 %v2490
        %3193 = vmatmul.mubr.f32.gmra.mrb[0].mxu0 %v2489
        %v3194 = vpop.f32.mrb[0].mxu0
        %v3195 = vadd.f32 0.0, %v3194
        %v3196 = vpop.f32.mrb[0].mxu0
        %3197 = vdwg.mxu0
        %3198 = vmatprep.subr.mxu0 0.0
        %3199 = vmatpush1.msra.mxu0 %v386
        %3200 = vmatprep.subr.mxu0 0.0
        %3201 = vmatpush1.msra.mxu0 %v387
        %3202 = vmatprep.subr.mxu0 0.0
        %3203 = vmatpush1.msra.mxu0 %v388
        %3204 = vmatprep.subr.mxu0 0.0
        %3205 = vmatpush1.msra.mxu0 %v389
        %3206 = vmatprep.subr.mxu0 0.0
        %3207 = vmatpush1.msra.mxu0 %v390
        %3208 = vmatprep.subr.mxu0 0.0
        %3209 = vmatpush1.msra.mxu0 %v391
        %3210 = vmatprep.subr.mxu0 0.0
        %3211 = vmatpush1.msra.mxu0 %v392
        %3212 = vmatprep.subr.mxu0 0.0
        %3213 = vmatpush1.msra.mxu0 %v393
        %3214 = vmatprep.subr.mxu0 0.0
        %3215 = vmatpush1.msra.mxu0 %v394
        %3216 = vmatprep.subr.mxu0 0.0
        %3217 = vmatpush1.msra.mxu0 %v395
        %3218 = vmatprep.subr.mxu0 0.0
        %3219 = vmatpush1.msra.mxu0 %v396
        %3220 = vmatprep.subr.mxu0 0.0
        %3221 = vmatpush1.msra.mxu0 %v397
        %3222 = vmatprep.subr.mxu0 0.0
        %3223 = vmatpush1.msra.mxu0 %v398
        %3224 = vmatprep.subr.mxu0 0.0
        %3225 = vmatpush1.msra.mxu0 %v399
        %3226 = vmatprep.subr.mxu0 0.0
        %3227 = vmatpush1.msra.mxu0 %v400
        %3228 = vmatprep.subr.mxu0 0.0
        %3229 = vmatpush1.msra.mxu0 %v401
        %3230 = vmatprep.subr.mxu0 0.0
        %3231 = vmatpush1.msra.mxu0 %v402
        %3232 = vmatprep.subr.mxu0 0.0
        %3233 = vmatpush1.msra.mxu0 %v403
        %3234 = vmatprep.subr.mxu0 0.0
        %3235 = vmatpush1.msra.mxu0 %v404
        %3236 = vmatprep.subr.mxu0 0.0
        %3237 = vmatpush1.msra.mxu0 %v405
        %3238 = vmatprep.subr.mxu0 0.0
        %3239 = vmatpush1.msra.mxu0 %v406
        %3240 = vmatprep.subr.mxu0 0.0
        %3241 = vmatpush1.msra.mxu0 %v407
        %3242 = vmatprep.subr.mxu0 0.0
        %3243 = vmatpush1.msra.mxu0 %v408
        %3244 = vmatprep.subr.mxu0 0.0
        %3245 = vmatpush1.msra.mxu0 %v409
        %3246 = vmatprep.subr.mxu0 0.0
        %3247 = vmatpush1.msra.mxu0 %v410
        %3248 = vmatprep.subr.mxu0 0.0
        %3249 = vmatpush1.msra.mxu0 %v411
        %3250 = vmatprep.subr.mxu0 0.0
        %3251 = vmatpush1.msra.mxu0 %v412
        %3252 = vmatprep.subr.mxu0 0.0
        %3253 = vmatpush1.msra.mxu0 %v413
        %3254 = vmatprep.subr.mxu0 0.0
        %3255 = vmatpush1.msra.mxu0 %v414
        %3256 = vmatprep.subr.mxu0 0.0
        %3257 = vmatpush1.msra.mxu0 %v415
        %3258 = vmatprep.subr.mxu0 0.0
        %3259 = vmatpush1.msra.mxu0 %v416
        %3260 = vmatprep.subr.mxu0 0.0
        %3261 = vmatpush1.msra.mxu0 %v417
        %3262 = vmatprep.mubr.f32.mxu0 %v1984
        %3263 = vmatmul.mubr.f32.gmra.mrb[0].mxu0 %v1983
        %v3264 = vpop.f32.mrb[0].mxu0
        %v3265 = vadd.f32 %v2560, %v3264
        %v3266 = vpop.f32.mrb[0].mxu0
        %3267 = vmatprep.mubr.f32.mxu0 %v1988
        %3268 = vmatmul.mubr.f32.gmra.mrb[0].mxu0 %v1987
        %v3269 = vpop.f32.mrb[0].mxu0
        %v3270 = vadd.f32 %v2565, %v3269
        %v3271 = vpop.f32.mrb[0].mxu0
        %3272 = vmatprep.mubr.f32.mxu0 %v1992
        %3273 = vmatmul.mubr.f32.gmra.mrb[0].mxu0 %v1991
        %v3274 = vpop.f32.mrb[0].mxu0
        %v3275 = vadd.f32 %v2570, %v3274
        %v3276 = vpop.f32.mrb[0].mxu0
        %3277 = vmatprep.mubr.f32.mxu0 %v1996
        %3278 = vmatmul.mubr.f32.gmra.mrb[0].mxu0 %v1995
        %v3279 = vpop.f32.mrb[0].mxu0
        %v3280 = vadd.f32 %v2575, %v3279
        %v3281 = vpop.f32.mrb[0].mxu0
        %3282 = vmatprep.mubr.f32.mxu0 %v2000
        %3283 = vmatmul.mubr.f32.gmra.mrb[0].mxu0 %v1999
        %v3284 = vpop.f32.mrb[0].mxu0
        %v3285 = vadd.f32 %v2580, %v3284
        %v3286 = vpop.f32.mrb[0].mxu0
        %3287 = vmatprep.mubr.f32.mxu0 %v2004
        %3288 = vmatmul.mubr.f32.gmra.mrb[0].mxu0 %v2003
        %v3289 = vpop.f32.mrb[0].mxu0
        %v3290 = vadd.f32 %v2585, %v3289
        %v3291 = vpop.f32.mrb[0].mxu0
        %3292 = vmatprep.mubr.f32.mxu0 %v2008
        %3293 = vmatmul.mubr.f32.gmra.mrb[0].mxu0 %v2007
        %v3294 = vpop.f32.mrb[0].mxu0
        %v3295 = vadd.f32 %v2590, %v3294
        %v3296 = vpop.f32.mrb[0].mxu0
        %3297 = vmatprep.mubr.f32.mxu0 %v2012
        %3298 = vmatmul.mubr.f32.gmra.mrb[0].mxu0 %v2011
        %v3299 = vpop.f32.mrb[0].mxu0
        %v3300 = vadd.f32 %v2595, %v3299
        %v3301 = vpop.f32.mrb[0].mxu0
        %3302 = vmatprep.mubr.f32.mxu0 %v2016
        %3303 = vmatmul.mubr.f32.gmra.mrb[0].mxu0 %v2015
        %v3304 = vpop.f32.mrb[0].mxu0
        %v3305 = vadd.f32 %v2600, %v3304
        %v3306 = vpop.f32.mrb[0].mxu0
        %3307 = vmatprep.mubr.f32.mxu0 %v2020
        %3308 = vmatmul.mubr.f32.gmra.mrb[0].mxu0 %v2019
        %v3309 = vpop.f32.mrb[0].mxu0
        %v3310 = vadd.f32 %v2605, %v3309
        %v3311 = vpop.f32.mrb[0].mxu0
        %3312 = vmatprep.mubr.f32.mxu0 %v2024
        %3313 = vmatmul.mubr.f32.gmra.mrb[0].mxu0 %v2023
        %v3314 = vpop.f32.mrb[0].mxu0
        %v3315 = vadd.f32 %v2610, %v3314
        %v3316 = vpop.f32.mrb[0].mxu0
        %3317 = vmatprep.mubr.f32.mxu0 %v2028
        %3318 = vmatmul.mubr.f32.gmra.mrb[0].mxu0 %v2027
        %v3319 = vpop.f32.mrb[0].mxu0
        %v3320 = vadd.f32 %v2615, %v3319
        %v3321 = vpop.f32.mrb[0].mxu0
        %3322 = vmatprep.mubr.f32.mxu0 %v2032
        %3323 = vmatmul.mubr.f32.gmra.mrb[0].mxu0 %v2031
        %v3324 = vpop.f32.mrb[0].mxu0
        %v3325 = vadd.f32 %v2620, %v3324
        %v3326 = vpop.f32.mrb[0].mxu0
        %3327 = vmatprep.mubr.f32.mxu0 %v2036
        %3328 = vmatmul.mubr.f32.gmra.mrb[0].mxu0 %v2035
        %v3329 = vpop.f32.mrb[0].mxu0
        %v3330 = vadd.f32 %v2625, %v3329
        %v3331 = vpop.f32.mrb[0].mxu0
        %3332 = vmatprep.mubr.f32.mxu0 %v2040
        %3333 = vmatmul.mubr.f32.gmra.mrb[0].mxu0 %v2039
        %v3334 = vpop.f32.mrb[0].mxu0
        %v3335 = vadd.f32 %v2630, %v3334
        %v3336 = vpop.f32.mrb[0].mxu0
        %3337 = vmatprep.mubr.f32.mxu0 %v2044
        %3338 = vmatmul.mubr.f32.gmra.mrb[0].mxu0 %v2043
        %v3339 = vpop.f32.mrb[0].mxu0
        %v3340 = vadd.f32 %v2635, %v3339
        %v3341 = vpop.f32.mrb[0].mxu0
        %3342 = vmatprep.mubr.f32.mxu0 %v2048
        %3343 = vmatmul.mubr.f32.gmra.mrb[0].mxu0 %v2047
        %v3344 = vpop.f32.mrb[0].mxu0
        %v3345 = vadd.f32 %v2640, %v3344
        %v3346 = vpop.f32.mrb[0].mxu0
        %3347 = vmatprep.mubr.f32.mxu0 %v2052
        %3348 = vmatmul.mubr.f32.gmra.mrb[0].mxu0 %v2051
        %v3349 = vpop.f32.mrb[0].mxu0
        %v3350 = vadd.f32 %v2645, %v3349
        %v3351 = vpop.f32.mrb[0].mxu0
        %3352 = vmatprep.mubr.f32.mxu0 %v2056
        %3353 = vmatmul.mubr.f32.gmra.mrb[0].mxu0 %v2055
        %v3354 = vpop.f32.mrb[0].mxu0
        %v3355 = vadd.f32 %v2650, %v3354
        %v3356 = vpop.f32.mrb[0].mxu0
        %3357 = vmatprep.mubr.f32.mxu0 %v2060
        %3358 = vmatmul.mubr.f32.gmra.mrb[0].mxu0 %v2059
        %v3359 = vpop.f32.mrb[0].mxu0
        %v3360 = vadd.f32 %v2655, %v3359
        %v3361 = vpop.f32.mrb[0].mxu0
        %3362 = vmatprep.mubr.f32.mxu0 %v2064
        %3363 = vmatmul.mubr.f32.gmra.mrb[0].mxu0 %v2063
        %v3364 = vpop.f32.mrb[0].mxu0
        %v3365 = vadd.f32 %v2660, %v3364
        %v3366 = vpop.f32.mrb[0].mxu0
        %3367 = vmatprep.mubr.f32.mxu0 %v2068
        %3368 = vmatmul.mubr.f32.gmra.mrb[0].mxu0 %v2067
        %v3369 = vpop.f32.mrb[0].mxu0
        %v3370 = vadd.f32 %v2665, %v3369
        %v3371 = vpop.f32.mrb[0].mxu0
        %3372 = vmatprep.mubr.f32.mxu0 %v2072
        %3373 = vmatmul.mubr.f32.gmra.mrb[0].mxu0 %v2071
        %v3374 = vpop.f32.mrb[0].mxu0
        %v3375 = vadd.f32 %v2670, %v3374
        %v3376 = vpop.f32.mrb[0].mxu0
        %3377 = vmatprep.mubr.f32.mxu0 %v2076
        %3378 = vmatmul.mubr.f32.gmra.mrb[0].mxu0 %v2075
        %v3379 = vpop.f32.mrb[0].mxu0
        %v3380 = vadd.f32 %v2675, %v3379
        %v3381 = vpop.f32.mrb[0].mxu0
        %3382 = vmatprep.mubr.f32.mxu0 %v2080
        %3383 = vmatmul.mubr.f32.gmra.mrb[0].mxu0 %v2079
        %v3384 = vpop.f32.mrb[0].mxu0
        %v3385 = vadd.f32 %v2680, %v3384
        %v3386 = vpop.f32.mrb[0].mxu0
        %3387 = vmatprep.mubr.f32.mxu0 %v2084
        %3388 = vmatmul.mubr.f32.gmra.mrb[0].mxu0 %v2083
        %v3389 = vpop.f32.mrb[0].mxu0
        %v3390 = vadd.f32 %v2685, %v3389
        %v3391 = vpop.f32.mrb[0].mxu0
        %3392 = vmatprep.mubr.f32.mxu0 %v2088
        %3393 = vmatmul.mubr.f32.gmra.mrb[0].mxu0 %v2087
        %v3394 = vpop.f32.mrb[0].mxu0
        %v3395 = vadd.f32 %v2690, %v3394
        %v3396 = vpop.f32.mrb[0].mxu0
        %3397 = vmatprep.mubr.f32.mxu0 %v2092
        %3398 = vmatmul.mubr.f32.gmra.mrb[0].mxu0 %v2091
        %v3399 = vpop.f32.mrb[0].mxu0
        %v3400 = vadd.f32 %v2695, %v3399
        %v3401 = vpop.f32.mrb[0].mxu0
        %3402 = vmatprep.mubr.f32.mxu0 %v2096
        %3403 = vmatmul.mubr.f32.gmra.mrb[0].mxu0 %v2095
        %v3404 = vpop.f32.mrb[0].mxu0
        %v3405 = vadd.f32 %v2700, %v3404
        %v3406 = vpop.f32.mrb[0].mxu0
        %3407 = vmatprep.mubr.f32.mxu0 %v2100
        %3408 = vmatmul.mubr.f32.gmra.mrb[0].mxu0 %v2099
        %v3409 = vpop.f32.mrb[0].mxu0
        %v3410 = vadd.f32 %v2705, %v3409
        %v3411 = vpop.f32.mrb[0].mxu0
        %3412 = vmatprep.mubr.f32.mxu0 %v2104
        %3413 = vmatmul.mubr.f32.gmra.mrb[0].mxu0 %v2103
        %v3414 = vpop.f32.mrb[0].mxu0
        %v3415 = vadd.f32 %v2710, %v3414
        %v3416 = vpop.f32.mrb[0].mxu0
        %3417 = vmatprep.mubr.f32.mxu0 %v2108
        %3418 = vmatmul.mubr.f32.gmra.mrb[0].mxu0 %v2107
        %v3419 = vpop.f32.mrb[0].mxu0
        %v3420 = vadd.f32 %v2715, %v3419
        %v3421 = vpop.f32.mrb[0].mxu0
        %3422 = vmatprep.mubr.f32.mxu0 %v2112
        %3423 = vmatmul.mubr.f32.gmra.mrb[0].mxu0 %v2111
        %v3424 = vpop.f32.mrb[0].mxu0
        %v3425 = vadd.f32 %v2720, %v3424
        %v3426 = vpop.f32.mrb[0].mxu0
        %3427 = vmatprep.mubr.f32.mxu0 %v2116
        %3428 = vmatmul.mubr.f32.gmra.mrb[0].mxu0 %v2115
        %v3429 = vpop.f32.mrb[0].mxu0
        %v3430 = vadd.f32 %v2725, %v3429
        %v3431 = vpop.f32.mrb[0].mxu0
        %3432 = vmatprep.mubr.f32.mxu0 %v2120
        %3433 = vmatmul.mubr.f32.gmra.mrb[0].mxu0 %v2119
        %v3434 = vpop.f32.mrb[0].mxu0
        %v3435 = vadd.f32 %v2730, %v3434
        %v3436 = vpop.f32.mrb[0].mxu0
        %3437 = vmatprep.mubr.f32.mxu0 %v2124
        %3438 = vmatmul.mubr.f32.gmra.mrb[0].mxu0 %v2123
        %v3439 = vpop.f32.mrb[0].mxu0
        %v3440 = vadd.f32 %v2735, %v3439
        %v3441 = vpop.f32.mrb[0].mxu0
        %3442 = vmatprep.mubr.f32.mxu0 %v2128
        %3443 = vmatmul.mubr.f32.gmra.mrb[0].mxu0 %v2127
        %v3444 = vpop.f32.mrb[0].mxu0
        %v3445 = vadd.f32 %v2740, %v3444
        %v3446 = vpop.f32.mrb[0].mxu0
        %3447 = vmatprep.mubr.f32.mxu0 %v2132
        %3448 = vmatmul.mubr.f32.gmra.mrb[0].mxu0 %v2131
        %v3449 = vpop.f32.mrb[0].mxu0
        %v3450 = vadd.f32 %v2745, %v3449
        %v3451 = vpop.f32.mrb[0].mxu0
        %3452 = vmatprep.mubr.f32.mxu0 %v2136
        %3453 = vmatmul.mubr.f32.gmra.mrb[0].mxu0 %v2135
        %v3454 = vpop.f32.mrb[0].mxu0
        %v3455 = vadd.f32 %v2750, %v3454
        %v3456 = vpop.f32.mrb[0].mxu0
        %3457 = vmatprep.mubr.f32.mxu0 %v2140
        %3458 = vmatmul.mubr.f32.gmra.mrb[0].mxu0 %v2139
        %v3459 = vpop.f32.mrb[0].mxu0
        %v3460 = vadd.f32 %v2755, %v3459
        %v3461 = vpop.f32.mrb[0].mxu0
        %3462 = vmatprep.mubr.f32.mxu0 %v2144
        %3463 = vmatmul.mubr.f32.gmra.mrb[0].mxu0 %v2143
        %v3464 = vpop.f32.mrb[0].mxu0
        %v3465 = vadd.f32 %v2760, %v3464
        %v3466 = vpop.f32.mrb[0].mxu0
        %3467 = vmatprep.mubr.f32.mxu0 %v2148
        %3468 = vmatmul.mubr.f32.gmra.mrb[0].mxu0 %v2147
        %v3469 = vpop.f32.mrb[0].mxu0
        %v3470 = vadd.f32 %v2765, %v3469
        %v3471 = vpop.f32.mrb[0].mxu0
        %3472 = vmatprep.mubr.f32.mxu0 %v2152
        %3473 = vmatmul.mubr.f32.gmra.mrb[0].mxu0 %v2151
        %v3474 = vpop.f32.mrb[0].mxu0
        %v3475 = vadd.f32 %v2770, %v3474
        %v3476 = vpop.f32.mrb[0].mxu0
        %3477 = vmatprep.mubr.f32.mxu0 %v2156
        %3478 = vmatmul.mubr.f32.gmra.mrb[0].mxu0 %v2155
        %v3479 = vpop.f32.mrb[0].mxu0
        %v3480 = vadd.f32 %v2775, %v3479
        %v3481 = vpop.f32.mrb[0].mxu0
        %3482 = vmatprep.mubr.f32.mxu0 %v2160
        %3483 = vmatmul.mubr.f32.gmra.mrb[0].mxu0 %v2159
        %v3484 = vpop.f32.mrb[0].mxu0
        %v3485 = vadd.f32 %v2780, %v3484
        %v3486 = vpop.f32.mrb[0].mxu0
        %3487 = vmatprep.mubr.f32.mxu0 %v2164
        %3488 = vmatmul.mubr.f32.gmra.mrb[0].mxu0 %v2163
        %v3489 = vpop.f32.mrb[0].mxu0
        %v3490 = vadd.f32 %v2785, %v3489
        %v3491 = vpop.f32.mrb[0].mxu0
        %3492 = vmatprep.mubr.f32.mxu0 %v2168
        %3493 = vmatmul.mubr.f32.gmra.mrb[0].mxu0 %v2167
        %v3494 = vpop.f32.mrb[0].mxu0
        %v3495 = vadd.f32 %v2790, %v3494
        %v3496 = vpop.f32.mrb[0].mxu0
        %3497 = vmatprep.mubr.f32.mxu0 %v2172
        %3498 = vmatmul.mubr.f32.gmra.mrb[0].mxu0 %v2171
        %v3499 = vpop.f32.mrb[0].mxu0
        %v3500 = vadd.f32 %v2795, %v3499
        %v3501 = vpop.f32.mrb[0].mxu0
        %3502 = vmatprep.mubr.f32.mxu0 %v2176
        %3503 = vmatmul.mubr.f32.gmra.mrb[0].mxu0 %v2175
        %v3504 = vpop.f32.mrb[0].mxu0
        %v3505 = vadd.f32 %v2800, %v3504
        %v3506 = vpop.f32.mrb[0].mxu0
        %3507 = vmatprep.mubr.f32.mxu0 %v2180
        %3508 = vmatmul.mubr.f32.gmra.mrb[0].mxu0 %v2179
        %v3509 = vpop.f32.mrb[0].mxu0
        %v3510 = vadd.f32 %v2805, %v3509
        %v3511 = vpop.f32.mrb[0].mxu0
        %3512 = vmatprep.mubr.f32.mxu0 %v2184
        %3513 = vmatmul.mubr.f32.gmra.mrb[0].mxu0 %v2183
        %v3514 = vpop.f32.mrb[0].mxu0
        %v3515 = vadd.f32 %v2810, %v3514
        %v3516 = vpop.f32.mrb[0].mxu0
        %3517 = vmatprep.mubr.f32.mxu0 %v2188
        %3518 = vmatmul.mubr.f32.gmra.mrb[0].mxu0 %v2187
        %v3519 = vpop.f32.mrb[0].mxu0
        %v3520 = vadd.f32 %v2815, %v3519
        %v3521 = vpop.f32.mrb[0].mxu0
        %3522 = vmatprep.mubr.f32.mxu0 %v2192
        %3523 = vmatmul.mubr.f32.gmra.mrb[0].mxu0 %v2191
        %v3524 = vpop.f32.mrb[0].mxu0
        %v3525 = vadd.f32 %v2820, %v3524
        %v3526 = vpop.f32.mrb[0].mxu0
        %3527 = vmatprep.mubr.f32.mxu0 %v2196
        %3528 = vmatmul.mubr.f32.gmra.mrb[0].mxu0 %v2195
        %v3529 = vpop.f32.mrb[0].mxu0
        %v3530 = vadd.f32 %v2825, %v3529
        %v3531 = vpop.f32.mrb[0].mxu0
        %3532 = vmatprep.mubr.f32.mxu0 %v2200
        %3533 = vmatmul.mubr.f32.gmra.mrb[0].mxu0 %v2199
        %v3534 = vpop.f32.mrb[0].mxu0
        %v3535 = vadd.f32 %v2830, %v3534
        %v3536 = vpop.f32.mrb[0].mxu0
        %3537 = vmatprep.mubr.f32.mxu0 %v2204
        %3538 = vmatmul.mubr.f32.gmra.mrb[0].mxu0 %v2203
        %v3539 = vpop.f32.mrb[0].mxu0
        %v3540 = vadd.f32 %v2835, %v3539
        %v3541 = vpop.f32.mrb[0].mxu0
        %3542 = vmatprep.mubr.f32.mxu0 %v2208
        %3543 = vmatmul.mubr.f32.gmra.mrb[0].mxu0 %v2207
        %v3544 = vpop.f32.mrb[0].mxu0
        %v3545 = vadd.f32 %v2840, %v3544
        %v3546 = vpop.f32.mrb[0].mxu0
        %3547 = vmatprep.mubr.f32.mxu0 %v2212
        %3548 = vmatmul.mubr.f32.gmra.mrb[0].mxu0 %v2211
        %v3549 = vpop.f32.mrb[0].mxu0
        %v3550 = vadd.f32 %v2845, %v3549
        %v3551 = vpop.f32.mrb[0].mxu0
        %3552 = vmatprep.mubr.f32.mxu0 %v2216
        %3553 = vmatmul.mubr.f32.gmra.mrb[0].mxu0 %v2215
        %v3554 = vpop.f32.mrb[0].mxu0
        %v3555 = vadd.f32 %v2850, %v3554
        %v3556 = vpop.f32.mrb[0].mxu0
        %3557 = vmatprep.mubr.f32.mxu0 %v2220
        %3558 = vmatmul.mubr.f32.gmra.mrb[0].mxu0 %v2219
        %v3559 = vpop.f32.mrb[0].mxu0
        %v3560 = vadd.f32 %v2855, %v3559
        %v3561 = vpop.f32.mrb[0].mxu0
        %3562 = vmatprep.mubr.f32.mxu0 %v2224
        %3563 = vmatmul.mubr.f32.gmra.mrb[0].mxu0 %v2223
        %v3564 = vpop.f32.mrb[0].mxu0
        %v3565 = vadd.f32 %v2860, %v3564
        %v3566 = vpop.f32.mrb[0].mxu0
        %3567 = vmatprep.mubr.f32.mxu0 %v2228
        %3568 = vmatmul.mubr.f32.gmra.mrb[0].mxu0 %v2227
        %v3569 = vpop.f32.mrb[0].mxu0
        %v3570 = vadd.f32 %v2865, %v3569
        %v3571 = vpop.f32.mrb[0].mxu0
        %3572 = vmatprep.mubr.f32.mxu0 %v2232
        %3573 = vmatmul.mubr.f32.gmra.mrb[0].mxu0 %v2231
        %v3574 = vpop.f32.mrb[0].mxu0
        %v3575 = vadd.f32 %v2870, %v3574
        %v3576 = vpop.f32.mrb[0].mxu0
        %3577 = vmatprep.mubr.f32.mxu0 %v2236
        %3578 = vmatmul.mubr.f32.gmra.mrb[0].mxu0 %v2235
        %v3579 = vpop.f32.mrb[0].mxu0
        %v3580 = vadd.f32 %v2875, %v3579
        %v3581 = vpop.f32.mrb[0].mxu0
        %3582 = vmatprep.mubr.f32.mxu0 %v2240
        %3583 = vmatmul.mubr.f32.gmra.mrb[0].mxu0 %v2239
        %v3584 = vpop.f32.mrb[0].mxu0
        %v3585 = vadd.f32 %v2880, %v3584
        %v3586 = vpop.f32.mrb[0].mxu0
        %3587 = vmatprep.mubr.f32.mxu0 %v2244
        %3588 = vmatmul.mubr.f32.gmra.mrb[0].mxu0 %v2243
        %v3589 = vpop.f32.mrb[0].mxu0
        %v3590 = vadd.f32 %v2885, %v3589
        %v3591 = vpop.f32.mrb[0].mxu0
        %3592 = vmatprep.mubr.f32.mxu0 %v2248
        %3593 = vmatmul.mubr.f32.gmra.mrb[0].mxu0 %v2247
        %v3594 = vpop.f32.mrb[0].mxu0
        %v3595 = vadd.f32 %v2890, %v3594
        %v3596 = vpop.f32.mrb[0].mxu0
        %3597 = vmatprep.mubr.f32.mxu0 %v2252
        %3598 = vmatmul.mubr.f32.gmra.mrb[0].mxu0 %v2251
        %v3599 = vpop.f32.mrb[0].mxu0
        %v3600 = vadd.f32 %v2895, %v3599
        %v3601 = vpop.f32.mrb[0].mxu0
        %3602 = vmatprep.mubr.f32.mxu0 %v2256
        %3603 = vmatmul.mubr.f32.gmra.mrb[0].mxu0 %v2255
        %v3604 = vpop.f32.mrb[0].mxu0
        %v3605 = vadd.f32 %v2900, %v3604
        %v3606 = vpop.f32.mrb[0].mxu0
        %3607 = vmatprep.mubr.f32.mxu0 %v2260
        %3608 = vmatmul.mubr.f32.gmra.mrb[0].mxu0 %v2259
        %v3609 = vpop.f32.mrb[0].mxu0
        %v3610 = vadd.f32 %v2905, %v3609
        %v3611 = vpop.f32.mrb[0].mxu0
        %3612 = vmatprep.mubr.f32.mxu0 %v2264
        %3613 = vmatmul.mubr.f32.gmra.mrb[0].mxu0 %v2263
        %v3614 = vpop.f32.mrb[0].mxu0
        %v3615 = vadd.f32 %v2910, %v3614
        %v3616 = vpop.f32.mrb[0].mxu0
        %3617 = vmatprep.mubr.f32.mxu0 %v2268
        %3618 = vmatmul.mubr.f32.gmra.mrb[0].mxu0 %v2267
        %v3619 = vpop.f32.mrb[0].mxu0
        %v3620 = vadd.f32 %v2915, %v3619
        %v3621 = vpop.f32.mrb[0].mxu0
        %3622 = vmatprep.mubr.f32.mxu0 %v2272
        %3623 = vmatmul.mubr.f32.gmra.mrb[0].mxu0 %v2271
        %v3624 = vpop.f32.mrb[0].mxu0
        %v3625 = vadd.f32 %v2920, %v3624
        %v3626 = vpop.f32.mrb[0].mxu0
        %3627 = vmatprep.mubr.f32.mxu0 %v2276
        %3628 = vmatmul.mubr.f32.gmra.mrb[0].mxu0 %v2275
        %v3629 = vpop.f32.mrb[0].mxu0
        %v3630 = vadd.f32 %v2925, %v3629
        %v3631 = vpop.f32.mrb[0].mxu0
        %3632 = vmatprep.mubr.f32.mxu0 %v2280
        %3633 = vmatmul.mubr.f32.gmra.mrb[0].mxu0 %v2279
        %v3634 = vpop.f32.mrb[0].mxu0
        %v3635 = vadd.f32 %v2930, %v3634
        %v3636 = vpop.f32.mrb[0].mxu0
        %3637 = vmatprep.mubr.f32.mxu0 %v2284
        %3638 = vmatmul.mubr.f32.gmra.mrb[0].mxu0 %v2283
        %v3639 = vpop.f32.mrb[0].mxu0
        %v3640 = vadd.f32 %v2935, %v3639
        %v3641 = vpop.f32.mrb[0].mxu0
        %3642 = vmatprep.mubr.f32.mxu0 %v2288
        %3643 = vmatmul.mubr.f32.gmra.mrb[0].mxu0 %v2287
        %v3644 = vpop.f32.mrb[0].mxu0
        %v3645 = vadd.f32 %v2940, %v3644
        %v3646 = vpop.f32.mrb[0].mxu0
        %3647 = vmatprep.mubr.f32.mxu0 %v2292
        %3648 = vmatmul.mubr.f32.gmra.mrb[0].mxu0 %v2291
        %v3649 = vpop.f32.mrb[0].mxu0
        %v3650 = vadd.f32 %v2945, %v3649
        %v3651 = vpop.f32.mrb[0].mxu0
        %3652 = vmatprep.mubr.f32.mxu0 %v2296
        %3653 = vmatmul.mubr.f32.gmra.mrb[0].mxu0 %v2295
        %v3654 = vpop.f32.mrb[0].mxu0
        %v3655 = vadd.f32 %v2950, %v3654
        %v3656 = vpop.f32.mrb[0].mxu0
        %3657 = vmatprep.mubr.f32.mxu0 %v2300
        %3658 = vmatmul.mubr.f32.gmra.mrb[0].mxu0 %v2299
        %v3659 = vpop.f32.mrb[0].mxu0
        %v3660 = vadd.f32 %v2955, %v3659
        %v3661 = vpop.f32.mrb[0].mxu0
        %3662 = vmatprep.mubr.f32.mxu0 %v2304
        %3663 = vmatmul.mubr.f32.gmra.mrb[0].mxu0 %v2303
        %v3664 = vpop.f32.mrb[0].mxu0
        %v3665 = vadd.f32 %v2960, %v3664
        %v3666 = vpop.f32.mrb[0].mxu0
        %3667 = vmatprep.mubr.f32.mxu0 %v2308
        %3668 = vmatmul.mubr.f32.gmra.mrb[0].mxu0 %v2307
        %v3669 = vpop.f32.mrb[0].mxu0
        %v3670 = vadd.f32 %v2965, %v3669
        %v3671 = vpop.f32.mrb[0].mxu0
        %3672 = vmatprep.mubr.f32.mxu0 %v2312
        %3673 = vmatmul.mubr.f32.gmra.mrb[0].mxu0 %v2311
        %v3674 = vpop.f32.mrb[0].mxu0
        %v3675 = vadd.f32 %v2970, %v3674
        %v3676 = vpop.f32.mrb[0].mxu0
        %3677 = vmatprep.mubr.f32.mxu0 %v2316
        %3678 = vmatmul.mubr.f32.gmra.mrb[0].mxu0 %v2315
        %v3679 = vpop.f32.mrb[0].mxu0
        %v3680 = vadd.f32 %v2975, %v3679
        %v3681 = vpop.f32.mrb[0].mxu0
        %3682 = vmatprep.mubr.f32.mxu0 %v2320
        %3683 = vmatmul.mubr.f32.gmra.mrb[0].mxu0 %v2319
        %v3684 = vpop.f32.mrb[0].mxu0
        %v3685 = vadd.f32 %v2980, %v3684
        %v3686 = vpop.f32.mrb[0].mxu0
        %3687 = vmatprep.mubr.f32.mxu0 %v2324
        %3688 = vmatmul.mubr.f32.gmra.mrb[0].mxu0 %v2323
        %v3689 = vpop.f32.mrb[0].mxu0
        %v3690 = vadd.f32 %v2985, %v3689
        %v3691 = vpop.f32.mrb[0].mxu0
        %3692 = vmatprep.mubr.f32.mxu0 %v2328
        %3693 = vmatmul.mubr.f32.gmra.mrb[0].mxu0 %v2327
        %v3694 = vpop.f32.mrb[0].mxu0
        %v3695 = vadd.f32 %v2990, %v3694
        %v3696 = vpop.f32.mrb[0].mxu0
        %3697 = vmatprep.mubr.f32.mxu0 %v2332
        %3698 = vmatmul.mubr.f32.gmra.mrb[0].mxu0 %v2331
        %v3699 = vpop.f32.mrb[0].mxu0
        %v3700 = vadd.f32 %v2995, %v3699
        %v3701 = vpop.f32.mrb[0].mxu0
        %3702 = vmatprep.mubr.f32.mxu0 %v2336
        %3703 = vmatmul.mubr.f32.gmra.mrb[0].mxu0 %v2335
        %v3704 = vpop.f32.mrb[0].mxu0
        %v3705 = vadd.f32 %v3000, %v3704
        %v3706 = vpop.f32.mrb[0].mxu0
        %3707 = vmatprep.mubr.f32.mxu0 %v2340
        %3708 = vmatmul.mubr.f32.gmra.mrb[0].mxu0 %v2339
        %v3709 = vpop.f32.mrb[0].mxu0
        %v3710 = vadd.f32 %v3005, %v3709
        %v3711 = vpop.f32.mrb[0].mxu0
        %3712 = vmatprep.mubr.f32.mxu0 %v2344
        %3713 = vmatmul.mubr.f32.gmra.mrb[0].mxu0 %v2343
        %v3714 = vpop.f32.mrb[0].mxu0
        %v3715 = vadd.f32 %v3010, %v3714
        %v3716 = vpop.f32.mrb[0].mxu0
        %3717 = vmatprep.mubr.f32.mxu0 %v2348
        %3718 = vmatmul.mubr.f32.gmra.mrb[0].mxu0 %v2347
        %v3719 = vpop.f32.mrb[0].mxu0
        %v3720 = vadd.f32 %v3015, %v3719
        %v3721 = vpop.f32.mrb[0].mxu0
        %3722 = vmatprep.mubr.f32.mxu0 %v2352
        %3723 = vmatmul.mubr.f32.gmra.mrb[0].mxu0 %v2351
        %v3724 = vpop.f32.mrb[0].mxu0
        %v3725 = vadd.f32 %v3020, %v3724
        %v3726 = vpop.f32.mrb[0].mxu0
        %3727 = vmatprep.mubr.f32.mxu0 %v2356
        %3728 = vmatmul.mubr.f32.gmra.mrb[0].mxu0 %v2355
        %v3729 = vpop.f32.mrb[0].mxu0
        %v3730 = vadd.f32 %v3025, %v3729
        %v3731 = vpop.f32.mrb[0].mxu0
        %3732 = vmatprep.mubr.f32.mxu0 %v2360
        %3733 = vmatmul.mubr.f32.gmra.mrb[0].mxu0 %v2359
        %v3734 = vpop.f32.mrb[0].mxu0
        %v3735 = vadd.f32 %v3030, %v3734
        %v3736 = vpop.f32.mrb[0].mxu0
        %3737 = vmatprep.mubr.f32.mxu0 %v2364
        %3738 = vmatmul.mubr.f32.gmra.mrb[0].mxu0 %v2363
        %v3739 = vpop.f32.mrb[0].mxu0
        %v3740 = vadd.f32 %v3035, %v3739
        %v3741 = vpop.f32.mrb[0].mxu0
        %3742 = vmatprep.mubr.f32.mxu0 %v2368
        %3743 = vmatmul.mubr.f32.gmra.mrb[0].mxu0 %v2367
        %v3744 = vpop.f32.mrb[0].mxu0
        %v3745 = vadd.f32 %v3040, %v3744
        %v3746 = vpop.f32.mrb[0].mxu0
        %3747 = vmatprep.mubr.f32.mxu0 %v2372
        %3748 = vmatmul.mubr.f32.gmra.mrb[0].mxu0 %v2371
        %v3749 = vpop.f32.mrb[0].mxu0
        %v3750 = vadd.f32 %v3045, %v3749
        %v3751 = vpop.f32.mrb[0].mxu0
        %3752 = vmatprep.mubr.f32.mxu0 %v2376
        %3753 = vmatmul.mubr.f32.gmra.mrb[0].mxu0 %v2375
        %v3754 = vpop.f32.mrb[0].mxu0
        %v3755 = vadd.f32 %v3050, %v3754
        %v3756 = vpop.f32.mrb[0].mxu0
        %3757 = vmatprep.mubr.f32.mxu0 %v2380
        %3758 = vmatmul.mubr.f32.gmra.mrb[0].mxu0 %v2379
        %v3759 = vpop.f32.mrb[0].mxu0
        %v3760 = vadd.f32 %v3055, %v3759
        %v3761 = vpop.f32.mrb[0].mxu0
        %3762 = vmatprep.mubr.f32.mxu0 %v2384
        %3763 = vmatmul.mubr.f32.gmra.mrb[0].mxu0 %v2383
        %v3764 = vpop.f32.mrb[0].mxu0
        %v3765 = vadd.f32 %v3060, %v3764
        %v3766 = vpop.f32.mrb[0].mxu0
        %3767 = vmatprep.mubr.f32.mxu0 %v2388
        %3768 = vmatmul.mubr.f32.gmra.mrb[0].mxu0 %v2387
        %v3769 = vpop.f32.mrb[0].mxu0
        %v3770 = vadd.f32 %v3065, %v3769
        %v3771 = vpop.f32.mrb[0].mxu0
        %3772 = vmatprep.mubr.f32.mxu0 %v2392
        %3773 = vmatmul.mubr.f32.gmra.mrb[0].mxu0 %v2391
        %v3774 = vpop.f32.mrb[0].mxu0
        %v3775 = vadd.f32 %v3070, %v3774
        %v3776 = vpop.f32.mrb[0].mxu0
        %3777 = vmatprep.mubr.f32.mxu0 %v2396
        %3778 = vmatmul.mubr.f32.gmra.mrb[0].mxu0 %v2395
        %v3779 = vpop.f32.mrb[0].mxu0
        %v3780 = vadd.f32 %v3075, %v3779
        %v3781 = vpop.f32.mrb[0].mxu0
        %3782 = vmatprep.mubr.f32.mxu0 %v2400
        %3783 = vmatmul.mubr.f32.gmra.mrb[0].mxu0 %v2399
        %v3784 = vpop.f32.mrb[0].mxu0
        %v3785 = vadd.f32 %v3080, %v3784
        %v3786 = vpop.f32.mrb[0].mxu0
        %3787 = vmatprep.mubr.f32.mxu0 %v2404
        %3788 = vmatmul.mubr.f32.gmra.mrb[0].mxu0 %v2403
        %v3789 = vpop.f32.mrb[0].mxu0
        %v3790 = vadd.f32 %v3085, %v3789
        %v3791 = vpop.f32.mrb[0].mxu0
        %3792 = vmatprep.mubr.f32.mxu0 %v2408
        %3793 = vmatmul.mubr.f32.gmra.mrb[0].mxu0 %v2407
        %v3794 = vpop.f32.mrb[0].mxu0
        %v3795 = vadd.f32 %v3090, %v3794
        %v3796 = vpop.f32.mrb[0].mxu0
        %3797 = vmatprep.mubr.f32.mxu0 %v2412
        %3798 = vmatmul.mubr.f32.gmra.mrb[0].mxu0 %v2411
        %v3799 = vpop.f32.mrb[0].mxu0
        %v3800 = vadd.f32 %v3095, %v3799
        %v3801 = vpop.f32.mrb[0].mxu0
        %3802 = vmatprep.mubr.f32.mxu0 %v2416
        %3803 = vmatmul.mubr.f32.gmra.mrb[0].mxu0 %v2415
        %v3804 = vpop.f32.mrb[0].mxu0
        %v3805 = vadd.f32 %v3100, %v3804
        %v3806 = vpop.f32.mrb[0].mxu0
        %3807 = vmatprep.mubr.f32.mxu0 %v2420
        %3808 = vmatmul.mubr.f32.gmra.mrb[0].mxu0 %v2419
        %v3809 = vpop.f32.mrb[0].mxu0
        %v3810 = vadd.f32 %v3105, %v3809
        %v3811 = vpop.f32.mrb[0].mxu0
        %3812 = vmatprep.mubr.f32.mxu0 %v2424
        %3813 = vmatmul.mubr.f32.gmra.mrb[0].mxu0 %v2423
        %v3814 = vpop.f32.mrb[0].mxu0
        %v3815 = vadd.f32 %v3110, %v3814
        %v3816 = vpop.f32.mrb[0].mxu0
        %3817 = vmatprep.mubr.f32.mxu0 %v2428
        %3818 = vmatmul.mubr.f32.gmra.mrb[0].mxu0 %v2427
        %v3819 = vpop.f32.mrb[0].mxu0
        %v3820 = vadd.f32 %v3115, %v3819
        %v3821 = vpop.f32.mrb[0].mxu0
        %3822 = vmatprep.mubr.f32.mxu0 %v2432
        %3823 = vmatmul.mubr.f32.gmra.mrb[0].mxu0 %v2431
        %v3824 = vpop.f32.mrb[0].mxu0
        %v3825 = vadd.f32 %v3120, %v3824
        %v3826 = vpop.f32.mrb[0].mxu0
        %3827 = vmatprep.mubr.f32.mxu0 %v2436
        %3828 = vmatmul.mubr.f32.gmra.mrb[0].mxu0 %v2435
        %v3829 = vpop.f32.mrb[0].mxu0
        %v3830 = vadd.f32 %v3125, %v3829
        %v3831 = vpop.f32.mrb[0].mxu0
        %3832 = vmatprep.mubr.f32.mxu0 %v2440
        %3833 = vmatmul.mubr.f32.gmra.mrb[0].mxu0 %v2439
        %v3834 = vpop.f32.mrb[0].mxu0
        %v3835 = vadd.f32 %v3130, %v3834
        %v3836 = vpop.f32.mrb[0].mxu0
        %3837 = vmatprep.mubr.f32.mxu0 %v2444
        %3838 = vmatmul.mubr.f32.gmra.mrb[0].mxu0 %v2443
        %v3839 = vpop.f32.mrb[0].mxu0
        %v3840 = vadd.f32 %v3135, %v3839
        %v3841 = vpop.f32.mrb[0].mxu0
        %3842 = vmatprep.mubr.f32.mxu0 %v2448
        %3843 = vmatmul.mubr.f32.gmra.mrb[0].mxu0 %v2447
        %v3844 = vpop.f32.mrb[0].mxu0
        %v3845 = vadd.f32 %v3140, %v3844
        %v3846 = vpop.f32.mrb[0].mxu0
        %3847 = vmatprep.mubr.f32.mxu0 %v2452
        %3848 = vmatmul.mubr.f32.gmra.mrb[0].mxu0 %v2451
        %v3849 = vpop.f32.mrb[0].mxu0
        %v3850 = vadd.f32 %v3145, %v3849
        %v3851 = vpop.f32.mrb[0].mxu0
        %3852 = vmatprep.mubr.f32.mxu0 %v2456
        %3853 = vmatmul.mubr.f32.gmra.mrb[0].mxu0 %v2455
        %v3854 = vpop.f32.mrb[0].mxu0
        %v3855 = vadd.f32 %v3150, %v3854
        %v3856 = vpop.f32.mrb[0].mxu0
        %3857 = vmatprep.mubr.f32.mxu0 %v2460
        %3858 = vmatmul.mubr.f32.gmra.mrb[0].mxu0 %v2459
        %v3859 = vpop.f32.mrb[0].mxu0
        %v3860 = vadd.f32 %v3155, %v3859
        %v3861 = vpop.f32.mrb[0].mxu0
        %3862 = vmatprep.mubr.f32.mxu0 %v2464
        %3863 = vmatmul.mubr.f32.gmra.mrb[0].mxu0 %v2463
        %v3864 = vpop.f32.mrb[0].mxu0
        %v3865 = vadd.f32 %v3160, %v3864
        %v3866 = vpop.f32.mrb[0].mxu0
        %3867 = vmatprep.mubr.f32.mxu0 %v2468
        %3868 = vmatmul.mubr.f32.gmra.mrb[0].mxu0 %v2467
        %v3869 = vpop.f32.mrb[0].mxu0
        %v3870 = vadd.f32 %v3165, %v3869
        %v3871 = vpop.f32.mrb[0].mxu0
        %3872 = vmatprep.mubr.f32.mxu0 %v2472
        %3873 = vmatmul.mubr.f32.gmra.mrb[0].mxu0 %v2471
        %v3874 = vpop.f32.mrb[0].mxu0
        %v3875 = vadd.f32 %v3170, %v3874
        %v3876 = vpop.f32.mrb[0].mxu0
        %3877 = vmatprep.mubr.f32.mxu0 %v2476
        %3878 = vmatmul.mubr.f32.gmra.mrb[0].mxu0 %v2475
        %v3879 = vpop.f32.mrb[0].mxu0
        %v3880 = vadd.f32 %v3175, %v3879
        %v3881 = vpop.f32.mrb[0].mxu0
        %3882 = vmatprep.mubr.f32.mxu0 %v2480
        %3883 = vmatmul.mubr.f32.gmra.mrb[0].mxu0 %v2479
        %v3884 = vpop.f32.mrb[0].mxu0
        %v3885 = vadd.f32 %v3180, %v3884
        %v3886 = vpop.f32.mrb[0].mxu0
        %3887 = vmatprep.mubr.f32.mxu0 %v2484
        %3888 = vmatmul.mubr.f32.gmra.mrb[0].mxu0 %v2483
        %v3889 = vpop.f32.mrb[0].mxu0
        %v3890 = vadd.f32 %v3185, %v3889
        %v3891 = vpop.f32.mrb[0].mxu0
        %3892 = vmatprep.mubr.f32.mxu0 %v2488
        %3893 = vmatmul.mubr.f32.gmra.mrb[0].mxu0 %v2487
        %v3894 = vpop.f32.mrb[0].mxu0
        %v3895 = vadd.f32 %v3190, %v3894
        %v3896 = vpop.f32.mrb[0].mxu0
        %3897 = vmatprep.mubr.f32.mxu0 %v2492
        %3898 = vmatmul.mubr.f32.gmra.mrb[0].mxu0 %v2491
        %v3899 = vpop.f32.mrb[0].mxu0
        %v3900 = vadd.f32 %v3195, %v3899
        %v3901 = vpop.f32.mrb[0].mxu0
        %3902 = vdwg.mxu0
        %3903 = vst [vmem:[%s232] sm:$0xff] %v3265
        %3904 = vst [vmem:[%s232 + $0x8] sm:$0xff] %v3270
        %3905 = vst [vmem:[%s232 + $0x10] sm:$0xff] %v3275
        %3906 = vst [vmem:[%s232 + $0x18] sm:$0xff] %v3280
        %3907 = vst [vmem:[%s232 + $0x20] sm:$0xff] %v3285
        %3908 = vst [vmem:[%s232 + $0x28] sm:$0xff] %v3290
        %3909 = vst [vmem:[%s232 + $0x30] sm:$0xff] %v3295
        %3910 = vst [vmem:[%s232 + $0x38] sm:$0xff] %v3300
        %3911 = vst [vmem:[%s232 + $0x40] sm:$0xff] %v3305
        %3912 = vst [vmem:[%s232 + $0x48] sm:$0xff] %v3310
        %3913 = vst [vmem:[%s232 + $0x50] sm:$0xff] %v3315
        %3914 = vst [vmem:[%s232 + $0x58] sm:$0xff] %v3320
        %3915 = vst [vmem:[%s232 + $0x60] sm:$0xff] %v3325
        %3916 = vst [vmem:[%s232 + $0x68] sm:$0xff] %v3330
        %3917 = vst [vmem:[%s232 + $0x70] sm:$0xff] %v3335
        %3918 = vst [vmem:[%s232 + $0x78] sm:$0xff] %v3340
        %3919 = vst [vmem:[%s232 + $0x80] sm:$0xff] %v3345
        %3920 = vst [vmem:[%s232 + $0x88] sm:$0xff] %v3350
        %3921 = vst [vmem:[%s232 + $0x90] sm:$0xff] %v3355
        %3922 = vst [vmem:[%s232 + $0x98] sm:$0xff] %v3360
        %3923 = vst [vmem:[%s232 + $0xa0] sm:$0xff] %v3365
        %3924 = vst [vmem:[%s232 + $0xa8] sm:$0xff] %v3370
        %3925 = vst [vmem:[%s232 + $0xb0] sm:$0xff] %v3375
        %3926 = vst [vmem:[%s232 + $0xb8] sm:$0xff] %v3380
        %3927 = vst [vmem:[%s232 + $0xc0] sm:$0xff] %v3385
        %3928 = vst [vmem:[%s232 + $0xc8] sm:$0xff] %v3390
        %3929 = vst [vmem:[%s232 + $0xd0] sm:$0xff] %v3395
        %3930 = vst [vmem:[%s232 + $0xd8] sm:$0xff] %v3400
        %3931 = vst [vmem:[%s232 + $0xe0] sm:$0xff] %v3405
        %3932 = vst [vmem:[%s232 + $0xe8] sm:$0xff] %v3410
        %3933 = vst [vmem:[%s232 + $0xf0] sm:$0xff] %v3415
        %3934 = vst [vmem:[%s232 + $0xf8] sm:$0xff] %v3420
        %3935 = vst [vmem:[%s232 + $0x100] sm:$0xff] %v3425
        %3936 = vst [vmem:[%s232 + $0x108] sm:$0xff] %v3430
        %3937 = vst [vmem:[%s232 + $0x110] sm:$0xff] %v3435
        %3938 = vst [vmem:[%s232 + $0x118] sm:$0xff] %v3440
        %3939 = vst [vmem:[%s232 + $0x120] sm:$0xff] %v3445
        %3940 = vst [vmem:[%s232 + $0x128] sm:$0xff] %v3450
        %3941 = vst [vmem:[%s232 + $0x130] sm:$0xff] %v3455
        %3942 = vst [vmem:[%s232 + $0x138] sm:$0xff] %v3460
        %3943 = vst [vmem:[%s232 + $0x140] sm:$0xff] %v3465
        %3944 = vst [vmem:[%s232 + $0x148] sm:$0xff] %v3470
        %3945 = vst [vmem:[%s232 + $0x150] sm:$0xff] %v3475
        %3946 = vst [vmem:[%s232 + $0x158] sm:$0xff] %v3480
        %3947 = vst [vmem:[%s232 + $0x160] sm:$0xff] %v3485
        %3948 = vst [vmem:[%s232 + $0x168] sm:$0xff] %v3490
        %3949 = vst [vmem:[%s232 + $0x170] sm:$0xff] %v3495
        %3950 = vst [vmem:[%s232 + $0x178] sm:$0xff] %v3500
        %3951 = vst [vmem:[%s232 + $0x180] sm:$0xff] %v3505
        %3952 = vst [vmem:[%s232 + $0x188] sm:$0xff] %v3510
        %3953 = vst [vmem:[%s232 + $0x190] sm:$0xff] %v3515
        %3954 = vst [vmem:[%s232 + $0x198] sm:$0xff] %v3520
        %3955 = vst [vmem:[%s232 + $0x1a0] sm:$0xff] %v3525
        %3956 = vst [vmem:[%s232 + $0x1a8] sm:$0xff] %v3530
        %3957 = vst [vmem:[%s232 + $0x1b0] sm:$0xff] %v3535
        %3958 = vst [vmem:[%s232 + $0x1b8] sm:$0xff] %v3540
        %3959 = vst [vmem:[%s232 + $0x1c0] sm:$0xff] %v3545
        %3960 = vst [vmem:[%s232 + $0x1c8] sm:$0xff] %v3550
        %3961 = vst [vmem:[%s232 + $0x1d0] sm:$0xff] %v3555
        %3962 = vst [vmem:[%s232 + $0x1d8] sm:$0xff] %v3560
        %3963 = vst [vmem:[%s232 + $0x1e0] sm:$0xff] %v3565
        %3964 = vst [vmem:[%s232 + $0x1e8] sm:$0xff] %v3570
        %3965 = vst [vmem:[%s232 + $0x1f0] sm:$0xff] %v3575
        %3966 = vst [vmem:[%s232 + $0x1f8] sm:$0xff] %v3580
        %3967 = vst [vmem:[%s232 + $0x200] sm:$0xff] %v3585
        %3968 = vst [vmem:[%s232 + $0x208] sm:$0xff] %v3590
        %3969 = vst [vmem:[%s232 + $0x210] sm:$0xff] %v3595
        %3970 = vst [vmem:[%s232 + $0x218] sm:$0xff] %v3600
        %3971 = vst [vmem:[%s232 + $0x220] sm:$0xff] %v3605
        %3972 = vst [vmem:[%s232 + $0x228] sm:$0xff] %v3610
        %3973 = vst [vmem:[%s232 + $0x230] sm:$0xff] %v3615
        %3974 = vst [vmem:[%s232 + $0x238] sm:$0xff] %v3620
        %3975 = vst [vmem:[%s232 + $0x240] sm:$0xff] %v3625
        %3976 = vst [vmem:[%s232 + $0x248] sm:$0xff] %v3630
        %3977 = vst [vmem:[%s232 + $0x250] sm:$0xff] %v3635
        %3978 = vst [vmem:[%s232 + $0x258] sm:$0xff] %v3640
        %3979 = vst [vmem:[%s232 + $0x260] sm:$0xff] %v3645
        %3980 = vst [vmem:[%s232 + $0x268] sm:$0xff] %v3650
        %3981 = vst [vmem:[%s232 + $0x270] sm:$0xff] %v3655
        %3982 = vst [vmem:[%s232 + $0x278] sm:$0xff] %v3660
        %3983 = vst [vmem:[%s232 + $0x280] sm:$0xff] %v3665
        %3984 = vst [vmem:[%s232 + $0x288] sm:$0xff] %v3670
        %3985 = vst [vmem:[%s232 + $0x290] sm:$0xff] %v3675
        %3986 = vst [vmem:[%s232 + $0x298] sm:$0xff] %v3680
        %3987 = vst [vmem:[%s232 + $0x2a0] sm:$0xff] %v3685
        %3988 = vst [vmem:[%s232 + $0x2a8] sm:$0xff] %v3690
        %3989 = vst [vmem:[%s232 + $0x2b0] sm:$0xff] %v3695
        %3990 = vst [vmem:[%s232 + $0x2b8] sm:$0xff] %v3700
        %3991 = vst [vmem:[%s232 + $0x2c0] sm:$0xff] %v3705
        %3992 = vst [vmem:[%s232 + $0x2c8] sm:$0xff] %v3710
        %3993 = vst [vmem:[%s232 + $0x2d0] sm:$0xff] %v3715
        %3994 = vst [vmem:[%s232 + $0x2d8] sm:$0xff] %v3720
        %3995 = vst [vmem:[%s232 + $0x2e0] sm:$0xff] %v3725
        %3996 = vst [vmem:[%s232 + $0x2e8] sm:$0xff] %v3730
        %3997 = vst [vmem:[%s232 + $0x2f0] sm:$0xff] %v3735
        %3998 = vst [vmem:[%s232 + $0x2f8] sm:$0xff] %v3740
        %3999 = vst [vmem:[%s232 + $0x300] sm:$0xff] %v3745
        %4000 = vst [vmem:[%s232 + $0x308] sm:$0xff] %v3750
        %4001 = vst [vmem:[%s232 + $0x310] sm:$0xff] %v3755
        %4002 = vst [vmem:[%s232 + $0x318] sm:$0xff] %v3760
        %4003 = vst [vmem:[%s232 + $0x320] sm:$0xff] %v3765
        %4004 = vst [vmem:[%s232 + $0x328] sm:$0xff] %v3770
        %4005 = vst [vmem:[%s232 + $0x330] sm:$0xff] %v3775
        %4006 = vst [vmem:[%s232 + $0x338] sm:$0xff] %v3780
        %4007 = vst [vmem:[%s232 + $0x340] sm:$0xff] %v3785
        %4008 = vst [vmem:[%s232 + $0x348] sm:$0xff] %v3790
        %4009 = vst [vmem:[%s232 + $0x350] sm:$0xff] %v3795
        %4010 = vst [vmem:[%s232 + $0x358] sm:$0xff] %v3800
        %4011 = vst [vmem:[%s232 + $0x360] sm:$0xff] %v3805
        %4012 = vst [vmem:[%s232 + $0x368] sm:$0xff] %v3810
        %4013 = vst [vmem:[%s232 + $0x370] sm:$0xff] %v3815
        %4014 = vst [vmem:[%s232 + $0x378] sm:$0xff] %v3820
        %4015 = vst [vmem:[%s232 + $0x380] sm:$0xff] %v3825
        %4016 = vst [vmem:[%s232 + $0x388] sm:$0xff] %v3830
        %4017 = vst [vmem:[%s232 + $0x390] sm:$0xff] %v3835
        %4018 = vst [vmem:[%s232 + $0x398] sm:$0xff] %v3840
        %4019 = vst [vmem:[%s232 + $0x3a0] sm:$0xff] %v3845
        %4020 = vst [vmem:[%s232 + $0x3a8] sm:$0xff] %v3850
        %4021 = vst [vmem:[%s232 + $0x3b0] sm:$0xff] %v3855
        %4022 = vst [vmem:[%s232 + $0x3b8] sm:$0xff] %v3860
        %4023 = vst [vmem:[%s232 + $0x3c0] sm:$0xff] %v3865
        %4024 = vst [vmem:[%s232 + $0x3c8] sm:$0xff] %v3870
        %4025 = vst [vmem:[%s232 + $0x3d0] sm:$0xff] %v3875
        %4026 = vst [vmem:[%s232 + $0x3d8] sm:$0xff] %v3880
        %4027 = vst [vmem:[%s232 + $0x3e0] sm:$0xff] %v3885
        %4028 = vst [vmem:[%s232 + $0x3e8] sm:$0xff] %v3890
        %4029 = vst [vmem:[%s232 + $0x3f0] sm:$0xff] %v3895
        %4030 = vst [vmem:[%s232 + $0x3f8] sm:$0xff] %v3900
        %s4031 = sand.u32 %s113, 1
        %s4032 = scalar_lea.sflag [#allocation5], %s4031
        %s4033 = sand.u32 %s113, 1
        %s4034 = smul.addr %s4033, 1024
        %s4035 = scalar_lea.vmem [#allocation9], %s4034
        // Predicated region
        $region49: #{tpu_custom_call.1} parent=31 // pred_check
          %p4036 = pneg %p123
        $region50: #{tpu_custom_call.1} parent=31 // pred_check_branch
          %4038 = sbr.rel (%p4036) target = $region52
        $region51: #{tpu_custom_call.1} parent=31 // pred_region
          #allocation11 [shape = 'u32[6]{0}', space=smem, size = 0x18, scoped, tag = 'DMA stride descriptor']
          %s4039 = smul.u32 8, %s25
          %s4040 = smul.u32 16, %s26
          %s4042 = ssub.s32 16384, 16384
          %4043 = vsyncadd %s4032, %s4042
          %s4044 = smul.addr %s4039, 32
          %s4045 = sadd.s32 %s4040, %s4044
          %s4046 = smul.addr %s4045, 128
          %s4047 = scalar_lea.hbm %s3, %s4046
          %s4049 = sshll.u32 1, 14
          %s4050 = sxor.u32 4294967295, %s4049
          %s4053 = sshll.u32 7, 18
          %s4054 = sxor.u32 4294967295, %s4053
          %s4055 = sand.u32 0, %s4054
          %s4057 = sor.u32 %s4055, 0
          %s4059 = sshll.u32 3, 24
          %s4060 = sxor.u32 4294967295, %s4059
          %s4061 = sand.u32 %s4057, %s4060
          %s4063 = sor.u32 %s4061, 0
          %s4064 = sshll.u32 %s4035, 4
          %s4065 = int_to_ptr.vmem [resolvable:$true] %s4064
          %4071 = sst [smem:[#allocation11]] 2048
          %s4072 = scalar_lea.smem [#allocation11], 1
          %4073 = sst [smem:[%s4072]] 4096
          %s4074 = scalar_lea.smem [#allocation11], 2
          %4075 = sst [smem:[%s4074]] 16
          %s4076 = scalar_lea.smem [#allocation11], 3
          %4077 = sst [smem:[%s4076]] 128
          %s4078 = scalar_lea.smem [#allocation11], 4
          %4079 = sst [smem:[%s4078]] 128
          %s4080 = scalar_lea.smem [#allocation11], 5
          %4081 = sst [smem:[%s4080]] 8
          %4083 = dma.general %s4065, 16384, %s4047, %s4032, [#allocation10], [#allocation11], %s4063, 0
        $region52: #{tpu_custom_call.1} parent=31 // pred_fallthru
          _
      $region32: #{tpu_custom_call.1} parent=5 // pred_fallthru
        _
      %p4084 = scmp.le.s32.totalorder 2, %s16
      // Predicated region
      $region53: #{tpu_custom_call.1} parent=5 // pred_check
        %p4085 = pneg %p4084
      $region54: #{tpu_custom_call.1} parent=5 // pred_check_branch
        %4087 = sbr.rel (%p4085) target = $region56
      $region55: #{tpu_custom_call.1} parent=5 // pred_region
        %s4088 = ssub.s32 %s16, 2
        // Predicated region
        $region57: #{tpu_custom_call.1} parent=55 // pred_check
          %p4089 = pneg %p129
        $region58: #{tpu_custom_call.1} parent=55 // pred_check_branch
          %4091 = sbr.rel (%p4089) target = $region60
        $region59: #{tpu_custom_call.1} parent=55 // pred_region
          %s4092 = sand.u32 %s114, 1
          %s4093 = scalar_lea.sflag [#allocation5], %s4092
          %s4094 = sand.u32 %s114, 1
          %s4095 = smul.addr %s4094, 1024
          %s4096 = scalar_lea.vmem [#allocation9], %s4095
          %4097 = dma.done %s4093, 16384
        $region60: #{tpu_custom_call.1} parent=55 // pred_fallthru
          _
      $region56: #{tpu_custom_call.1} parent=5 // pred_fallthru
        _
    $region6: #{tpu_custom_call.1} parent=1 // loop_footer
      %s20 = sadd.s32 1, %s16
    $region7: #{tpu_custom_call.1} parent=1 // loop_footer_branch
      %15 = sbr.rel target = $region3
    $region8: #{tpu_custom_call.1} parent=1 // loop_exit
      _
    %4098 = vsyncpa [#allocation4], 1
    %s4099 = scalar_lea.sflag [#allocation4], 1
    %4100 = vsyncpa %s4099, 1
    %4101 = vsyncpa [#allocation7], 1
    %s4102 = scalar_lea.sflag [#allocation7], 1
    %4103 = vsyncpa %s4102, 1
    %4104 = vsyncpa [#allocation5], 1
    %s4105 = scalar_lea.sflag [#allocation5], 1
    %4106 = vsyncpa %s4105, 1

</llo_original>
